<compile_context>
chip_gen: v7x
topology: tpu7x:2x2x1
jax: 0.10.0
libtpu: 0.0.40
codegen_flags: <defaults>
</compile_context>

<pallas_src>
import jax
import jax.numpy as jnp
from jax.experimental import pallas as pl
from jax.experimental.pallas import tpu as pltpu


# ---------------------------------------------------------------------------
# Shared per-tile body:  y = relu(x @ W + b)
# ---------------------------------------------------------------------------
def _linear_relu_kernel(x_ref, w_ref, b_ref, o_ref):
    # MXU matmul with f32 accumulation; bias add + ReLU on the VPU.
    acc = jnp.dot(x_ref[...], w_ref[...], preferred_element_type=jnp.float32)
    acc = acc + b_ref[...]                       # (1, TN) broadcasts over rows
    o_ref[...] = jnp.maximum(acc, 0.0).astype(o_ref.dtype)


def _pick_tn(K, N):
    """Output-feature tile width: a multiple of 128 dividing N, sized so the
    double-buffered (K, TN) f32 weight tile stays <= ~8 MiB total. Returns
    None for tiny N (not a multiple of 128) -> use a full-array block."""
    if N % 128 != 0:
        return None
    for tn in (512, 256, 128):
        if N % tn == 0 and 2 * K * tn * 4 <= 8 * 1024 * 1024:
            return tn
    return 128


def linear_relu(x, w, b):
    """relu(x @ w + b).  x: (M, K) f32, w: (K, N) f32, b: (N,) f32."""
    M, K = x.shape
    Kw, N = w.shape
    assert K == Kw
    b2d = b.reshape(1, N)
    cost = pl.CostEstimate(flops=2 * M * K * N, transcendentals=0,
                           bytes_accessed=4 * (K * N + M * K + M * N + N))
    tn = _pick_tn(K, N)

    if tn is None:
        # Tiny-N path (last layer, N = 10*scale): single full-array block.
        return pl.pallas_call(
            _linear_relu_kernel,
            out_shape=jax.ShapeDtypeStruct((M, N), jnp.float32),
            grid=(1,),
            in_specs=[
                pl.BlockSpec((M, K), lambda i: (0, 0)),
                pl.BlockSpec((K, N), lambda i: (0, 0)),
                pl.BlockSpec((1, N), lambda i: (0, 0)),
            ],
            out_specs=pl.BlockSpec((M, N), lambda i: (0, 0)),
            compiler_params=pltpu.CompilerParams(
                dimension_semantics=("arbitrary",)),
            cost_estimate=cost,
        )(x, w, b2d)

    # Weight-streaming path: grid over N tiles; x resident, W/b/out tiled.
    return pl.pallas_call(
        _linear_relu_kernel,
        out_shape=jax.ShapeDtypeStruct((M, N), jnp.float32),
        grid=(N // tn,),
        in_specs=[
            pl.BlockSpec((M, K), lambda j: (0, 0)),     # activations resident
            pl.BlockSpec((K, tn), lambda j: (0, j)),    # stream weight tiles
            pl.BlockSpec((1, tn), lambda j: (0, j)),    # stream bias tiles
        ],
        out_specs=pl.BlockSpec((M, tn), lambda j: (0, j)),
        compiler_params=pltpu.CompilerParams(
            dimension_semantics=("parallel",)),          # v7x: split across TCs
        cost_estimate=cost,
    )(x, w, b2d)


# ---------------------------------------------------------------------------
# Fused hidden-layer stack:  L identical relu(x @ W_l + b_l) layers in one call.
# Grid = (L, N/TN); activation kept resident in ping-pong VMEM scratch.
# ---------------------------------------------------------------------------
def _fused_hidden_kernel(x_ref, w_ref, b_ref, o_ref, act0_ref, act1_ref):
    l = pl.program_id(0)              # layer index          (sequential)
    j = pl.program_id(1)              # output-feature tile  (sequential)
    n_layers = pl.num_programs(0)
    tn = w_ref.shape[-1]
    off = pl.multiple_of(j * tn, 128)

    # Load the input activation into the ping buffer exactly once.
    @pl.when(jnp.logical_and(l == 0, j == 0))
    def _():
        act0_ref[...] = x_ref[...]

    def layer_step(src_ref, dst_ref):
        acc = jnp.dot(src_ref[...], w_ref[...],
                      preferred_element_type=jnp.float32)
        acc = acc + b_ref[...]                        # (1, TN) broadcast
        y = jnp.maximum(acc, 0.0)
        dst_ref[:, pl.ds(off, tn)] = y                # activation stays in VMEM

        @pl.when(l == n_layers - 1)
        def _():
            o_ref[:, pl.ds(off, tn)] = y.astype(o_ref.dtype)

    is_even = (l % 2) == 0

    @pl.when(is_even)
    def _():
        layer_step(act0_ref, act1_ref)

    @pl.when(jnp.logical_not(is_even))
    def _():
        layer_step(act1_ref, act0_ref)


def fused_hidden_layers(x, w_stack, b_stack):
    """Apply L identical relu(x @ W_l + b_l) layers in a single pallas_call.

    x: (M, H) f32, w_stack: (L, H, H) pre-transposed, b_stack: (L, 1, H).
    Only the weights/biases stream from HBM; the activation never leaves VMEM.
    """
    M, H = x.shape
    L = w_stack.shape[0]
    assert w_stack.shape == (L, H, H) and b_stack.shape == (L, 1, H)
    tn = _pick_tn(H, H)
    assert tn is not None
    cost = pl.CostEstimate(
        flops=2 * M * H * H * L, transcendentals=0,
        bytes_accessed=4 * (L * H * H + L * H + 2 * M * H))

    return pl.pallas_call(
        _fused_hidden_kernel,
        out_shape=jax.ShapeDtypeStruct((M, H), jnp.float32),
        grid=(L, H // tn),
        in_specs=[
            pl.BlockSpec((M, H), lambda l, j: (0, 0)),            # input, resident
            pl.BlockSpec((None, H, tn), lambda l, j: (l, 0, j)),  # weight stream
            pl.BlockSpec((None, 1, tn), lambda l, j: (l, 0, j)),  # bias stream
        ],
        out_specs=pl.BlockSpec((M, H), lambda l, j: (0, 0)),
        scratch_shapes=[
            pltpu.VMEM((M, H), jnp.float32),   # ping activation buffer
            pltpu.VMEM((M, H), jnp.float32),   # pong activation buffer
        ],
        # Layer axis is a true dependency chain; the N-tile axis shares the
        # resident activation scratch -> both must stay sequential.
        compiler_params=pltpu.CompilerParams(
            dimension_semantics=("arbitrary", "arbitrary")),
        cost_estimate=cost,
    )(x, w_stack, b_stack)


# ---------------------------------------------------------------------------
# Model: mirrors SimpleModel(scale, num_layers, rank).forward
#   Linear(512, 1024*scale), num_layers x Linear(1024*scale, 1024*scale),
#   Linear(1024*scale, 10*scale); ReLU after every layer.
# ---------------------------------------------------------------------------
def init_params(key, scale: int, num_layers: int):
    dims = [512] + [1024 * scale] * (num_layers + 1) + [10 * scale]
    params = []
    for i in range(len(dims) - 1):
        fan_in, fan_out = dims[i], dims[i + 1]
        key, kw, kb = jax.random.split(key, 3)
        bound = 1.0 / jnp.sqrt(fan_in)
        # Stored as (in, out) == PyTorch W.T
        w = jax.random.uniform(kw, (fan_in, fan_out), jnp.float32, -bound, bound)
        b = jax.random.uniform(kb, (fan_out,), jnp.float32, -bound, bound)
        params.append((w, b))
    return params


@jax.jit
def simple_model_forward(x, first_w, first_b, hidden_w, hidden_b, last_w, last_b):
    x = linear_relu(x, first_w, first_b)            # 512 -> 1024*scale
    if hidden_w is not None and hidden_w.shape[0] > 0:
        x = fused_hidden_layers(x, hidden_w, hidden_b)
    x = linear_relu(x, last_w, last_b)              # 1024*scale -> 10*scale
    return x


if __name__ == "__main__":
    scale = 1
    num_layers = 1
    batch = 8

    key = jax.random.PRNGKey(0)
    key, kx = jax.random.split(key)
    x = jax.random.normal(kx, (batch, 512), dtype=jnp.float32)

    params = init_params(key, scale, num_layers)
    first_w, first_b = params[0]
    last_w, last_b = params[-1]
    hidden = params[1:-1]
    if hidden:
        hidden_w = jnp.stack([w for w, _ in hidden])                  # (L, H, H)
        hidden_b = jnp.stack([b.reshape(1, -1) for _, b in hidden])   # (L, 1, H)
    else:
        hidden_w = None
        hidden_b = None

    out = simple_model_forward(x, first_w, first_b, hidden_w, hidden_b,
                               last_w, last_b)
    out = jax.block_until_ready(out)

    # Pure-JAX reference check (same math, no Pallas)
    ref = x
    for w, b in params:
        ref = jnp.maximum(ref @ w + b, 0.0)
    assert out.shape == (batch, 10 * scale)
    assert jnp.allclose(out, ref, atol=1e-4, rtol=1e-4), "mismatch vs reference"

    print("KERNEL_OK")
</pallas_src>

<mosaic_0001>
module attributes {stable_mosaic.version = 11 : i64} {
  func.func @_linear_relu_kernel(%arg0: i32, %arg1: memref<8x1024xf32, #tpu.memory_space<vmem>>, %arg2: memref<1024x10xf32, #tpu.memory_space<vmem>>, %arg3: memref<1x10xf32, #tpu.memory_space<vmem>>, %arg4: memref<8x10xf32, #tpu.memory_space<vmem>>) attributes {dimension_semantics = [#tpu.dimension_semantics<arbitrary>], iteration_bounds = array<i64: 1>, scalar_prefetch = 0 : i64, scratch_operands = 0 : i64, tpu.core_type = #tpu.core_type<tc>, window_params = [{pipeline_mode = #tpu.pipeline_mode<synchronous>, transform_indices = @transform_0, window_bounds = array<i64: 8, 1024>}, {pipeline_mode = #tpu.pipeline_mode<synchronous>, transform_indices = @transform_1, window_bounds = array<i64: 1024, 10>}, {pipeline_mode = #tpu.pipeline_mode<synchronous>, transform_indices = @transform_2, window_bounds = array<i64: 1, 10>}, {pipeline_mode = #tpu.pipeline_mode<synchronous>, transform_indices = @transform_3, window_bounds = array<i64: 8, 10>}]} {
    %c0 = arith.constant 0 : index
    %c0_0 = arith.constant 0 : index
    %0 = vector.load %arg1[%c0, %c0_0] : memref<8x1024xf32, #tpu.memory_space<vmem>>, vector<8x1024xf32>
    %c0_1 = arith.constant 0 : index
    %c0_2 = arith.constant 0 : index
    %1 = vector.load %arg2[%c0_1, %c0_2] : memref<1024x10xf32, #tpu.memory_space<vmem>>, vector<1024x10xf32>
    %cst = arith.constant dense<0.000000e+00> : vector<8x10xf32>
    %2 = tpu.matmul %0, %1, %cst {dimension_numbers = #tpu.dot_dimension_numbers<[1], [0], [0], [1], [0, 0, 1, 1], [], []>} : vector<8x1024xf32>, vector<1024x10xf32>, vector<8x10xf32> -> vector<8x10xf32>
    %c0_3 = arith.constant 0 : index
    %c0_4 = arith.constant 0 : index
    %3 = vector.load %arg3[%c0_3, %c0_4] : memref<1x10xf32, #tpu.memory_space<vmem>>, vector<1x10xf32>
    %4 = vector.broadcast %3 : vector<1x10xf32> to vector<8x10xf32>
    %5 = arith.addf %2, %4 : vector<8x10xf32>
    %cst_5 = arith.constant 0.000000e+00 : f32
    %6 = vector.broadcast %cst_5 : f32 to vector<8x10xf32>
    %7 = arith.maximumf %5, %6 : vector<8x10xf32>
    %c0_6 = arith.constant 0 : index
    %c0_7 = arith.constant 0 : index
    %8 = vector.load %arg4[%c0_6, %c0_7] : memref<8x10xf32, #tpu.memory_space<vmem>>, vector<8x10xf32>
    tpu.vector_store %arg4[%c0_6, %c0_7], %7 {strides = array<i32>} : memref<8x10xf32, #tpu.memory_space<vmem>>, vector<8x10xf32>,
    return
  }
  func.func @transform_0(%arg0: i32) -> (i32, i32) {
    %c0_i32 = arith.constant 0 : i32
    %c0_i32_0 = arith.constant 0 : i32
    %c0_i32_1 = arith.constant 0 : i32
    return %c0_i32, %c0_i32_0 : i32, i32
  }
  func.func @transform_1(%arg0: i32) -> (i32, i32) {
    %c0_i32 = arith.constant 0 : i32
    %c0_i32_0 = arith.constant 0 : i32
    %c0_i32_1 = arith.constant 0 : i32
    return %c0_i32, %c0_i32_0 : i32, i32
  }
  func.func @transform_2(%arg0: i32) -> (i32, i32) {
    %c0_i32 = arith.constant 0 : i32
    %c0_i32_0 = arith.constant 0 : i32
    %c0_i32_1 = arith.constant 0 : i32
    return %c0_i32, %c0_i32_0 : i32, i32
  }
  func.func @transform_3(%arg0: i32) -> (i32, i32) {
    %c0_i32 = arith.constant 0 : i32
    %c0_i32_0 = arith.constant 0 : i32
    %c0_i32_1 = arith.constant 0 : i32
    return %c0_i32, %c0_i32_0 : i32, i32
  }
}

module attributes {stable_mosaic.version = 11 : i64} {
  func.func @_linear_relu_kernel(%arg0: i32, %arg1: memref<8x512xf32, #tpu.memory_space<vmem>>, %arg2: memref<512x512xf32, #tpu.memory_space<vmem>>, %arg3: memref<1x512xf32, #tpu.memory_space<vmem>>, %arg4: memref<8x512xf32, #tpu.memory_space<vmem>>) attributes {dimension_semantics = [#tpu.dimension_semantics<parallel>], iteration_bounds = array<i64: 2>, scalar_prefetch = 0 : i64, scratch_operands = 0 : i64, tpu.core_type = #tpu.core_type<tc>, window_params = [{pipeline_mode = #tpu.pipeline_mode<synchronous>, transform_indices = @transform_0, window_bounds = array<i64: 8, 512>}, {transform_indices = @transform_1, window_bounds = array<i64: 512, 512>}, {transform_indices = @transform_2, window_bounds = array<i64: 1, 512>}, {transform_indices = @transform_3, window_bounds = array<i64: 8, 512>}]} {
    %c0 = arith.constant 0 : index
    %c0_0 = arith.constant 0 : index
    %0 = vector.load %arg1[%c0, %c0_0] : memref<8x512xf32, #tpu.memory_space<vmem>>, vector<8x512xf32>
    %c0_1 = arith.constant 0 : index
    %c0_2 = arith.constant 0 : index
    %1 = vector.load %arg2[%c0_1, %c0_2] : memref<512x512xf32, #tpu.memory_space<vmem>>, vector<512x512xf32>
    %cst = arith.constant dense<0.000000e+00> : vector<8x512xf32>
    %2 = tpu.matmul %0, %1, %cst {dimension_numbers = #tpu.dot_dimension_numbers<[1], [0], [0], [1], [0, 0, 1, 1], [], []>} : vector<8x512xf32>, vector<512x512xf32>, vector<8x512xf32> -> vector<8x512xf32>
    %c0_3 = arith.constant 0 : index
    %c0_4 = arith.constant 0 : index
    %3 = vector.load %arg3[%c0_3, %c0_4] : memref<1x512xf32, #tpu.memory_space<vmem>>, vector<1x512xf32>
    %4 = vector.broadcast %3 : vector<1x512xf32> to vector<8x512xf32>
    %5 = arith.addf %2, %4 : vector<8x512xf32>
    %cst_5 = arith.constant 0.000000e+00 : f32
    %6 = vector.broadcast %cst_5 : f32 to vector<8x512xf32>
    %7 = arith.maximumf %5, %6 : vector<8x512xf32>
    %c0_6 = arith.constant 0 : index
    %c0_7 = arith.constant 0 : index
    %8 = vector.load %arg4[%c0_6, %c0_7] : memref<8x512xf32, #tpu.memory_space<vmem>>, vector<8x512xf32>
    tpu.vector_store %arg4[%c0_6, %c0_7], %7 {strides = array<i32>} : memref<8x512xf32, #tpu.memory_space<vmem>>, vector<8x512xf32>,
    return
  }
  func.func @transform_0(%arg0: i32) -> (i32, i32) {
    %c0_i32 = arith.constant 0 : i32
    %c0_i32_0 = arith.constant 0 : i32
    %c0_i32_1 = arith.constant 0 : i32
    return %c0_i32, %c0_i32_0 : i32, i32
  }
  func.func @transform_1(%arg0: i32) -> (i32, i32) {
    %c0_i32 = arith.constant 0 : i32
    %c0_i32_0 = arith.constant 0 : i32
    return %c0_i32, %arg0 : i32, i32
  }
  func.func @transform_2(%arg0: i32) -> (i32, i32) {
    %c0_i32 = arith.constant 0 : i32
    %c0_i32_0 = arith.constant 0 : i32
    return %c0_i32, %arg0 : i32, i32
  }
  func.func @transform_3(%arg0: i32) -> (i32, i32) {
    %c0_i32 = arith.constant 0 : i32
    %c0_i32_0 = arith.constant 0 : i32
    return %c0_i32, %arg0 : i32, i32
  }
}

module attributes {stable_mosaic.version = 11 : i64} {
  func.func @_fused_hidden_kernel(%arg0: i32, %arg1: i32, %arg2: memref<8x1024xf32, #tpu.memory_space<vmem>>, %arg3: memref<1x1024x512xf32, #tpu.memory_space<vmem>>, %arg4: memref<1x1x512xf32, #tpu.memory_space<vmem>>, %arg5: memref<8x1024xf32, #tpu.memory_space<vmem>>, %arg6: memref<8x1024xf32, #tpu.memory_space<vmem>>, %arg7: memref<8x1024xf32, #tpu.memory_space<vmem>>) attributes {dimension_semantics = [#tpu.dimension_semantics<arbitrary>, #tpu.dimension_semantics<arbitrary>], iteration_bounds = array<i64: 1, 2>, scalar_prefetch = 0 : i64, scratch_operands = 2 : i64, tpu.core_type = #tpu.core_type<tc>, window_params = [{pipeline_mode = #tpu.pipeline_mode<synchronous>, transform_indices = @transform_0, window_bounds = array<i64: 8, 1024>}, {transform_indices = @transform_1, window_bounds = array<i64: 1, 1024, 512>}, {transform_indices = @transform_2, window_bounds = array<i64: 1, 1, 512>}, {pipeline_mode = #tpu.pipeline_mode<synchronous>, transform_indices = @transform_3, window_bounds = array<i64: 8, 1024>}]} {
    %c512_i32 = arith.constant 512 : i32
    %0 = arith.muli %arg1, %c512_i32 : i32
    %1 = tpu.assume_multiple %0, 128 : i32
    %c0_i32 = arith.constant 0 : i32
    %2 = arith.cmpi eq, %arg0, %c0_i32 : i32
    %c0_i32_0 = arith.constant 0 : i32
    %3 = arith.cmpi eq, %arg1, %c0_i32_0 : i32
    %4 = arith.andi %2, %3 : i1
    %5 = arith.extui %4 : i1 to i32
    %c0_i32_1 = arith.constant 0 : i32
    %6 = arith.cmpi ne, %5, %c0_i32_1 : i32
    scf.if %6 {
      %c0 = arith.constant 0 : index
      %c0_9 = arith.constant 0 : index
      %23 = vector.load %arg2[%c0, %c0_9] : memref<8x1024xf32, #tpu.memory_space<vmem>>, vector<8x1024xf32>
      %c0_10 = arith.constant 0 : index
      %c0_11 = arith.constant 0 : index
      %24 = vector.load %arg6[%c0_10, %c0_11] : memref<8x1024xf32, #tpu.memory_space<vmem>>, vector<8x1024xf32>
      tpu.vector_store %arg6[%c0_10, %c0_11], %23 {strides = array<i32>} : memref<8x1024xf32, #tpu.memory_space<vmem>>, vector<8x1024xf32>,
    } else {
    }
    %c2_i32 = arith.constant 2 : i32
    %c0_i32_2 = arith.constant 0 : i32
    %7 = arith.cmpi eq, %c2_i32, %c0_i32_2 : i32
    %c1_i32 = arith.constant 1 : i32
    %8 = arith.select %7, %c1_i32, %c2_i32 : i32
    %9 = arith.remsi %arg0, %8 : i32
    %c0_i32_3 = arith.constant 0 : i32
    %10 = arith.cmpi ne, %9, %c0_i32_3 : i32
    %c0_i32_4 = arith.constant 0 : i32
    %11 = arith.cmpi slt, %9, %c0_i32_4 : i32
    %c0_i32_5 = arith.constant 0 : i32
    %12 = arith.cmpi slt, %8, %c0_i32_5 : i32
    %13 = arith.xori %11, %12 : i1
    %14 = arith.andi %13, %10 : i1
    %15 = arith.addi %9, %8 : i32
    %16 = arith.select %14, %15, %9 : i32
    %c0_i32_6 = arith.constant 0 : i32
    %17 = arith.cmpi eq, %16, %c0_i32_6 : i32
    %18 = arith.extui %17 : i1 to i32
    %c0_i32_7 = arith.constant 0 : i32
    %19 = arith.cmpi ne, %18, %c0_i32_7 : i32
    scf.if %19 {
      %c0 = arith.constant 0 : index
      %c0_9 = arith.constant 0 : index
      %23 = vector.load %arg6[%c0, %c0_9] : memref<8x1024xf32, #tpu.memory_space<vmem>>, vector<8x1024xf32>
      %c0_10 = arith.constant 0 : index
      %c0_11 = arith.constant 0 : index
      %c0_12 = arith.constant 0 : index
      %24 = vector.load %arg3[%c0_10, %c0_11, %c0_12] : memref<1x1024x512xf32, #tpu.memory_space<vmem>>, vector<1x1024x512xf32>
      %25 = vector.shape_cast %24 : vector<1x1024x512xf32> to vector<1024x512xf32>
      %cst = arith.constant dense<0.000000e+00> : vector<8x512xf32>
      %26 = tpu.matmul %23, %25, %cst {dimension_numbers = #tpu.dot_dimension_numbers<[1], [0], [0], [1], [0, 0, 1, 1], [], []>} : vector<8x1024xf32>, vector<1024x512xf32>, vector<8x512xf32> -> vector<8x512xf32>
      %c0_13 = arith.constant 0 : index
      %c0_14 = arith.constant 0 : index
      %c0_15 = arith.constant 0 : index
      %27 = vector.load %arg4[%c0_13, %c0_14, %c0_15] : memref<1x1x512xf32, #tpu.memory_space<vmem>>, vector<1x1x512xf32>
      %28 = vector.shape_cast %27 : vector<1x1x512xf32> to vector<1x512xf32>
      %29 = vector.broadcast %28 : vector<1x512xf32> to vector<8x512xf32>
      %30 = arith.addf %26, %29 : vector<8x512xf32>
      %cst_16 = arith.constant 0.000000e+00 : f32
      %31 = vector.broadcast %cst_16 : f32 to vector<8x512xf32>
      %32 = arith.maximumf %30, %31 : vector<8x512xf32>
      %c0_17 = arith.constant 0 : index
      %33 = arith.index_cast %1 : i32 to index
      %34 = vector.load %arg7[%c0_17, %33] : memref<8x1024xf32, #tpu.memory_space<vmem>>, vector<8x512xf32>
      tpu.vector_store %arg7[%c0_17, %33], %32 {strides = array<i32>} : memref<8x1024xf32, #tpu.memory_space<vmem>>, vector<8x512xf32>,
      %c0_i32_18 = arith.constant 0 : i32
      %35 = arith.cmpi eq, %arg0, %c0_i32_18 : i32
      %36 = arith.extui %35 : i1 to i32
      %c0_i32_19 = arith.constant 0 : i32
      %37 = arith.cmpi ne, %36, %c0_i32_19 : i32
      scf.if %37 {
        %c0_20 = arith.constant 0 : index
        %38 = arith.index_cast %1 : i32 to index
        %39 = vector.load %arg5[%c0_20, %38] : memref<8x1024xf32, #tpu.memory_space<vmem>>, vector<8x512xf32>
        tpu.vector_store %arg5[%c0_20, %38], %32 {strides = array<i32>} : memref<8x1024xf32, #tpu.memory_space<vmem>>, vector<8x512xf32>,
      } else {
      }
    } else {
    }
    %true = arith.constant true
    %20 = arith.xori %17, %true : i1
    %21 = arith.extui %20 : i1 to i32
    %c0_i32_8 = arith.constant 0 : i32
    %22 = arith.cmpi ne, %21, %c0_i32_8 : i32
    scf.if %22 {
      %c0 = arith.constant 0 : index
      %c0_9 = arith.constant 0 : index
      %23 = vector.load %arg7[%c0, %c0_9] : memref<8x1024xf32, #tpu.memory_space<vmem>>, vector<8x1024xf32>
      %c0_10 = arith.constant 0 : index
      %c0_11 = arith.constant 0 : index
      %c0_12 = arith.constant 0 : index
      %24 = vector.load %arg3[%c0_10, %c0_11, %c0_12] : memref<1x1024x512xf32, #tpu.memory_space<vmem>>, vector<1x1024x512xf32>
      %25 = vector.shape_cast %24 : vector<1x1024x512xf32> to vector<1024x512xf32>
      %cst = arith.constant dense<0.000000e+00> : vector<8x512xf32>
      %26 = tpu.matmul %23, %25, %cst {dimension_numbers = #tpu.dot_dimension_numbers<[1], [0], [0], [1], [0, 0, 1, 1], [], []>} : vector<8x1024xf32>, vector<1024x512xf32>, vector<8x512xf32> -> vector<8x512xf32>
      %c0_13 = arith.constant 0 : index
      %c0_14 = arith.constant 0 : index
      %c0_15 = arith.constant 0 : index
      %27 = vector.load %arg4[%c0_13, %c0_14, %c0_15] : memref<1x1x512xf32, #tpu.memory_space<vmem>>, vector<1x1x512xf32>
      %28 = vector.shape_cast %27 : vector<1x1x512xf32> to vector<1x512xf32>
      %29 = vector.broadcast %28 : vector<1x512xf32> to vector<8x512xf32>
      %30 = arith.addf %26, %29 : vector<8x512xf32>
      %cst_16 = arith.constant 0.000000e+00 : f32
      %31 = vector.broadcast %cst_16 : f32 to vector<8x512xf32>
      %32 = arith.maximumf %30, %31 : vector<8x512xf32>
      %c0_17 = arith.constant 0 : index
      %33 = arith.index_cast %1 : i32 to index
      %34 = vector.load %arg6[%c0_17, %33] : memref<8x1024xf32, #tpu.memory_space<vmem>>, vector<8x512xf32>
      tpu.vector_store %arg6[%c0_17, %33], %32 {strides = array<i32>} : memref<8x1024xf32, #tpu.memory_space<vmem>>, vector<8x512xf32>,
      %c0_i32_18 = arith.constant 0 : i32
      %35 = arith.cmpi eq, %arg0, %c0_i32_18 : i32
      %36 = arith.extui %35 : i1 to i32
      %c0_i32_19 = arith.constant 0 : i32
      %37 = arith.cmpi ne, %36, %c0_i32_19 : i32
      scf.if %37 {
        %c0_20 = arith.constant 0 : index
        %38 = arith.index_cast %1 : i32 to index
        %39 = vector.load %arg5[%c0_20, %38] : memref<8x1024xf32, #tpu.memory_space<vmem>>, vector<8x512xf32>
        tpu.vector_store %arg5[%c0_20, %38], %32 {strides = array<i32>} : memref<8x1024xf32, #tpu.memory_space<vmem>>, vector<8x512xf32>,
      } else {
      }
    } else {
    }
    return
  }
  func.func @transform_0(%arg0: i32, %arg1: i32) -> (i32, i32) {
    %c0_i32 = arith.constant 0 : i32
    %c0_i32_0 = arith.constant 0 : i32
    %c0_i32_1 = arith.constant 0 : i32
    return %c0_i32, %c0_i32_0 : i32, i32
  }
  func.func @transform_1(%arg0: i32, %arg1: i32) -> (i32, i32, i32) {
    %c0_i32 = arith.constant 0 : i32
    %c0_i32_0 = arith.constant 0 : i32
    return %arg0, %c0_i32, %arg1 : i32, i32, i32
  }
  func.func @transform_2(%arg0: i32, %arg1: i32) -> (i32, i32, i32) {
    %c0_i32 = arith.constant 0 : i32
    %c0_i32_0 = arith.constant 0 : i32
    return %arg0, %c0_i32, %arg1 : i32, i32, i32
  }
  func.func @transform_3(%arg0: i32, %arg1: i32) -> (i32, i32) {
    %c0_i32 = arith.constant 0 : i32
    %c0_i32_0 = arith.constant 0 : i32
    %c0_i32_1 = arith.constant 0 : i32
    return %c0_i32, %c0_i32_0 : i32, i32
  }
}

</mosaic_0001>

<llo_original>
// kernel: simple_model_forward.5
$region0: #{simple_model_forward.5}
  #allocation0 [shape = 'u32[]', space=smem, size = 0x4, offset = 0x4, fixed_abs, tag = 'smem constant byte address 0x4 - core index']
  #allocation1 [shape = 'u32[144,128]{1,0:T(1,128)}', space=vmem, size = 0x12000, scoped, tag = 'internal scratch']
  %s0 = inlined_call_operand.vmem [shape: f32[8,1024], index: 0, kind: input, shape index: {}]
  %s1 = inlined_call_operand.vmem [shape: f32[1024,10], index: 1, kind: input, shape index: {}]
  %s2 = inlined_call_operand.vmem [shape: f32[1,10], index: 2, kind: input, shape index: {}]
  %s3 = inlined_call_operand.hbm [shape: f32[8,10], index: 3, kind: output, shape index: {}]
  %s4 = sld [smem:[#allocation0]]
  $region22: #{simple_model_forward.5} parent=0
    _
  %s6 = ssub.s32 1, %s4
  %s7 = scalar_select 0, %s6, %s4
  $region1: #{simple_model_forward.5} parent=0
    #allocation2 [shape = 'u8[4096]{0}', space=vmem, size = 0x1000, scoped, tag = 'output window, operand 0, single buffered']
    #allocation3 [shape = 's32[1]{0}', space=sflag, size = 0x4, scoped, tag = 'scoped memory for simple_model_forward.5']
    %8 = vsyncpa [#allocation3], 0
    // Predicated region
    $region2: #{simple_model_forward.5} parent=1 // pred_check
      _
    $region3: #{simple_model_forward.5} parent=1 // pred_check_branch
      %10 = sbr.rel (0) target = $region5
    $region4: #{simple_model_forward.5} parent=1 // pred_region
      _
    $region5: #{simple_model_forward.5} parent=1 // pred_fallthru
      _
    // Predicated region
    $region6: #{simple_model_forward.5} parent=1 // pred_check
      _
    $region7: #{simple_model_forward.5} parent=1 // pred_check_branch
      %12 = sbr.rel (0) target = $region9
    $region8: #{simple_model_forward.5} parent=1 // pred_region
      _
    $region9: #{simple_model_forward.5} parent=1 // pred_fallthru
      _
    // Predicated region
    $region10: #{simple_model_forward.5} parent=1 // pred_check
      _
    $region11: #{simple_model_forward.5} parent=1 // pred_check_branch
      %14 = sbr.rel (0) target = $region13
    $region12: #{simple_model_forward.5} parent=1 // pred_region
      _
    $region13: #{simple_model_forward.5} parent=1 // pred_fallthru
      _
    %v15 = vld [vmem:[%s0] sm:$0xff]
    %v16 = vld [vmem:[%s0 + $0x8] sm:$0xff]
    %v17 = vld [vmem:[%s0 + $0x10] sm:$0xff]
    %v18 = vld [vmem:[%s0 + $0x18] sm:$0xff]
    %v19 = vld [vmem:[%s0 + $0x20] sm:$0xff]
    %v20 = vld [vmem:[%s0 + $0x28] sm:$0xff]
    %v21 = vld [vmem:[%s0 + $0x30] sm:$0xff]
    %v22 = vld [vmem:[%s0 + $0x38] sm:$0xff]
    %v23 = vld [vmem:[%s1] sm:$0xff]
    %v24 = vld [vmem:[%s1 + $0x8] sm:$0xff]
    %v25 = vld [vmem:[%s1 + $0x10] sm:$0xff]
    %v26 = vld [vmem:[%s1 + $0x18] sm:$0xff]
    %v27 = vld [vmem:[%s1 + $0x20] sm:$0xff]
    %v28 = vld [vmem:[%s1 + $0x28] sm:$0xff]
    %v29 = vld [vmem:[%s1 + $0x30] sm:$0xff]
    %v30 = vld [vmem:[%s1 + $0x38] sm:$0xff]
    %v31 = vld [vmem:[%s1 + $0x40] sm:$0xff]
    %v32 = vld [vmem:[%s1 + $0x48] sm:$0xff]
    %v33 = vld [vmem:[%s1 + $0x50] sm:$0xff]
    %v34 = vld [vmem:[%s1 + $0x58] sm:$0xff]
    %v35 = vld [vmem:[%s1 + $0x60] sm:$0xff]
    %v36 = vld [vmem:[%s1 + $0x68] sm:$0xff]
    %v37 = vld [vmem:[%s1 + $0x70] sm:$0xff]
    %v38 = vld [vmem:[%s1 + $0x78] sm:$0xff]
    %v39 = vld [vmem:[%s1 + $0x80] sm:$0xff]
    %v40 = vld [vmem:[%s1 + $0x88] sm:$0xff]
    %v41 = vld [vmem:[%s1 + $0x90] sm:$0xff]
    %v42 = vld [vmem:[%s1 + $0x98] sm:$0xff]
    %v43 = vld [vmem:[%s1 + $0xa0] sm:$0xff]
    %v44 = vld [vmem:[%s1 + $0xa8] sm:$0xff]
    %v45 = vld [vmem:[%s1 + $0xb0] sm:$0xff]
    %v46 = vld [vmem:[%s1 + $0xb8] sm:$0xff]
    %v47 = vld [vmem:[%s1 + $0xc0] sm:$0xff]
    %v48 = vld [vmem:[%s1 + $0xc8] sm:$0xff]
    %v49 = vld [vmem:[%s1 + $0xd0] sm:$0xff]
    %v50 = vld [vmem:[%s1 + $0xd8] sm:$0xff]
    %v51 = vld [vmem:[%s1 + $0xe0] sm:$0xff]
    %v52 = vld [vmem:[%s1 + $0xe8] sm:$0xff]
    %v53 = vld [vmem:[%s1 + $0xf0] sm:$0xff]
    %v54 = vld [vmem:[%s1 + $0xf8] sm:$0xff]
    %v55 = vld [vmem:[%s1 + $0x100] sm:$0xff]
    %v56 = vld [vmem:[%s1 + $0x108] sm:$0xff]
    %v57 = vld [vmem:[%s1 + $0x110] sm:$0xff]
    %v58 = vld [vmem:[%s1 + $0x118] sm:$0xff]
    %v59 = vld [vmem:[%s1 + $0x120] sm:$0xff]
    %v60 = vld [vmem:[%s1 + $0x128] sm:$0xff]
    %v61 = vld [vmem:[%s1 + $0x130] sm:$0xff]
    %v62 = vld [vmem:[%s1 + $0x138] sm:$0xff]
    %v63 = vld [vmem:[%s1 + $0x140] sm:$0xff]
    %v64 = vld [vmem:[%s1 + $0x148] sm:$0xff]
    %v65 = vld [vmem:[%s1 + $0x150] sm:$0xff]
    %v66 = vld [vmem:[%s1 + $0x158] sm:$0xff]
    %v67 = vld [vmem:[%s1 + $0x160] sm:$0xff]
    %v68 = vld [vmem:[%s1 + $0x168] sm:$0xff]
    %v69 = vld [vmem:[%s1 + $0x170] sm:$0xff]
    %v70 = vld [vmem:[%s1 + $0x178] sm:$0xff]
    %v71 = vld [vmem:[%s1 + $0x180] sm:$0xff]
    %v72 = vld [vmem:[%s1 + $0x188] sm:$0xff]
    %v73 = vld [vmem:[%s1 + $0x190] sm:$0xff]
    %v74 = vld [vmem:[%s1 + $0x198] sm:$0xff]
    %v75 = vld [vmem:[%s1 + $0x1a0] sm:$0xff]
    %v76 = vld [vmem:[%s1 + $0x1a8] sm:$0xff]
    %v77 = vld [vmem:[%s1 + $0x1b0] sm:$0xff]
    %v78 = vld [vmem:[%s1 + $0x1b8] sm:$0xff]
    %v79 = vld [vmem:[%s1 + $0x1c0] sm:$0xff]
    %v80 = vld [vmem:[%s1 + $0x1c8] sm:$0xff]
    %v81 = vld [vmem:[%s1 + $0x1d0] sm:$0xff]
    %v82 = vld [vmem:[%s1 + $0x1d8] sm:$0xff]
    %v83 = vld [vmem:[%s1 + $0x1e0] sm:$0xff]
    %v84 = vld [vmem:[%s1 + $0x1e8] sm:$0xff]
    %v85 = vld [vmem:[%s1 + $0x1f0] sm:$0xff]
    %v86 = vld [vmem:[%s1 + $0x1f8] sm:$0xff]
    %v87 = vld [vmem:[%s1 + $0x200] sm:$0xff]
    %v88 = vld [vmem:[%s1 + $0x208] sm:$0xff]
    %v89 = vld [vmem:[%s1 + $0x210] sm:$0xff]
    %v90 = vld [vmem:[%s1 + $0x218] sm:$0xff]
    %v91 = vld [vmem:[%s1 + $0x220] sm:$0xff]
    %v92 = vld [vmem:[%s1 + $0x228] sm:$0xff]
    %v93 = vld [vmem:[%s1 + $0x230] sm:$0xff]
    %v94 = vld [vmem:[%s1 + $0x238] sm:$0xff]
    %v95 = vld [vmem:[%s1 + $0x240] sm:$0xff]
    %v96 = vld [vmem:[%s1 + $0x248] sm:$0xff]
    %v97 = vld [vmem:[%s1 + $0x250] sm:$0xff]
    %v98 = vld [vmem:[%s1 + $0x258] sm:$0xff]
    %v99 = vld [vmem:[%s1 + $0x260] sm:$0xff]
    %v100 = vld [vmem:[%s1 + $0x268] sm:$0xff]
    %v101 = vld [vmem:[%s1 + $0x270] sm:$0xff]
    %v102 = vld [vmem:[%s1 + $0x278] sm:$0xff]
    %v103 = vld [vmem:[%s1 + $0x280] sm:$0xff]
    %v104 = vld [vmem:[%s1 + $0x288] sm:$0xff]
    %v105 = vld [vmem:[%s1 + $0x290] sm:$0xff]
    %v106 = vld [vmem:[%s1 + $0x298] sm:$0xff]
    %v107 = vld [vmem:[%s1 + $0x2a0] sm:$0xff]
    %v108 = vld [vmem:[%s1 + $0x2a8] sm:$0xff]
    %v109 = vld [vmem:[%s1 + $0x2b0] sm:$0xff]
    %v110 = vld [vmem:[%s1 + $0x2b8] sm:$0xff]
    %v111 = vld [vmem:[%s1 + $0x2c0] sm:$0xff]
    %v112 = vld [vmem:[%s1 + $0x2c8] sm:$0xff]
    %v113 = vld [vmem:[%s1 + $0x2d0] sm:$0xff]
    %v114 = vld [vmem:[%s1 + $0x2d8] sm:$0xff]
    %v115 = vld [vmem:[%s1 + $0x2e0] sm:$0xff]
    %v116 = vld [vmem:[%s1 + $0x2e8] sm:$0xff]
    %v117 = vld [vmem:[%s1 + $0x2f0] sm:$0xff]
    %v118 = vld [vmem:[%s1 + $0x2f8] sm:$0xff]
    %v119 = vld [vmem:[%s1 + $0x300] sm:$0xff]
    %v120 = vld [vmem:[%s1 + $0x308] sm:$0xff]
    %v121 = vld [vmem:[%s1 + $0x310] sm:$0xff]
    %v122 = vld [vmem:[%s1 + $0x318] sm:$0xff]
    %v123 = vld [vmem:[%s1 + $0x320] sm:$0xff]
    %v124 = vld [vmem:[%s1 + $0x328] sm:$0xff]
    %v125 = vld [vmem:[%s1 + $0x330] sm:$0xff]
    %v126 = vld [vmem:[%s1 + $0x338] sm:$0xff]
    %v127 = vld [vmem:[%s1 + $0x340] sm:$0xff]
    %v128 = vld [vmem:[%s1 + $0x348] sm:$0xff]
    %v129 = vld [vmem:[%s1 + $0x350] sm:$0xff]
    %v130 = vld [vmem:[%s1 + $0x358] sm:$0xff]
    %v131 = vld [vmem:[%s1 + $0x360] sm:$0xff]
    %v132 = vld [vmem:[%s1 + $0x368] sm:$0xff]
    %v133 = vld [vmem:[%s1 + $0x370] sm:$0xff]
    %v134 = vld [vmem:[%s1 + $0x378] sm:$0xff]
    %v135 = vld [vmem:[%s1 + $0x380] sm:$0xff]
    %v136 = vld [vmem:[%s1 + $0x388] sm:$0xff]
    %v137 = vld [vmem:[%s1 + $0x390] sm:$0xff]
    %v138 = vld [vmem:[%s1 + $0x398] sm:$0xff]
    %v139 = vld [vmem:[%s1 + $0x3a0] sm:$0xff]
    %v140 = vld [vmem:[%s1 + $0x3a8] sm:$0xff]
    %v141 = vld [vmem:[%s1 + $0x3b0] sm:$0xff]
    %v142 = vld [vmem:[%s1 + $0x3b8] sm:$0xff]
    %v143 = vld [vmem:[%s1 + $0x3c0] sm:$0xff]
    %v144 = vld [vmem:[%s1 + $0x3c8] sm:$0xff]
    %v145 = vld [vmem:[%s1 + $0x3d0] sm:$0xff]
    %v146 = vld [vmem:[%s1 + $0x3d8] sm:$0xff]
    %v147 = vld [vmem:[%s1 + $0x3e0] sm:$0xff]
    %v148 = vld [vmem:[%s1 + $0x3e8] sm:$0xff]
    %v149 = vld [vmem:[%s1 + $0x3f0] sm:$0xff]
    %v150 = vld [vmem:[%s1 + $0x3f8] sm:$0xff]
    %v151 = vld [vmem:[%s2] sm:$0x1]
    %v153 = vlaneseq
    %v154 = vshrl.u32 %v153, 7
    %v155 = vsub.s32 0, %v154
    %v156 = vrot.slane %v151, %v155
    %158 = vmatprep.subr.mxu0 0.0
    %159 = vmatpush1.msra.mxu0 %v23
    %160 = vmatprep.subr.mxu0 0.0
    %161 = vmatpush1.msra.mxu0 %v24
    %162 = vmatprep.subr.mxu0 0.0
    %163 = vmatpush1.msra.mxu0 %v25
    %164 = vmatprep.subr.mxu0 0.0
    %165 = vmatpush1.msra.mxu0 %v26
    %166 = vmatprep.subr.mxu0 0.0
    %167 = vmatpush1.msra.mxu0 %v27
    %168 = vmatprep.subr.mxu0 0.0
    %169 = vmatpush1.msra.mxu0 %v28
    %170 = vmatprep.subr.mxu0 0.0
    %171 = vmatpush1.msra.mxu0 %v29
    %172 = vmatprep.subr.mxu0 0.0
    %173 = vmatpush1.msra.mxu0 %v30
    %174 = vmatprep.subr.mxu0 0.0
    %175 = vmatpush1.msra.mxu0 %v31
    %176 = vmatprep.subr.mxu0 0.0
    %177 = vmatpush1.msra.mxu0 %v32
    %178 = vmatprep.subr.mxu0 0.0
    %179 = vmatpush1.msra.mxu0 %v33
    %180 = vmatprep.subr.mxu0 0.0
    %181 = vmatpush1.msra.mxu0 %v34
    %182 = vmatprep.subr.mxu0 0.0
    %183 = vmatpush1.msra.mxu0 %v35
    %184 = vmatprep.subr.mxu0 0.0
    %185 = vmatpush1.msra.mxu0 %v36
    %186 = vmatprep.subr.mxu0 0.0
    %187 = vmatpush1.msra.mxu0 %v37
    %188 = vmatprep.subr.mxu0 0.0
    %189 = vmatpush1.msra.mxu0 %v38
    %190 = vmatprep.subr.mxu0 0.0
    %191 = vmatpush1.msra.mxu0 %v39
    %192 = vmatprep.subr.mxu0 0.0
    %193 = vmatpush1.msra.mxu0 %v40
    %194 = vmatprep.subr.mxu0 0.0
    %195 = vmatpush1.msra.mxu0 %v41
    %196 = vmatprep.subr.mxu0 0.0
    %197 = vmatpush1.msra.mxu0 %v42
    %198 = vmatprep.subr.mxu0 0.0
    %199 = vmatpush1.msra.mxu0 %v43
    %200 = vmatprep.subr.mxu0 0.0
    %201 = vmatpush1.msra.mxu0 %v44
    %202 = vmatprep.subr.mxu0 0.0
    %203 = vmatpush1.msra.mxu0 %v45
    %204 = vmatprep.subr.mxu0 0.0
    %205 = vmatpush1.msra.mxu0 %v46
    %206 = vmatprep.subr.mxu0 0.0
    %207 = vmatpush1.msra.mxu0 %v47
    %208 = vmatprep.subr.mxu0 0.0
    %209 = vmatpush1.msra.mxu0 %v48
    %210 = vmatprep.subr.mxu0 0.0
    %211 = vmatpush1.msra.mxu0 %v49
    %212 = vmatprep.subr.mxu0 0.0
    %213 = vmatpush1.msra.mxu0 %v50
    %214 = vmatprep.subr.mxu0 0.0
    %215 = vmatpush1.msra.mxu0 %v51
    %216 = vmatprep.subr.mxu0 0.0
    %217 = vmatpush1.msra.mxu0 %v52
    %218 = vmatprep.subr.mxu0 0.0
    %219 = vmatpush1.msra.mxu0 %v53
    %220 = vmatprep.subr.mxu0 0.0
    %221 = vmatpush1.msra.mxu0 %v54
    %222 = vmatprep.mubr.f32.mxu0 %v16
    %223 = vmatmul.mubr.f32.gmra.mrb[0].mxu0 %v15
    %v224 = vpop.f32.mrb[0].mxu0
    %v225 = vadd.f32 %v156, %v224
    %v226 = vpop.f32.mrb[0].mxu0
    %227 = vdwg.mxu0
    %228 = vmatprep.subr.mxu0 0.0
    %229 = vmatpush1.msra.mxu0 %v55
    %230 = vmatprep.subr.mxu0 0.0
    %231 = vmatpush1.msra.mxu0 %v56
    %232 = vmatprep.subr.mxu0 0.0
    %233 = vmatpush1.msra.mxu0 %v57
    %234 = vmatprep.subr.mxu0 0.0
    %235 = vmatpush1.msra.mxu0 %v58
    %236 = vmatprep.subr.mxu0 0.0
    %237 = vmatpush1.msra.mxu0 %v59
    %238 = vmatprep.subr.mxu0 0.0
    %239 = vmatpush1.msra.mxu0 %v60
    %240 = vmatprep.subr.mxu0 0.0
    %241 = vmatpush1.msra.mxu0 %v61
    %242 = vmatprep.subr.mxu0 0.0
    %243 = vmatpush1.msra.mxu0 %v62
    %244 = vmatprep.subr.mxu0 0.0
    %245 = vmatpush1.msra.mxu0 %v63
    %246 = vmatprep.subr.mxu0 0.0
    %247 = vmatpush1.msra.mxu0 %v64
    %248 = vmatprep.subr.mxu0 0.0
    %249 = vmatpush1.msra.mxu0 %v65
    %250 = vmatprep.subr.mxu0 0.0
    %251 = vmatpush1.msra.mxu0 %v66
    %252 = vmatprep.subr.mxu0 0.0
    %253 = vmatpush1.msra.mxu0 %v67
    %254 = vmatprep.subr.mxu0 0.0
    %255 = vmatpush1.msra.mxu0 %v68
    %256 = vmatprep.subr.mxu0 0.0
    %257 = vmatpush1.msra.mxu0 %v69
    %258 = vmatprep.subr.mxu0 0.0
    %259 = vmatpush1.msra.mxu0 %v70
    %260 = vmatprep.subr.mxu0 0.0
    %261 = vmatpush1.msra.mxu0 %v71
    %262 = vmatprep.subr.mxu0 0.0
    %263 = vmatpush1.msra.mxu0 %v72
    %264 = vmatprep.subr.mxu0 0.0
    %265 = vmatpush1.msra.mxu0 %v73
    %266 = vmatprep.subr.mxu0 0.0
    %267 = vmatpush1.msra.mxu0 %v74
    %268 = vmatprep.subr.mxu0 0.0
    %269 = vmatpush1.msra.mxu0 %v75
    %270 = vmatprep.subr.mxu0 0.0
    %271 = vmatpush1.msra.mxu0 %v76
    %272 = vmatprep.subr.mxu0 0.0
    %273 = vmatpush1.msra.mxu0 %v77
    %274 = vmatprep.subr.mxu0 0.0
    %275 = vmatpush1.msra.mxu0 %v78
    %276 = vmatprep.subr.mxu0 0.0
    %277 = vmatpush1.msra.mxu0 %v79
    %278 = vmatprep.subr.mxu0 0.0
    %279 = vmatpush1.msra.mxu0 %v80
    %280 = vmatprep.subr.mxu0 0.0
    %281 = vmatpush1.msra.mxu0 %v81
    %282 = vmatprep.subr.mxu0 0.0
    %283 = vmatpush1.msra.mxu0 %v82
    %284 = vmatprep.subr.mxu0 0.0
    %285 = vmatpush1.msra.mxu0 %v83
    %286 = vmatprep.subr.mxu0 0.0
    %287 = vmatpush1.msra.mxu0 %v84
    %288 = vmatprep.subr.mxu0 0.0
    %289 = vmatpush1.msra.mxu0 %v85
    %290 = vmatprep.subr.mxu0 0.0
    %291 = vmatpush1.msra.mxu0 %v86
    %292 = vmatprep.mubr.f32.mxu0 %v18
    %293 = vmatmul.mubr.f32.gmra.mrb[0].mxu0 %v17
    %v294 = vpop.f32.mrb[0].mxu0
    %v295 = vadd.f32 %v225, %v294
    %v296 = vpop.f32.mrb[0].mxu0
    %297 = vdwg.mxu0
    %298 = vmatprep.subr.mxu0 0.0
    %299 = vmatpush1.msra.mxu0 %v87
    %300 = vmatprep.subr.mxu0 0.0
    %301 = vmatpush1.msra.mxu0 %v88
    %302 = vmatprep.subr.mxu0 0.0
    %303 = vmatpush1.msra.mxu0 %v89
    %304 = vmatprep.subr.mxu0 0.0
    %305 = vmatpush1.msra.mxu0 %v90
    %306 = vmatprep.subr.mxu0 0.0
    %307 = vmatpush1.msra.mxu0 %v91
    %308 = vmatprep.subr.mxu0 0.0
    %309 = vmatpush1.msra.mxu0 %v92
    %310 = vmatprep.subr.mxu0 0.0
    %311 = vmatpush1.msra.mxu0 %v93
    %312 = vmatprep.subr.mxu0 0.0
    %313 = vmatpush1.msra.mxu0 %v94
    %314 = vmatprep.subr.mxu0 0.0
    %315 = vmatpush1.msra.mxu0 %v95
    %316 = vmatprep.subr.mxu0 0.0
    %317 = vmatpush1.msra.mxu0 %v96
    %318 = vmatprep.subr.mxu0 0.0
    %319 = vmatpush1.msra.mxu0 %v97
    %320 = vmatprep.subr.mxu0 0.0
    %321 = vmatpush1.msra.mxu0 %v98
    %322 = vmatprep.subr.mxu0 0.0
    %323 = vmatpush1.msra.mxu0 %v99
    %324 = vmatprep.subr.mxu0 0.0
    %325 = vmatpush1.msra.mxu0 %v100
    %326 = vmatprep.subr.mxu0 0.0
    %327 = vmatpush1.msra.mxu0 %v101
    %328 = vmatprep.subr.mxu0 0.0
    %329 = vmatpush1.msra.mxu0 %v102
    %330 = vmatprep.subr.mxu0 0.0
    %331 = vmatpush1.msra.mxu0 %v103
    %332 = vmatprep.subr.mxu0 0.0
    %333 = vmatpush1.msra.mxu0 %v104
    %334 = vmatprep.subr.mxu0 0.0
    %335 = vmatpush1.msra.mxu0 %v105
    %336 = vmatprep.subr.mxu0 0.0
    %337 = vmatpush1.msra.mxu0 %v106
    %338 = vmatprep.subr.mxu0 0.0
    %339 = vmatpush1.msra.mxu0 %v107
    %340 = vmatprep.subr.mxu0 0.0
    %341 = vmatpush1.msra.mxu0 %v108
    %342 = vmatprep.subr.mxu0 0.0
    %343 = vmatpush1.msra.mxu0 %v109
    %344 = vmatprep.subr.mxu0 0.0
    %345 = vmatpush1.msra.mxu0 %v110
    %346 = vmatprep.subr.mxu0 0.0
    %347 = vmatpush1.msra.mxu0 %v111
    %348 = vmatprep.subr.mxu0 0.0
    %349 = vmatpush1.msra.mxu0 %v112
    %350 = vmatprep.subr.mxu0 0.0
    %351 = vmatpush1.msra.mxu0 %v113
    %352 = vmatprep.subr.mxu0 0.0
    %353 = vmatpush1.msra.mxu0 %v114
    %354 = vmatprep.subr.mxu0 0.0
    %355 = vmatpush1.msra.mxu0 %v115
    %356 = vmatprep.subr.mxu0 0.0
    %357 = vmatpush1.msra.mxu0 %v116
    %358 = vmatprep.subr.mxu0 0.0
    %359 = vmatpush1.msra.mxu0 %v117
    %360 = vmatprep.subr.mxu0 0.0
    %361 = vmatpush1.msra.mxu0 %v118
    %362 = vmatprep.mubr.f32.mxu0 %v20
    %363 = vmatmul.mubr.f32.gmra.mrb[0].mxu0 %v19
    %v364 = vpop.f32.mrb[0].mxu0
    %v365 = vadd.f32 %v295, %v364
    %v366 = vpop.f32.mrb[0].mxu0
    %367 = vdwg.mxu0
    %368 = vmatprep.subr.mxu0 0.0
    %369 = vmatpush1.msra.mxu0 %v119
    %370 = vmatprep.subr.mxu0 0.0
    %371 = vmatpush1.msra.mxu0 %v120
    %372 = vmatprep.subr.mxu0 0.0
    %373 = vmatpush1.msra.mxu0 %v121
    %374 = vmatprep.subr.mxu0 0.0
    %375 = vmatpush1.msra.mxu0 %v122
    %376 = vmatprep.subr.mxu0 0.0
    %377 = vmatpush1.msra.mxu0 %v123
    %378 = vmatprep.subr.mxu0 0.0
    %379 = vmatpush1.msra.mxu0 %v124
    %380 = vmatprep.subr.mxu0 0.0
    %381 = vmatpush1.msra.mxu0 %v125
    %382 = vmatprep.subr.mxu0 0.0
    %383 = vmatpush1.msra.mxu0 %v126
    %384 = vmatprep.subr.mxu0 0.0
    %385 = vmatpush1.msra.mxu0 %v127
    %386 = vmatprep.subr.mxu0 0.0
    %387 = vmatpush1.msra.mxu0 %v128
    %388 = vmatprep.subr.mxu0 0.0
    %389 = vmatpush1.msra.mxu0 %v129
    %390 = vmatprep.subr.mxu0 0.0
    %391 = vmatpush1.msra.mxu0 %v130
    %392 = vmatprep.subr.mxu0 0.0
    %393 = vmatpush1.msra.mxu0 %v131
    %394 = vmatprep.subr.mxu0 0.0
    %395 = vmatpush1.msra.mxu0 %v132
    %396 = vmatprep.subr.mxu0 0.0
    %397 = vmatpush1.msra.mxu0 %v133
    %398 = vmatprep.subr.mxu0 0.0
    %399 = vmatpush1.msra.mxu0 %v134
    %400 = vmatprep.subr.mxu0 0.0
    %401 = vmatpush1.msra.mxu0 %v135
    %402 = vmatprep.subr.mxu0 0.0
    %403 = vmatpush1.msra.mxu0 %v136
    %404 = vmatprep.subr.mxu0 0.0
    %405 = vmatpush1.msra.mxu0 %v137
    %406 = vmatprep.subr.mxu0 0.0
    %407 = vmatpush1.msra.mxu0 %v138
    %408 = vmatprep.subr.mxu0 0.0
    %409 = vmatpush1.msra.mxu0 %v139
    %410 = vmatprep.subr.mxu0 0.0
    %411 = vmatpush1.msra.mxu0 %v140
    %412 = vmatprep.subr.mxu0 0.0
    %413 = vmatpush1.msra.mxu0 %v141
    %414 = vmatprep.subr.mxu0 0.0
    %415 = vmatpush1.msra.mxu0 %v142
    %416 = vmatprep.subr.mxu0 0.0
    %417 = vmatpush1.msra.mxu0 %v143
    %418 = vmatprep.subr.mxu0 0.0
    %419 = vmatpush1.msra.mxu0 %v144
    %420 = vmatprep.subr.mxu0 0.0
    %421 = vmatpush1.msra.mxu0 %v145
    %422 = vmatprep.subr.mxu0 0.0
    %423 = vmatpush1.msra.mxu0 %v146
    %424 = vmatprep.subr.mxu0 0.0
    %425 = vmatpush1.msra.mxu0 %v147
    %426 = vmatprep.subr.mxu0 0.0
    %427 = vmatpush1.msra.mxu0 %v148
    %428 = vmatprep.subr.mxu0 0.0
    %429 = vmatpush1.msra.mxu0 %v149
    %430 = vmatprep.subr.mxu0 0.0
    %431 = vmatpush1.msra.mxu0 %v150
    %432 = vmatprep.mubr.f32.mxu0 %v22
    %433 = vmatmul.mubr.f32.gmra.mrb[0].mxu0 %v21
    %v434 = vpop.f32.mrb[0].mxu0
    %v435 = vadd.f32 %v365, %v434
    %v436 = vpop.f32.mrb[0].mxu0
    %437 = vdwg.mxu0
    %v438 = vmax.f32 %v435, 0.0
    %vm439 = vcmask 80896
    %440 = vst.msk [vmem:[#allocation2] sm:$0xff] %vm439, %v438
    // Predicated region
    $region14: #{simple_model_forward.5} parent=1 // pred_check
      _
    $region15: #{simple_model_forward.5} parent=1 // pred_check_branch
      %442 = sbr.rel (0) target = $region17
    $region16: #{simple_model_forward.5} parent=1 // pred_region
      %s444 = ssub.s32 128, 128
      %445 = vsyncadd [#allocation3], %s444
      %s447 = sshll.u32 [#allocation2], 4
      %s448 = int_to_ptr.vmem [resolvable:$true] %s447
      %450 = dma.vmem_to_hbm [thread:$0]  %s448, 128, %s3, [#allocation3]
    $region17: #{simple_model_forward.5} parent=1 // pred_fallthru
      _
    // Predicated region
    $region18: #{simple_model_forward.5} parent=1 // pred_check
      _
    $region19: #{simple_model_forward.5} parent=1 // pred_check_branch
      %452 = sbr.rel (0) target = $region21
    $region20: #{simple_model_forward.5} parent=1 // pred_region
      %453 = dma.done [#allocation3], 128
    $region21: #{simple_model_forward.5} parent=1 // pred_fallthru
      _
    %454 = vsyncpa [#allocation3], 1

// kernel: simple_model_forward.3
$region0: #{simple_model_forward.3}
  #allocation0 [shape = 'u32[]', space=smem, size = 0x4, offset = 0x4, fixed_abs, tag = 'smem constant byte address 0x4 - core index']
  #allocation1 [shape = 'u32[144,128]{1,0:T(1,128)}', space=vmem, size = 0x12000, scoped, tag = 'internal scratch']
  %s0 = inlined_call_operand.hbm [shape: f32[8,512], index: 0, kind: input, shape index: {}]
  %s1 = inlined_call_operand.hbm [shape: f32[512,1024], index: 1, kind: input, shape index: {}]
  %s2 = inlined_call_operand.hbm [shape: f32[1,1024], index: 2, kind: input, shape index: {}]
  %s3 = inlined_call_operand.vmem [shape: f32[8,1024], index: 3, kind: output, shape index: {}]
  %s4 = sld [smem:[#allocation0]]
  $region57: #{simple_model_forward.3} parent=0
    _
  %s6 = ssub.s32 1, %s4
  %s7 = scalar_select 0, %s6, %s4
  $region1: #{simple_model_forward.3} parent=0
    #allocation2 [shape = 'u8[16384]{0}', space=vmem, size = 0x4000, scoped, tag = 'input window, operand 0, single buffered']
    #allocation3 [shape = 's32[2]{0}', space=sflag, size = 0x8, scoped, tag = 'scoped memory for simple_model_forward.3']
    #allocation4 [shape = 'u8[2097152]{0}', space=vmem, size = 0x200000, scoped, tag = 'input window, operand 1']
    #allocation5 [shape = 's32[2]{0}', space=sflag, size = 0x8, scoped, tag = 'scoped memory for simple_model_forward.3']
    #allocation6 [shape = 'u8[4096]{0}', space=vmem, size = 0x1000, scoped, tag = 'input window, operand 2']
    %8 = vsyncpa [#allocation3], 0
    %9 = vsyncpa [#allocation5], 0
    %s10 = scalar_lea.sflag [#allocation5], 1
    %11 = vsyncpa %s10, 0
    loop: start=0, step=1, limit=4
    $region2: #{simple_model_forward.3} parent=1 // loop_pre_header
      _
    $region3: #{simple_model_forward.3} parent=1 // loop_header
      %s13 = sphi 0, %s17
      %p14 = scmp.ge.s32.totalorder %s13, 4
      %s21 = sphi 0, %s21
      %s23 = sphi 0, %s21
      %s24 = sphi 0, %s23
      %s38 = sphi 0, %s24
      %s44 = sphi 0, %s46
      %s47 = sphi 0, %s44
      %s48 = sphi 0, %s47
      %s64 = sphi 0, %s48
      %s70 = sphi 0, %s72
      %s73 = sphi 0, %s70
      %s74 = sphi 0, %s73
      %s90 = sphi 0, %s74
      %s96 = sphi 0, %s98
      %s99 = sphi 0, %s96
      %s100 = sphi 0, %s99
      %s116 = sphi 0, %s100
    $region4: #{simple_model_forward.3} parent=1 // loop_header_branch
      %16 = sbr.rel (%p14) target = $region8
    $region5: #{simple_model_forward.3} parent=1 // loop_body
      %s18 = ssub.s32 %s13, 1
      %s19 = ssub.s32 %s13, 2
      %s20 = sadd.s32 %s13, 1
      %s22 = sadd.s32 %s21, 1
      %p25 = scmp.eq.s32.totalorder %s13, 1
      %p26 = scmp.ne.s32.totalorder %s21, %s23
      %p27 = scmp.eq.s32.totalorder %s13, 0
      %p28 = por %p26, %p27
      %p29 = scmp.ne.s32.totalorder %s21, %s23
      %p30 = scmp.eq.s32.totalorder %s18, 1
      %p31 = por %p29, %p30
      %p32 = scmp.ne.s32.totalorder %s23, %s24
      %p33 = scmp.eq.s32.totalorder %s18, 0
      %p34 = por %p32, %p33
      %p35 = scmp.ne.s32.totalorder %s23, %s24
      %p36 = scmp.eq.s32.totalorder %s19, 1
      %p37 = por %p35, %p36
      %p39 = scmp.ne.s32.totalorder %s24, %s38
      %p40 = scmp.eq.s32.totalorder %s19, 0
      %p41 = por %p39, %p40
      %s42 = ssub.s32 %s13, %s20
      %p43 = scmp.eq.s32.totalorder %s42, 0
      %s45 = sadd.s32 %s44, 1
      %s46 = scalar_select %p43, %s44, %s45
      %p49 = pneg %p43
      %p50 = scmp.eq.s32.totalorder %s13, 1
      %p51 = por %p49, %p50
      %p52 = scmp.ne.s32.totalorder %s44, %s47
      %p53 = scmp.eq.s32.totalorder %s13, 0
      %p54 = por %p52, %p53
      %p55 = scmp.ne.s32.totalorder %s44, %s47
      %p56 = scmp.eq.s32.totalorder %s18, 1
      %p57 = por %p55, %p56
      %p58 = scmp.ne.s32.totalorder %s47, %s48
      %p59 = scmp.eq.s32.totalorder %s18, 0
      %p60 = por %p58, %p59
      %p61 = scmp.ne.s32.totalorder %s47, %s48
      %p62 = scmp.eq.s32.totalorder %s19, 1
      %p63 = por %p61, %p62
      %p65 = scmp.ne.s32.totalorder %s48, %s64
      %p66 = scmp.eq.s32.totalorder %s19, 0
      %p67 = por %p65, %p66
      %s68 = ssub.s32 %s13, %s20
      %p69 = scmp.eq.s32.totalorder %s68, 0
      %s71 = sadd.s32 %s70, 1
      %s72 = scalar_select %p69, %s70, %s71
      %p75 = pneg %p69
      %p76 = scmp.eq.s32.totalorder %s13, 1
      %p77 = por %p75, %p76
      %p78 = scmp.ne.s32.totalorder %s70, %s73
      %p79 = scmp.eq.s32.totalorder %s13, 0
      %p80 = por %p78, %p79
      %p81 = scmp.ne.s32.totalorder %s70, %s73
      %p82 = scmp.eq.s32.totalorder %s18, 1
      %p83 = por %p81, %p82
      %p84 = scmp.ne.s32.totalorder %s73, %s74
      %p85 = scmp.eq.s32.totalorder %s18, 0
      %p86 = por %p84, %p85
      %p87 = scmp.ne.s32.totalorder %s73, %s74
      %p88 = scmp.eq.s32.totalorder %s19, 1
      %p89 = por %p87, %p88
      %p91 = scmp.ne.s32.totalorder %s74, %s90
      %p92 = scmp.eq.s32.totalorder %s19, 0
      %p93 = por %p91, %p92
      %s94 = ssub.s32 %s13, %s20
      %p95 = scmp.eq.s32.totalorder %s94, 0
      %s97 = sadd.s32 %s96, 1
      %s98 = scalar_select %p95, %s96, %s97
      %p101 = pneg %p95
      %p102 = scmp.eq.s32.totalorder %s13, 1
      %p103 = por %p101, %p102
      %p104 = scmp.ne.s32.totalorder %s96, %s99
      %p105 = scmp.eq.s32.totalorder %s13, 0
      %p106 = por %p104, %p105
      %p107 = scmp.ne.s32.totalorder %s96, %s99
      %p108 = scmp.eq.s32.totalorder %s18, 1
      %p109 = por %p107, %p108
      %p110 = scmp.ne.s32.totalorder %s99, %s100
      %p111 = scmp.eq.s32.totalorder %s18, 0
      %p112 = por %p110, %p111
      %p113 = scmp.ne.s32.totalorder %s99, %s100
      %p114 = scmp.eq.s32.totalorder %s19, 1
      %p115 = por %p113, %p114
      %p117 = scmp.ne.s32.totalorder %s100, %s116
      %p118 = scmp.eq.s32.totalorder %s19, 0
      %p119 = por %p117, %p118
      %p120 = scmp.le.s32.totalorder 1, %s13
      %p121 = scmp.lt.s32.totalorder %s13, 3
      %p122 = pnand %p120, %p121
      %p123 = pneg %p122
      // Predicated region
      $region9: #{simple_model_forward.3} parent=5 // pred_check
        _
      $region10: #{simple_model_forward.3} parent=5 // pred_check_branch
        %125 = sbr.rel (%p122) target = $region12
      $region11: #{simple_model_forward.3} parent=5 // pred_region
        %s126 = ssub.s32 %s13, 1
        // Predicated region
        $region13: #{simple_model_forward.3} parent=11 // pred_check
          %p127 = pneg %p34
        $region14: #{simple_model_forward.3} parent=11 // pred_check_branch
          %129 = sbr.rel (%p127) target = $region16
        $region15: #{simple_model_forward.3} parent=11 // pred_region
          %s131 = ssub.s32 512, 512
          %132 = vsyncadd [#allocation3], %s131
          %s134 = sshll.u32 [#allocation2], 4
          %s135 = int_to_ptr.vmem [resolvable:$true] %s134
          %137 = dma.hbm_to_vmem [thread:$0]  %s0, 512, %s135, [#allocation3]
        $region16: #{simple_model_forward.3} parent=11 // pred_fallthru
          _
      $region12: #{simple_model_forward.3} parent=5 // pred_fallthru
        _
      %p138 = scmp.lt.s32.totalorder %s13, 2
      // Predicated region
      $region17: #{simple_model_forward.3} parent=5 // pred_check
        %p139 = pneg %p138
      $region18: #{simple_model_forward.3} parent=5 // pred_check_branch
        %141 = sbr.rel (%p139) target = $region20
      $region19: #{simple_model_forward.3} parent=5 // pred_region
        // Predicated region
        $region21: #{simple_model_forward.3} parent=19 // pred_check
          %p142 = pneg %p54
        $region22: #{simple_model_forward.3} parent=19 // pred_check_branch
          %144 = sbr.rel (%p142) target = $region24
        $region23: #{simple_model_forward.3} parent=19 // pred_region
          %s145 = sand.u32 %s13, 1
          %s146 = scalar_lea.sflag [#allocation5], %s145
          %s147 = sand.u32 %s44, 1
          %s148 = smul.addr %s147, 2048
          %s149 = scalar_lea.vmem [#allocation4], %s148
          %s150 = smul.u32 4, %s13
          %s152 = ssub.s32 32768, 32768
          %153 = vsyncadd %s146, %s152
          %s154 = smul.addr %s150, 128
          %s155 = scalar_lea.hbm %s1, %s154
          %s156 = sshll.u32 %s149, 4
          %s157 = int_to_ptr.vmem [resolvable:$true] %s156
          %162 = dma.hbm_to_vmem [thread:$0]  %s155, 32768, %s157, %s146, 1024, 512, 32
        $region24: #{simple_model_forward.3} parent=19 // pred_fallthru
          _
        // Predicated region
        $region25: #{simple_model_forward.3} parent=19 // pred_check
          %p163 = pneg %p80
        $region26: #{simple_model_forward.3} parent=19 // pred_check_branch
          %165 = sbr.rel (%p163) target = $region28
        $region27: #{simple_model_forward.3} parent=19 // pred_region
          %s166 = sand.u32 %s13, 1
          %s167 = scalar_lea.sflag [#allocation5], %s166
          %s168 = sand.u32 %s70, 1
          %s169 = smul.addr %s168, 4
          %s170 = scalar_lea.vmem [#allocation6], %s169
          %s171 = smul.u32 4, %s13
          %s173 = ssub.s32 64, 64
          %174 = vsyncadd %s167, %s173
          %s175 = smul.addr %s171, 16
          %s176 = scalar_lea.hbm %s2, %s175
          %s178 = sshll.u32 %s170, 4
          %s179 = int_to_ptr.vmem [resolvable:$true] %s178
          %181 = dma.hbm_to_vmem [thread:$0]  %s176, 64, %s179, %s167
        $region28: #{simple_model_forward.3} parent=19 // pred_fallthru
          _
      $region20: #{simple_model_forward.3} parent=5 // pred_fallthru
        _
      %p182 = scmp.le.s32.totalorder 1, %s13
      %p183 = scmp.lt.s32.totalorder %s13, 3
      %p184 = pnand %p182, %p183
      %p185 = pneg %p184
      // Predicated region
      $region29: #{simple_model_forward.3} parent=5 // pred_check
        _
      $region30: #{simple_model_forward.3} parent=5 // pred_check_branch
        %187 = sbr.rel (%p184) target = $region32
      $region31: #{simple_model_forward.3} parent=5 // pred_region
        %s188 = ssub.s32 %s13, 1
        // Predicated region
        $region33: #{simple_model_forward.3} parent=31 // pred_check
          %p189 = pneg %p34
        $region34: #{simple_model_forward.3} parent=31 // pred_check_branch
          %191 = sbr.rel (%p189) target = $region36
        $region35: #{simple_model_forward.3} parent=31 // pred_region
          %192 = dma.done [#allocation3], 512
        $region36: #{simple_model_forward.3} parent=31 // pred_fallthru
          _
        %s193 = sand.u32 %s18, 1
        %s194 = scalar_lea.sflag [#allocation5], %s193
        %s195 = sand.u32 %s47, 1
        %s196 = smul.addr %s195, 2048
        %s197 = scalar_lea.vmem [#allocation4], %s196
        // Predicated region
        $region37: #{simple_model_forward.3} parent=31 // pred_check
          %p198 = pneg %p60
        $region38: #{simple_model_forward.3} parent=31 // pred_check_branch
          %200 = sbr.rel (%p198) target = $region40
        $region39: #{simple_model_forward.3} parent=31 // pred_region
          %201 = dma.done %s194, 32768
        $region40: #{simple_model_forward.3} parent=31 // pred_fallthru
          _
        %s202 = sand.u32 %s18, 1
        %s203 = scalar_lea.sflag [#allocation5], %s202
        %s204 = sand.u32 %s73, 1
        %s205 = smul.addr %s204, 4
        %s206 = scalar_lea.vmem [#allocation6], %s205
        // Predicated region
        $region41: #{simple_model_forward.3} parent=31 // pred_check
          %p207 = pneg %p86
        $region42: #{simple_model_forward.3} parent=31 // pred_check_branch
          %209 = sbr.rel (%p207) target = $region44
        $region43: #{simple_model_forward.3} parent=31 // pred_region
          %210 = dma.done %s203, 64
        $region44: #{simple_model_forward.3} parent=31 // pred_fallthru
          _
        %p211 = pneg %p34
        %p212 = pneg %p31
        %s213 = sand.u32 %s18, 1
        %s214 = scalar_lea.sflag [#allocation5], %s213
        %s215 = sand.u32 %s47, 1
        %s216 = smul.addr %s215, 2048
        %s217 = scalar_lea.vmem [#allocation4], %s216
        %p218 = pneg %p60
        %p219 = pneg %p57
        %s220 = sand.u32 %s18, 1
        %s221 = scalar_lea.sflag [#allocation5], %s220
        %s222 = sand.u32 %s73, 1
        %s223 = smul.addr %s222, 4
        %s224 = scalar_lea.vmem [#allocation6], %s223
        %p225 = pneg %p86
        %p226 = pneg %p83
        %p227 = pneg %p112
        %p228 = pneg %p109
        %s229 = smul.u32 4, %s18
        %p230 = scmp.lt.s32.totalorder %s229, 7
        %s231 = scalar_select %p230, %s229, 7
        %s232 = smul.addr %s231, 8
        %s233 = scalar_lea.vmem %s3, %s232
        %s234 = smul.u32 4, %s18
        %s235 = smul.u32 4, %s18
        %s236 = smul.u32 4, %s18
        %p237 = scmp.lt.s32.totalorder %s236, 7
        %s238 = scalar_select %p237, %s236, 7
        %s239 = smul.addr %s238, 8
        %s240 = scalar_lea.vmem %s3, %s239
        %s241 = smul.u32 4, %s18
        %v242 = vld [vmem:[#allocation2] sm:$0xff]
        %v243 = vld [vmem:[#allocation2 + $0x8] sm:$0xff]
        %v244 = vld [vmem:[#allocation2 + $0x10] sm:$0xff]
        %v245 = vld [vmem:[#allocation2 + $0x18] sm:$0xff]
        %v246 = vld [vmem:[%s197] sm:$0xff]
        %v247 = vld [vmem:[%s197 + $0x8] sm:$0xff]
        %v248 = vld [vmem:[%s197 + $0x10] sm:$0xff]
        %v249 = vld [vmem:[%s197 + $0x18] sm:$0xff]
        %v250 = vld [vmem:[%s197 + $0x20] sm:$0xff]
        %v251 = vld [vmem:[%s197 + $0x28] sm:$0xff]
        %v252 = vld [vmem:[%s197 + $0x30] sm:$0xff]
        %v253 = vld [vmem:[%s197 + $0x38] sm:$0xff]
        %v254 = vld [vmem:[%s197 + $0x40] sm:$0xff]
        %v255 = vld [vmem:[%s197 + $0x48] sm:$0xff]
        %v256 = vld [vmem:[%s197 + $0x50] sm:$0xff]
        %v257 = vld [vmem:[%s197 + $0x58] sm:$0xff]
        %v258 = vld [vmem:[%s197 + $0x60] sm:$0xff]
        %v259 = vld [vmem:[%s197 + $0x68] sm:$0xff]
        %v260 = vld [vmem:[%s197 + $0x70] sm:$0xff]
        %v261 = vld [vmem:[%s197 + $0x78] sm:$0xff]
        %v262 = vld [vmem:[%s197 + $0x80] sm:$0xff]
        %v263 = vld [vmem:[%s197 + $0x88] sm:$0xff]
        %v264 = vld [vmem:[%s197 + $0x90] sm:$0xff]
        %v265 = vld [vmem:[%s197 + $0x98] sm:$0xff]
        %v266 = vld [vmem:[%s197 + $0xa0] sm:$0xff]
        %v267 = vld [vmem:[%s197 + $0xa8] sm:$0xff]
        %v268 = vld [vmem:[%s197 + $0xb0] sm:$0xff]
        %v269 = vld [vmem:[%s197 + $0xb8] sm:$0xff]
        %v270 = vld [vmem:[%s197 + $0xc0] sm:$0xff]
        %v271 = vld [vmem:[%s197 + $0xc8] sm:$0xff]
        %v272 = vld [vmem:[%s197 + $0xd0] sm:$0xff]
        %v273 = vld [vmem:[%s197 + $0xd8] sm:$0xff]
        %v274 = vld [vmem:[%s197 + $0xe0] sm:$0xff]
        %v275 = vld [vmem:[%s197 + $0xe8] sm:$0xff]
        %v276 = vld [vmem:[%s197 + $0xf0] sm:$0xff]
        %v277 = vld [vmem:[%s197 + $0xf8] sm:$0xff]
        %v278 = vld [vmem:[%s197 + $0x100] sm:$0xff]
        %v279 = vld [vmem:[%s197 + $0x108] sm:$0xff]
        %v280 = vld [vmem:[%s197 + $0x110] sm:$0xff]
        %v281 = vld [vmem:[%s197 + $0x118] sm:$0xff]
        %v282 = vld [vmem:[%s197 + $0x120] sm:$0xff]
        %v283 = vld [vmem:[%s197 + $0x128] sm:$0xff]
        %v284 = vld [vmem:[%s197 + $0x130] sm:$0xff]
        %v285 = vld [vmem:[%s197 + $0x138] sm:$0xff]
        %v286 = vld [vmem:[%s197 + $0x140] sm:$0xff]
        %v287 = vld [vmem:[%s197 + $0x148] sm:$0xff]
        %v288 = vld [vmem:[%s197 + $0x150] sm:$0xff]
        %v289 = vld [vmem:[%s197 + $0x158] sm:$0xff]
        %v290 = vld [vmem:[%s197 + $0x160] sm:$0xff]
        %v291 = vld [vmem:[%s197 + $0x168] sm:$0xff]
        %v292 = vld [vmem:[%s197 + $0x170] sm:$0xff]
        %v293 = vld [vmem:[%s197 + $0x178] sm:$0xff]
        %v294 = vld [vmem:[%s197 + $0x180] sm:$0xff]
        %v295 = vld [vmem:[%s197 + $0x188] sm:$0xff]
        %v296 = vld [vmem:[%s197 + $0x190] sm:$0xff]
        %v297 = vld [vmem:[%s197 + $0x198] sm:$0xff]
        %v298 = vld [vmem:[%s197 + $0x1a0] sm:$0xff]
        %v299 = vld [vmem:[%s197 + $0x1a8] sm:$0xff]
        %v300 = vld [vmem:[%s197 + $0x1b0] sm:$0xff]
        %v301 = vld [vmem:[%s197 + $0x1b8] sm:$0xff]
        %v302 = vld [vmem:[%s197 + $0x1c0] sm:$0xff]
        %v303 = vld [vmem:[%s197 + $0x1c8] sm:$0xff]
        %v304 = vld [vmem:[%s197 + $0x1d0] sm:$0xff]
        %v305 = vld [vmem:[%s197 + $0x1d8] sm:$0xff]
        %v306 = vld [vmem:[%s197 + $0x1e0] sm:$0xff]
        %v307 = vld [vmem:[%s197 + $0x1e8] sm:$0xff]
        %v308 = vld [vmem:[%s197 + $0x1f0] sm:$0xff]
        %v309 = vld [vmem:[%s197 + $0x1f8] sm:$0xff]
        %v310 = vld [vmem:[%s197 + $0x200] sm:$0xff]
        %v311 = vld [vmem:[%s197 + $0x208] sm:$0xff]
        %v312 = vld [vmem:[%s197 + $0x210] sm:$0xff]
        %v313 = vld [vmem:[%s197 + $0x218] sm:$0xff]
        %v314 = vld [vmem:[%s197 + $0x220] sm:$0xff]
        %v315 = vld [vmem:[%s197 + $0x228] sm:$0xff]
        %v316 = vld [vmem:[%s197 + $0x230] sm:$0xff]
        %v317 = vld [vmem:[%s197 + $0x238] sm:$0xff]
        %v318 = vld [vmem:[%s197 + $0x240] sm:$0xff]
        %v319 = vld [vmem:[%s197 + $0x248] sm:$0xff]
        %v320 = vld [vmem:[%s197 + $0x250] sm:$0xff]
        %v321 = vld [vmem:[%s197 + $0x258] sm:$0xff]
        %v322 = vld [vmem:[%s197 + $0x260] sm:$0xff]
        %v323 = vld [vmem:[%s197 + $0x268] sm:$0xff]
        %v324 = vld [vmem:[%s197 + $0x270] sm:$0xff]
        %v325 = vld [vmem:[%s197 + $0x278] sm:$0xff]
        %v326 = vld [vmem:[%s197 + $0x280] sm:$0xff]
        %v327 = vld [vmem:[%s197 + $0x288] sm:$0xff]
        %v328 = vld [vmem:[%s197 + $0x290] sm:$0xff]
        %v329 = vld [vmem:[%s197 + $0x298] sm:$0xff]
        %v330 = vld [vmem:[%s197 + $0x2a0] sm:$0xff]
        %v331 = vld [vmem:[%s197 + $0x2a8] sm:$0xff]
        %v332 = vld [vmem:[%s197 + $0x2b0] sm:$0xff]
        %v333 = vld [vmem:[%s197 + $0x2b8] sm:$0xff]
        %v334 = vld [vmem:[%s197 + $0x2c0] sm:$0xff]
        %v335 = vld [vmem:[%s197 + $0x2c8] sm:$0xff]
        %v336 = vld [vmem:[%s197 + $0x2d0] sm:$0xff]
        %v337 = vld [vmem:[%s197 + $0x2d8] sm:$0xff]
        %v338 = vld [vmem:[%s197 + $0x2e0] sm:$0xff]
        %v339 = vld [vmem:[%s197 + $0x2e8] sm:$0xff]
        %v340 = vld [vmem:[%s197 + $0x2f0] sm:$0xff]
        %v341 = vld [vmem:[%s197 + $0x2f8] sm:$0xff]
        %v342 = vld [vmem:[%s197 + $0x300] sm:$0xff]
        %v343 = vld [vmem:[%s197 + $0x308] sm:$0xff]
        %v344 = vld [vmem:[%s197 + $0x310] sm:$0xff]
        %v345 = vld [vmem:[%s197 + $0x318] sm:$0xff]
        %v346 = vld [vmem:[%s197 + $0x320] sm:$0xff]
        %v347 = vld [vmem:[%s197 + $0x328] sm:$0xff]
        %v348 = vld [vmem:[%s197 + $0x330] sm:$0xff]
        %v349 = vld [vmem:[%s197 + $0x338] sm:$0xff]
        %v350 = vld [vmem:[%s197 + $0x340] sm:$0xff]
        %v351 = vld [vmem:[%s197 + $0x348] sm:$0xff]
        %v352 = vld [vmem:[%s197 + $0x350] sm:$0xff]
        %v353 = vld [vmem:[%s197 + $0x358] sm:$0xff]
        %v354 = vld [vmem:[%s197 + $0x360] sm:$0xff]
        %v355 = vld [vmem:[%s197 + $0x368] sm:$0xff]
        %v356 = vld [vmem:[%s197 + $0x370] sm:$0xff]
        %v357 = vld [vmem:[%s197 + $0x378] sm:$0xff]
        %v358 = vld [vmem:[%s197 + $0x380] sm:$0xff]
        %v359 = vld [vmem:[%s197 + $0x388] sm:$0xff]
        %v360 = vld [vmem:[%s197 + $0x390] sm:$0xff]
        %v361 = vld [vmem:[%s197 + $0x398] sm:$0xff]
        %v362 = vld [vmem:[%s197 + $0x3a0] sm:$0xff]
        %v363 = vld [vmem:[%s197 + $0x3a8] sm:$0xff]
        %v364 = vld [vmem:[%s197 + $0x3b0] sm:$0xff]
        %v365 = vld [vmem:[%s197 + $0x3b8] sm:$0xff]
        %v366 = vld [vmem:[%s197 + $0x3c0] sm:$0xff]
        %v367 = vld [vmem:[%s197 + $0x3c8] sm:$0xff]
        %v368 = vld [vmem:[%s197 + $0x3d0] sm:$0xff]
        %v369 = vld [vmem:[%s197 + $0x3d8] sm:$0xff]
        %v370 = vld [vmem:[%s197 + $0x3e0] sm:$0xff]
        %v371 = vld [vmem:[%s197 + $0x3e8] sm:$0xff]
        %v372 = vld [vmem:[%s197 + $0x3f0] sm:$0xff]
        %v373 = vld [vmem:[%s197 + $0x3f8] sm:$0xff]
        %v374 = vld [vmem:[%s197 + $0x400] sm:$0xff]
        %v375 = vld [vmem:[%s197 + $0x408] sm:$0xff]
        %v376 = vld [vmem:[%s197 + $0x410] sm:$0xff]
        %v377 = vld [vmem:[%s197 + $0x418] sm:$0xff]
        %v378 = vld [vmem:[%s197 + $0x420] sm:$0xff]
        %v379 = vld [vmem:[%s197 + $0x428] sm:$0xff]
        %v380 = vld [vmem:[%s197 + $0x430] sm:$0xff]
        %v381 = vld [vmem:[%s197 + $0x438] sm:$0xff]
        %v382 = vld [vmem:[%s197 + $0x440] sm:$0xff]
        %v383 = vld [vmem:[%s197 + $0x448] sm:$0xff]
        %v384 = vld [vmem:[%s197 + $0x450] sm:$0xff]
        %v385 = vld [vmem:[%s197 + $0x458] sm:$0xff]
        %v386 = vld [vmem:[%s197 + $0x460] sm:$0xff]
        %v387 = vld [vmem:[%s197 + $0x468] sm:$0xff]
        %v388 = vld [vmem:[%s197 + $0x470] sm:$0xff]
        %v389 = vld [vmem:[%s197 + $0x478] sm:$0xff]
        %v390 = vld [vmem:[%s197 + $0x480] sm:$0xff]
        %v391 = vld [vmem:[%s197 + $0x488] sm:$0xff]
        %v392 = vld [vmem:[%s197 + $0x490] sm:$0xff]
        %v393 = vld [vmem:[%s197 + $0x498] sm:$0xff]
        %v394 = vld [vmem:[%s197 + $0x4a0] sm:$0xff]
        %v395 = vld [vmem:[%s197 + $0x4a8] sm:$0xff]
        %v396 = vld [vmem:[%s197 + $0x4b0] sm:$0xff]
        %v397 = vld [vmem:[%s197 + $0x4b8] sm:$0xff]
        %v398 = vld [vmem:[%s197 + $0x4c0] sm:$0xff]
        %v399 = vld [vmem:[%s197 + $0x4c8] sm:$0xff]
        %v400 = vld [vmem:[%s197 + $0x4d0] sm:$0xff]
        %v401 = vld [vmem:[%s197 + $0x4d8] sm:$0xff]
        %v402 = vld [vmem:[%s197 + $0x4e0] sm:$0xff]
        %v403 = vld [vmem:[%s197 + $0x4e8] sm:$0xff]
        %v404 = vld [vmem:[%s197 + $0x4f0] sm:$0xff]
        %v405 = vld [vmem:[%s197 + $0x4f8] sm:$0xff]
        %v406 = vld [vmem:[%s197 + $0x500] sm:$0xff]
        %v407 = vld [vmem:[%s197 + $0x508] sm:$0xff]
        %v408 = vld [vmem:[%s197 + $0x510] sm:$0xff]
        %v409 = vld [vmem:[%s197 + $0x518] sm:$0xff]
        %v410 = vld [vmem:[%s197 + $0x520] sm:$0xff]
        %v411 = vld [vmem:[%s197 + $0x528] sm:$0xff]
        %v412 = vld [vmem:[%s197 + $0x530] sm:$0xff]
        %v413 = vld [vmem:[%s197 + $0x538] sm:$0xff]
        %v414 = vld [vmem:[%s197 + $0x540] sm:$0xff]
        %v415 = vld [vmem:[%s197 + $0x548] sm:$0xff]
        %v416 = vld [vmem:[%s197 + $0x550] sm:$0xff]
        %v417 = vld [vmem:[%s197 + $0x558] sm:$0xff]
        %v418 = vld [vmem:[%s197 + $0x560] sm:$0xff]
        %v419 = vld [vmem:[%s197 + $0x568] sm:$0xff]
        %v420 = vld [vmem:[%s197 + $0x570] sm:$0xff]
        %v421 = vld [vmem:[%s197 + $0x578] sm:$0xff]
        %v422 = vld [vmem:[%s197 + $0x580] sm:$0xff]
        %v423 = vld [vmem:[%s197 + $0x588] sm:$0xff]
        %v424 = vld [vmem:[%s197 + $0x590] sm:$0xff]
        %v425 = vld [vmem:[%s197 + $0x598] sm:$0xff]
        %v426 = vld [vmem:[%s197 + $0x5a0] sm:$0xff]
        %v427 = vld [vmem:[%s197 + $0x5a8] sm:$0xff]
        %v428 = vld [vmem:[%s197 + $0x5b0] sm:$0xff]
        %v429 = vld [vmem:[%s197 + $0x5b8] sm:$0xff]
        %v430 = vld [vmem:[%s197 + $0x5c0] sm:$0xff]
        %v431 = vld [vmem:[%s197 + $0x5c8] sm:$0xff]
        %v432 = vld [vmem:[%s197 + $0x5d0] sm:$0xff]
        %v433 = vld [vmem:[%s197 + $0x5d8] sm:$0xff]
        %v434 = vld [vmem:[%s197 + $0x5e0] sm:$0xff]
        %v435 = vld [vmem:[%s197 + $0x5e8] sm:$0xff]
        %v436 = vld [vmem:[%s197 + $0x5f0] sm:$0xff]
        %v437 = vld [vmem:[%s197 + $0x5f8] sm:$0xff]
        %v438 = vld [vmem:[%s197 + $0x600] sm:$0xff]
        %v439 = vld [vmem:[%s197 + $0x608] sm:$0xff]
        %v440 = vld [vmem:[%s197 + $0x610] sm:$0xff]
        %v441 = vld [vmem:[%s197 + $0x618] sm:$0xff]
        %v442 = vld [vmem:[%s197 + $0x620] sm:$0xff]
        %v443 = vld [vmem:[%s197 + $0x628] sm:$0xff]
        %v444 = vld [vmem:[%s197 + $0x630] sm:$0xff]
        %v445 = vld [vmem:[%s197 + $0x638] sm:$0xff]
        %v446 = vld [vmem:[%s197 + $0x640] sm:$0xff]
        %v447 = vld [vmem:[%s197 + $0x648] sm:$0xff]
        %v448 = vld [vmem:[%s197 + $0x650] sm:$0xff]
        %v449 = vld [vmem:[%s197 + $0x658] sm:$0xff]
        %v450 = vld [vmem:[%s197 + $0x660] sm:$0xff]
        %v451 = vld [vmem:[%s197 + $0x668] sm:$0xff]
        %v452 = vld [vmem:[%s197 + $0x670] sm:$0xff]
        %v453 = vld [vmem:[%s197 + $0x678] sm:$0xff]
        %v454 = vld [vmem:[%s197 + $0x680] sm:$0xff]
        %v455 = vld [vmem:[%s197 + $0x688] sm:$0xff]
        %v456 = vld [vmem:[%s197 + $0x690] sm:$0xff]
        %v457 = vld [vmem:[%s197 + $0x698] sm:$0xff]
        %v458 = vld [vmem:[%s197 + $0x6a0] sm:$0xff]
        %v459 = vld [vmem:[%s197 + $0x6a8] sm:$0xff]
        %v460 = vld [vmem:[%s197 + $0x6b0] sm:$0xff]
        %v461 = vld [vmem:[%s197 + $0x6b8] sm:$0xff]
        %v462 = vld [vmem:[%s197 + $0x6c0] sm:$0xff]
        %v463 = vld [vmem:[%s197 + $0x6c8] sm:$0xff]
        %v464 = vld [vmem:[%s197 + $0x6d0] sm:$0xff]
        %v465 = vld [vmem:[%s197 + $0x6d8] sm:$0xff]
        %v466 = vld [vmem:[%s197 + $0x6e0] sm:$0xff]
        %v467 = vld [vmem:[%s197 + $0x6e8] sm:$0xff]
        %v468 = vld [vmem:[%s197 + $0x6f0] sm:$0xff]
        %v469 = vld [vmem:[%s197 + $0x6f8] sm:$0xff]
        %v470 = vld [vmem:[%s197 + $0x700] sm:$0xff]
        %v471 = vld [vmem:[%s197 + $0x708] sm:$0xff]
        %v472 = vld [vmem:[%s197 + $0x710] sm:$0xff]
        %v473 = vld [vmem:[%s197 + $0x718] sm:$0xff]
        %v474 = vld [vmem:[%s197 + $0x720] sm:$0xff]
        %v475 = vld [vmem:[%s197 + $0x728] sm:$0xff]
        %v476 = vld [vmem:[%s197 + $0x730] sm:$0xff]
        %v477 = vld [vmem:[%s197 + $0x738] sm:$0xff]
        %v478 = vld [vmem:[%s197 + $0x740] sm:$0xff]
        %v479 = vld [vmem:[%s197 + $0x748] sm:$0xff]
        %v480 = vld [vmem:[%s197 + $0x750] sm:$0xff]
        %v481 = vld [vmem:[%s197 + $0x758] sm:$0xff]
        %v482 = vld [vmem:[%s197 + $0x760] sm:$0xff]
        %v483 = vld [vmem:[%s197 + $0x768] sm:$0xff]
        %v484 = vld [vmem:[%s197 + $0x770] sm:$0xff]
        %v485 = vld [vmem:[%s197 + $0x778] sm:$0xff]
        %v486 = vld [vmem:[%s197 + $0x780] sm:$0xff]
        %v487 = vld [vmem:[%s197 + $0x788] sm:$0xff]
        %v488 = vld [vmem:[%s197 + $0x790] sm:$0xff]
        %v489 = vld [vmem:[%s197 + $0x798] sm:$0xff]
        %v490 = vld [vmem:[%s197 + $0x7a0] sm:$0xff]
        %v491 = vld [vmem:[%s197 + $0x7a8] sm:$0xff]
        %v492 = vld [vmem:[%s197 + $0x7b0] sm:$0xff]
        %v493 = vld [vmem:[%s197 + $0x7b8] sm:$0xff]
        %v494 = vld [vmem:[%s197 + $0x7c0] sm:$0xff]
        %v495 = vld [vmem:[%s197 + $0x7c8] sm:$0xff]
        %v496 = vld [vmem:[%s197 + $0x7d0] sm:$0xff]
        %v497 = vld [vmem:[%s197 + $0x7d8] sm:$0xff]
        %v498 = vld [vmem:[%s197 + $0x7e0] sm:$0xff]
        %v499 = vld [vmem:[%s197 + $0x7e8] sm:$0xff]
        %v500 = vld [vmem:[%s197 + $0x7f0] sm:$0xff]
        %v501 = vld [vmem:[%s197 + $0x7f8] sm:$0xff]
        %v502 = vld [vmem:[%s206] sm:$0xf]
        %v504 = vlaneseq
        %v505 = vshrl.u32 %v504, 7
        %v506 = vsub.s32 0, %v505
        %v507 = vrot.slane %v502, %v506
        %v508 = vlaneseq
        %v509 = vshrl.u32 %v508, 7
        %v510 = vsub.s32 1, %v509
        %v511 = vrot.slane %v502, %v510
        %v512 = vlaneseq
        %v513 = vshrl.u32 %v512, 7
        %v514 = vsub.s32 2, %v513
        %v515 = vrot.slane %v502, %v514
        %v516 = vlaneseq
        %v517 = vshrl.u32 %v516, 7
        %v518 = vsub.s32 3, %v517
        %v519 = vrot.slane %v502, %v518
        %524 = vmatprep.subr.mxu0 %v247
        %525 = vmatpush1.msra.mxu0 %v246
        %526 = vmatprep.subr.mxu0 %v251
        %527 = vmatpush1.msra.mxu0 %v250
        %528 = vmatprep.subr.mxu0 %v255
        %529 = vmatpush1.msra.mxu0 %v254
        %530 = vmatprep.subr.mxu0 %v259
        %531 = vmatpush1.msra.mxu0 %v258
        %532 = vmatprep.subr.mxu0 %v263
        %533 = vmatpush1.msra.mxu0 %v262
        %534 = vmatprep.subr.mxu0 %v267
        %535 = vmatpush1.msra.mxu0 %v266
        %536 = vmatprep.subr.mxu0 %v271
        %537 = vmatpush1.msra.mxu0 %v270
        %538 = vmatprep.subr.mxu0 %v275
        %539 = vmatpush1.msra.mxu0 %v274
        %540 = vmatprep.subr.mxu0 %v279
        %541 = vmatpush1.msra.mxu0 %v278
        %542 = vmatprep.subr.mxu0 %v283
        %543 = vmatpush1.msra.mxu0 %v282
        %544 = vmatprep.subr.mxu0 %v287
        %545 = vmatpush1.msra.mxu0 %v286
        %546 = vmatprep.subr.mxu0 %v291
        %547 = vmatpush1.msra.mxu0 %v290
        %548 = vmatprep.subr.mxu0 %v295
        %549 = vmatpush1.msra.mxu0 %v294
        %550 = vmatprep.subr.mxu0 %v299
        %551 = vmatpush1.msra.mxu0 %v298
        %552 = vmatprep.subr.mxu0 %v303
        %553 = vmatpush1.msra.mxu0 %v302
        %554 = vmatprep.subr.mxu0 %v307
        %555 = vmatpush1.msra.mxu0 %v306
        %556 = vmatprep.subr.mxu0 %v311
        %557 = vmatpush1.msra.mxu0 %v310
        %558 = vmatprep.subr.mxu0 %v315
        %559 = vmatpush1.msra.mxu0 %v314
        %560 = vmatprep.subr.mxu0 %v319
        %561 = vmatpush1.msra.mxu0 %v318
        %562 = vmatprep.subr.mxu0 %v323
        %563 = vmatpush1.msra.mxu0 %v322
        %564 = vmatprep.subr.mxu0 %v327
        %565 = vmatpush1.msra.mxu0 %v326
        %566 = vmatprep.subr.mxu0 %v331
        %567 = vmatpush1.msra.mxu0 %v330
        %568 = vmatprep.subr.mxu0 %v335
        %569 = vmatpush1.msra.mxu0 %v334
        %570 = vmatprep.subr.mxu0 %v339
        %571 = vmatpush1.msra.mxu0 %v338
        %572 = vmatprep.subr.mxu0 %v343
        %573 = vmatpush1.msra.mxu0 %v342
        %574 = vmatprep.subr.mxu0 %v347
        %575 = vmatpush1.msra.mxu0 %v346
        %576 = vmatprep.subr.mxu0 %v351
        %577 = vmatpush1.msra.mxu0 %v350
        %578 = vmatprep.subr.mxu0 %v355
        %579 = vmatpush1.msra.mxu0 %v354
        %580 = vmatprep.subr.mxu0 %v359
        %581 = vmatpush1.msra.mxu0 %v358
        %582 = vmatprep.subr.mxu0 %v363
        %583 = vmatpush1.msra.mxu0 %v362
        %584 = vmatprep.subr.mxu0 %v367
        %585 = vmatpush1.msra.mxu0 %v366
        %586 = vmatprep.subr.mxu0 %v371
        %587 = vmatpush1.msra.mxu0 %v370
        %588 = vmatprep.mubr.f32.mxu0 %v243
        %589 = vmatmul.mubr.f32.gmra.mrb[0].mxu0 %v242
        %v590 = vpop.f32.mrb[0].mxu0
        %v591 = vadd.f32 %v507, %v590
        %v592 = vpop.f32.mrb[0].mxu0
        %v593 = vadd.f32 %v511, %v592
        %594 = vdwg.mxu0
        %595 = vmatprep.subr.mxu0 %v375
        %596 = vmatpush1.msra.mxu0 %v374
        %597 = vmatprep.subr.mxu0 %v379
        %598 = vmatpush1.msra.mxu0 %v378
        %599 = vmatprep.subr.mxu0 %v383
        %600 = vmatpush1.msra.mxu0 %v382
        %601 = vmatprep.subr.mxu0 %v387
        %602 = vmatpush1.msra.mxu0 %v386
        %603 = vmatprep.subr.mxu0 %v391
        %604 = vmatpush1.msra.mxu0 %v390
        %605 = vmatprep.subr.mxu0 %v395
        %606 = vmatpush1.msra.mxu0 %v394
        %607 = vmatprep.subr.mxu0 %v399
        %608 = vmatpush1.msra.mxu0 %v398
        %609 = vmatprep.subr.mxu0 %v403
        %610 = vmatpush1.msra.mxu0 %v402
        %611 = vmatprep.subr.mxu0 %v407
        %612 = vmatpush1.msra.mxu0 %v406
        %613 = vmatprep.subr.mxu0 %v411
        %614 = vmatpush1.msra.mxu0 %v410
        %615 = vmatprep.subr.mxu0 %v415
        %616 = vmatpush1.msra.mxu0 %v414
        %617 = vmatprep.subr.mxu0 %v419
        %618 = vmatpush1.msra.mxu0 %v418
        %619 = vmatprep.subr.mxu0 %v423
        %620 = vmatpush1.msra.mxu0 %v422
        %621 = vmatprep.subr.mxu0 %v427
        %622 = vmatpush1.msra.mxu0 %v426
        %623 = vmatprep.subr.mxu0 %v431
        %624 = vmatpush1.msra.mxu0 %v430
        %625 = vmatprep.subr.mxu0 %v435
        %626 = vmatpush1.msra.mxu0 %v434
        %627 = vmatprep.subr.mxu0 %v439
        %628 = vmatpush1.msra.mxu0 %v438
        %629 = vmatprep.subr.mxu0 %v443
        %630 = vmatpush1.msra.mxu0 %v442
        %631 = vmatprep.subr.mxu0 %v447
        %632 = vmatpush1.msra.mxu0 %v446
        %633 = vmatprep.subr.mxu0 %v451
        %634 = vmatpush1.msra.mxu0 %v450
        %635 = vmatprep.subr.mxu0 %v455
        %636 = vmatpush1.msra.mxu0 %v454
        %637 = vmatprep.subr.mxu0 %v459
        %638 = vmatpush1.msra.mxu0 %v458
        %639 = vmatprep.subr.mxu0 %v463
        %640 = vmatpush1.msra.mxu0 %v462
        %641 = vmatprep.subr.mxu0 %v467
        %642 = vmatpush1.msra.mxu0 %v466
        %643 = vmatprep.subr.mxu0 %v471
        %644 = vmatpush1.msra.mxu0 %v470
        %645 = vmatprep.subr.mxu0 %v475
        %646 = vmatpush1.msra.mxu0 %v474
        %647 = vmatprep.subr.mxu0 %v479
        %648 = vmatpush1.msra.mxu0 %v478
        %649 = vmatprep.subr.mxu0 %v483
        %650 = vmatpush1.msra.mxu0 %v482
        %651 = vmatprep.subr.mxu0 %v487
        %652 = vmatpush1.msra.mxu0 %v486
        %653 = vmatprep.subr.mxu0 %v491
        %654 = vmatpush1.msra.mxu0 %v490
        %655 = vmatprep.subr.mxu0 %v495
        %656 = vmatpush1.msra.mxu0 %v494
        %657 = vmatprep.subr.mxu0 %v499
        %658 = vmatpush1.msra.mxu0 %v498
        %659 = vmatprep.mubr.f32.mxu0 %v245
        %660 = vmatmul.mubr.f32.gmra.mrb[0].mxu0 %v244
        %v661 = vpop.f32.mrb[0].mxu0
        %v662 = vadd.f32 %v591, %v661
        %v663 = vpop.f32.mrb[0].mxu0
        %v664 = vadd.f32 %v593, %v663
        %665 = vdwg.mxu0
        %666 = vmatprep.subr.mxu0 %v249
        %667 = vmatpush1.msra.mxu0 %v248
        %668 = vmatprep.subr.mxu0 %v253
        %669 = vmatpush1.msra.mxu0 %v252
        %670 = vmatprep.subr.mxu0 %v257
        %671 = vmatpush1.msra.mxu0 %v256
        %672 = vmatprep.subr.mxu0 %v261
        %673 = vmatpush1.msra.mxu0 %v260
        %674 = vmatprep.subr.mxu0 %v265
        %675 = vmatpush1.msra.mxu0 %v264
        %676 = vmatprep.subr.mxu0 %v269
        %677 = vmatpush1.msra.mxu0 %v268
        %678 = vmatprep.subr.mxu0 %v273
        %679 = vmatpush1.msra.mxu0 %v272
        %680 = vmatprep.subr.mxu0 %v277
        %681 = vmatpush1.msra.mxu0 %v276
        %682 = vmatprep.subr.mxu0 %v281
        %683 = vmatpush1.msra.mxu0 %v280
        %684 = vmatprep.subr.mxu0 %v285
        %685 = vmatpush1.msra.mxu0 %v284
        %686 = vmatprep.subr.mxu0 %v289
        %687 = vmatpush1.msra.mxu0 %v288
        %688 = vmatprep.subr.mxu0 %v293
        %689 = vmatpush1.msra.mxu0 %v292
        %690 = vmatprep.subr.mxu0 %v297
        %691 = vmatpush1.msra.mxu0 %v296
        %692 = vmatprep.subr.mxu0 %v301
        %693 = vmatpush1.msra.mxu0 %v300
        %694 = vmatprep.subr.mxu0 %v305
        %695 = vmatpush1.msra.mxu0 %v304
        %696 = vmatprep.subr.mxu0 %v309
        %697 = vmatpush1.msra.mxu0 %v308
        %698 = vmatprep.subr.mxu0 %v313
        %699 = vmatpush1.msra.mxu0 %v312
        %700 = vmatprep.subr.mxu0 %v317
        %701 = vmatpush1.msra.mxu0 %v316
        %702 = vmatprep.subr.mxu0 %v321
        %703 = vmatpush1.msra.mxu0 %v320
        %704 = vmatprep.subr.mxu0 %v325
        %705 = vmatpush1.msra.mxu0 %v324
        %706 = vmatprep.subr.mxu0 %v329
        %707 = vmatpush1.msra.mxu0 %v328
        %708 = vmatprep.subr.mxu0 %v333
        %709 = vmatpush1.msra.mxu0 %v332
        %710 = vmatprep.subr.mxu0 %v337
        %711 = vmatpush1.msra.mxu0 %v336
        %712 = vmatprep.subr.mxu0 %v341
        %713 = vmatpush1.msra.mxu0 %v340
        %714 = vmatprep.subr.mxu0 %v345
        %715 = vmatpush1.msra.mxu0 %v344
        %716 = vmatprep.subr.mxu0 %v349
        %717 = vmatpush1.msra.mxu0 %v348
        %718 = vmatprep.subr.mxu0 %v353
        %719 = vmatpush1.msra.mxu0 %v352
        %720 = vmatprep.subr.mxu0 %v357
        %721 = vmatpush1.msra.mxu0 %v356
        %722 = vmatprep.subr.mxu0 %v361
        %723 = vmatpush1.msra.mxu0 %v360
        %724 = vmatprep.subr.mxu0 %v365
        %725 = vmatpush1.msra.mxu0 %v364
        %726 = vmatprep.subr.mxu0 %v369
        %727 = vmatpush1.msra.mxu0 %v368
        %728 = vmatprep.subr.mxu0 %v373
        %729 = vmatpush1.msra.mxu0 %v372
        %730 = vmatprep.mubr.f32.mxu0 %v243
        %731 = vmatmul.mubr.f32.gmra.mrb[0].mxu0 %v242
        %v732 = vpop.f32.mrb[0].mxu0
        %v733 = vadd.f32 %v515, %v732
        %v734 = vpop.f32.mrb[0].mxu0
        %v735 = vadd.f32 %v519, %v734
        %736 = vdwg.mxu0
        %737 = vmatprep.subr.mxu0 %v377
        %738 = vmatpush1.msra.mxu0 %v376
        %739 = vmatprep.subr.mxu0 %v381
        %740 = vmatpush1.msra.mxu0 %v380
        %741 = vmatprep.subr.mxu0 %v385
        %742 = vmatpush1.msra.mxu0 %v384
        %743 = vmatprep.subr.mxu0 %v389
        %744 = vmatpush1.msra.mxu0 %v388
        %745 = vmatprep.subr.mxu0 %v393
        %746 = vmatpush1.msra.mxu0 %v392
        %747 = vmatprep.subr.mxu0 %v397
        %748 = vmatpush1.msra.mxu0 %v396
        %749 = vmatprep.subr.mxu0 %v401
        %750 = vmatpush1.msra.mxu0 %v400
        %751 = vmatprep.subr.mxu0 %v405
        %752 = vmatpush1.msra.mxu0 %v404
        %753 = vmatprep.subr.mxu0 %v409
        %754 = vmatpush1.msra.mxu0 %v408
        %755 = vmatprep.subr.mxu0 %v413
        %756 = vmatpush1.msra.mxu0 %v412
        %757 = vmatprep.subr.mxu0 %v417
        %758 = vmatpush1.msra.mxu0 %v416
        %759 = vmatprep.subr.mxu0 %v421
        %760 = vmatpush1.msra.mxu0 %v420
        %761 = vmatprep.subr.mxu0 %v425
        %762 = vmatpush1.msra.mxu0 %v424
        %763 = vmatprep.subr.mxu0 %v429
        %764 = vmatpush1.msra.mxu0 %v428
        %765 = vmatprep.subr.mxu0 %v433
        %766 = vmatpush1.msra.mxu0 %v432
        %767 = vmatprep.subr.mxu0 %v437
        %768 = vmatpush1.msra.mxu0 %v436
        %769 = vmatprep.subr.mxu0 %v441
        %770 = vmatpush1.msra.mxu0 %v440
        %771 = vmatprep.subr.mxu0 %v445
        %772 = vmatpush1.msra.mxu0 %v444
        %773 = vmatprep.subr.mxu0 %v449
        %774 = vmatpush1.msra.mxu0 %v448
        %775 = vmatprep.subr.mxu0 %v453
        %776 = vmatpush1.msra.mxu0 %v452
        %777 = vmatprep.subr.mxu0 %v457
        %778 = vmatpush1.msra.mxu0 %v456
        %779 = vmatprep.subr.mxu0 %v461
        %780 = vmatpush1.msra.mxu0 %v460
        %781 = vmatprep.subr.mxu0 %v465
        %782 = vmatpush1.msra.mxu0 %v464
        %783 = vmatprep.subr.mxu0 %v469
        %784 = vmatpush1.msra.mxu0 %v468
        %785 = vmatprep.subr.mxu0 %v473
        %786 = vmatpush1.msra.mxu0 %v472
        %787 = vmatprep.subr.mxu0 %v477
        %788 = vmatpush1.msra.mxu0 %v476
        %789 = vmatprep.subr.mxu0 %v481
        %790 = vmatpush1.msra.mxu0 %v480
        %791 = vmatprep.subr.mxu0 %v485
        %792 = vmatpush1.msra.mxu0 %v484
        %793 = vmatprep.subr.mxu0 %v489
        %794 = vmatpush1.msra.mxu0 %v488
        %795 = vmatprep.subr.mxu0 %v493
        %796 = vmatpush1.msra.mxu0 %v492
        %797 = vmatprep.subr.mxu0 %v497
        %798 = vmatpush1.msra.mxu0 %v496
        %799 = vmatprep.subr.mxu0 %v501
        %800 = vmatpush1.msra.mxu0 %v500
        %801 = vmatprep.mubr.f32.mxu0 %v245
        %802 = vmatmul.mubr.f32.gmra.mrb[0].mxu0 %v244
        %v803 = vpop.f32.mrb[0].mxu0
        %v804 = vadd.f32 %v733, %v803
        %v805 = vpop.f32.mrb[0].mxu0
        %v806 = vadd.f32 %v735, %v805
        %807 = vdwg.mxu0
        %v808 = vmax.f32 %v662, 0.0
        %v809 = vmax.f32 %v664, 0.0
        %v810 = vmax.f32 %v804, 0.0
        %v811 = vmax.f32 %v806, 0.0
        %812 = vst [vmem:[%s240] sm:$0xff] %v808
        %813 = vst [vmem:[%s240 + $0x8] sm:$0xff] %v809
        %814 = vst [vmem:[%s240 + $0x10] sm:$0xff] %v810
        %815 = vst [vmem:[%s240 + $0x18] sm:$0xff] %v811
        %s816 = smul.u32 4, %s18
        %p817 = scmp.lt.s32.totalorder %s816, 7
        %s818 = scalar_select %p817, %s816, 7
        %s819 = smul.addr %s818, 8
        %s820 = scalar_lea.vmem %s3, %s819
        // Predicated region
        $region45: #{simple_model_forward.3} parent=31 // pred_check
          %p821 = pneg %p109
        $region46: #{simple_model_forward.3} parent=31 // pred_check_branch
          %823 = sbr.rel (%p821) target = $region48
        $region47: #{simple_model_forward.3} parent=31 // pred_region
          %s824 = smul.u32 4, %s18
        $region48: #{simple_model_forward.3} parent=31 // pred_fallthru
          _
      $region32: #{simple_model_forward.3} parent=5 // pred_fallthru
        _
      %p825 = scmp.le.s32.totalorder 2, %s13
      // Predicated region
      $region49: #{simple_model_forward.3} parent=5 // pred_check
        %p826 = pneg %p825
      $region50: #{simple_model_forward.3} parent=5 // pred_check_branch
        %828 = sbr.rel (%p826) target = $region52
      $region51: #{simple_model_forward.3} parent=5 // pred_region
        %s829 = ssub.s32 %s13, 2
        // Predicated region
        $region53: #{simple_model_forward.3} parent=51 // pred_check
          %p830 = pneg %p115
        $region54: #{simple_model_forward.3} parent=51 // pred_check_branch
          %832 = sbr.rel (%p830) target = $region56
        $region55: #{simple_model_forward.3} parent=51 // pred_region
          %s833 = smul.u32 4, %s19
          %p834 = scmp.lt.s32.totalorder %s833, 7
          %s835 = scalar_select %p834, %s833, 7
          %s836 = smul.addr %s835, 8
          %s837 = scalar_lea.vmem %s3, %s836
        $region56: #{simple_model_forward.3} parent=51 // pred_fallthru
          _
      $region52: #{simple_model_forward.3} parent=5 // pred_fallthru
        _
    $region6: #{simple_model_forward.3} parent=1 // loop_footer
      %s17 = sadd.s32 1, %s13
    $region7: #{simple_model_forward.3} parent=1 // loop_footer_branch
      %12 = sbr.rel target = $region3
    $region8: #{simple_model_forward.3} parent=1 // loop_exit
      _
    %838 = vsyncpa [#allocation3], 1
    %s839 = scalar_lea.sflag [#allocation3], 1
    %840 = vsyncpa %s839, 1
    %841 = vsyncpa [#allocation5], 1
    %s842 = scalar_lea.sflag [#allocation5], 1
    %843 = vsyncpa %s842, 1

// kernel: simple_model_forward.4
$region0: #{simple_model_forward.4}
  #allocation0 [shape = 'u32[]', space=smem, size = 0x4, offset = 0x4, fixed_abs, tag = 'smem constant byte address 0x4 - core index']
  #allocation1 [shape = 'u32[144,128]{1,0:T(1,128)}', space=vmem, size = 0x12000, scoped, tag = 'internal scratch']
  #allocation2 [shape = 'f32[8,1024]{1,0:T(8,128)}', space=vmem, size = 0x8000, scoped, tag = 'scratch operand']
  #allocation3 [shape = 'f32[8,1024]{1,0:T(8,128)}', space=vmem, size = 0x8000, scoped, tag = 'scratch operand']
  %s0 = inlined_call_operand.vmem [shape: f32[8,1024], index: 0, kind: input, shape index: {}]
  %s1 = inlined_call_operand.hbm [shape: f32[1,1024,1024], index: 1, kind: input, shape index: {}]
  %s2 = inlined_call_operand.hbm [shape: f32[1,1,1024], index: 2, kind: input, shape index: {}]
  %s3 = inlined_call_operand.vmem [shape: f32[8,1024], index: 3, kind: output, shape index: {}]
  %s4 = sld [smem:[#allocation0]]
  $region73: #{simple_model_forward.4} parent=0
    _
  %s6 = ssub.s32 1, %s4
  %s7 = scalar_select 0, %s6, %s4
  $region1: #{simple_model_forward.4} parent=0
    #allocation4 [shape = 'u8[4194304]{0}', space=vmem, size = 0x400000, scoped, tag = 'input window, operand 1']
    #allocation5 [shape = 's32[2]{0}', space=sflag, size = 0x8, scoped, tag = 'scoped memory for simple_model_forward.4']
    #allocation6 [shape = 'u8[4096]{0}', space=vmem, size = 0x1000, scoped, tag = 'input window, operand 2']
    #allocation7 [shape = 's32[2]{0}', space=sflag, size = 0x8, scoped, tag = 'scoped memory for simple_model_forward.4']
    %8 = vsyncpa [#allocation5], 0
    %s9 = scalar_lea.sflag [#allocation5], 1
    %10 = vsyncpa %s9, 0
    %11 = vsyncpa [#allocation7], 0
    %s12 = scalar_lea.sflag [#allocation7], 1
    %13 = vsyncpa %s12, 0
    loop: start=0, step=1, limit=4
    $region2: #{simple_model_forward.4} parent=1 // loop_pre_header
      _
    $region3: #{simple_model_forward.4} parent=1 // loop_header
      %s15 = sphi 0, %s19
      %p16 = scmp.ge.s32.totalorder %s15, 4
      %s22 = sphi 0, %s34
      %s23 = sphi 0, %s30
      %s24 = sphi 0, %s22
      %s25 = sphi 0, %s23
      %s26 = sphi 0, %s24
      %s27 = sphi 0, %s25
      %s35 = sphi 0, %s35
      %s37 = sphi 0, %s35
      %s38 = sphi 0, %s37
      %s52 = sphi 0, %s38
      %s60 = sphi 0, %s62
      %s63 = sphi 0, %s60
      %s64 = sphi 0, %s63
      %s80 = sphi 0, %s64
      %s88 = sphi 0, %s90
      %s91 = sphi 0, %s88
      %s92 = sphi 0, %s91
      %s108 = sphi 0, %s92
      %s112 = sphi 0, %s112
      %s114 = sphi 0, %s112
      %s115 = sphi 0, %s114
      %s129 = sphi 0, %s115
    $region4: #{simple_model_forward.4} parent=1 // loop_header_branch
      %18 = sbr.rel (%p16) target = $region8
    $region5: #{simple_model_forward.4} parent=1 // loop_body
      %s20 = ssub.s32 %s15, 1
      %s21 = ssub.s32 %s15, 2
      %s28 = sadd.s32 1, %s23
      %p29 = scmp.ge.s32.totalorder %s28, 2
      %s30 = scalar_select %p29, 0, %s28
      %s31 = sadd.s32 1, %s22
      %s32 = scalar_select %p29, %s31, %s22
      %p33 = scmp.ge.s32.totalorder %s32, 1
      %s34 = scalar_select %p33, 0, %s32
      %s36 = sadd.s32 %s35, 1
      %p39 = scmp.eq.s32.totalorder %s15, 1
      %p40 = scmp.ne.s32.totalorder %s35, %s37
      %p41 = scmp.eq.s32.totalorder %s15, 0
      %p42 = por %p40, %p41
      %p43 = scmp.ne.s32.totalorder %s35, %s37
      %p44 = scmp.eq.s32.totalorder %s20, 1
      %p45 = por %p43, %p44
      %p46 = scmp.ne.s32.totalorder %s37, %s38
      %p47 = scmp.eq.s32.totalorder %s20, 0
      %p48 = por %p46, %p47
      %p49 = scmp.ne.s32.totalorder %s37, %s38
      %p50 = scmp.eq.s32.totalorder %s21, 1
      %p51 = por %p49, %p50
      %p53 = scmp.ne.s32.totalorder %s38, %s52
      %p54 = scmp.eq.s32.totalorder %s21, 0
      %p55 = por %p53, %p54
      %s56 = ssub.s32 %s22, %s34
      %s57 = ssub.s32 %s23, %s30
      %s58 = sor.u32 %s56, %s57
      %p59 = scmp.eq.s32.totalorder %s58, 0
      %s61 = sadd.s32 %s60, 1
      %s62 = scalar_select %p59, %s60, %s61
      %p65 = pneg %p59
      %p66 = scmp.eq.s32.totalorder %s15, 1
      %p67 = por %p65, %p66
      %p68 = scmp.ne.s32.totalorder %s60, %s63
      %p69 = scmp.eq.s32.totalorder %s15, 0
      %p70 = por %p68, %p69
      %p71 = scmp.ne.s32.totalorder %s60, %s63
      %p72 = scmp.eq.s32.totalorder %s20, 1
      %p73 = por %p71, %p72
      %p74 = scmp.ne.s32.totalorder %s63, %s64
      %p75 = scmp.eq.s32.totalorder %s20, 0
      %p76 = por %p74, %p75
      %p77 = scmp.ne.s32.totalorder %s63, %s64
      %p78 = scmp.eq.s32.totalorder %s21, 1
      %p79 = por %p77, %p78
      %p81 = scmp.ne.s32.totalorder %s64, %s80
      %p82 = scmp.eq.s32.totalorder %s21, 0
      %p83 = por %p81, %p82
      %s84 = ssub.s32 %s22, %s34
      %s85 = ssub.s32 %s23, %s30
      %s86 = sor.u32 %s84, %s85
      %p87 = scmp.eq.s32.totalorder %s86, 0
      %s89 = sadd.s32 %s88, 1
      %s90 = scalar_select %p87, %s88, %s89
      %p93 = pneg %p87
      %p94 = scmp.eq.s32.totalorder %s15, 1
      %p95 = por %p93, %p94
      %p96 = scmp.ne.s32.totalorder %s88, %s91
      %p97 = scmp.eq.s32.totalorder %s15, 0
      %p98 = por %p96, %p97
      %p99 = scmp.ne.s32.totalorder %s88, %s91
      %p100 = scmp.eq.s32.totalorder %s20, 1
      %p101 = por %p99, %p100
      %p102 = scmp.ne.s32.totalorder %s91, %s92
      %p103 = scmp.eq.s32.totalorder %s20, 0
      %p104 = por %p102, %p103
      %p105 = scmp.ne.s32.totalorder %s91, %s92
      %p106 = scmp.eq.s32.totalorder %s21, 1
      %p107 = por %p105, %p106
      %p109 = scmp.ne.s32.totalorder %s92, %s108
      %p110 = scmp.eq.s32.totalorder %s21, 0
      %p111 = por %p109, %p110
      %s113 = sadd.s32 %s112, 1
      %p116 = scmp.eq.s32.totalorder %s15, 1
      %p117 = scmp.ne.s32.totalorder %s112, %s114
      %p118 = scmp.eq.s32.totalorder %s15, 0
      %p119 = por %p117, %p118
      %p120 = scmp.ne.s32.totalorder %s112, %s114
      %p121 = scmp.eq.s32.totalorder %s20, 1
      %p122 = por %p120, %p121
      %p123 = scmp.ne.s32.totalorder %s114, %s115
      %p124 = scmp.eq.s32.totalorder %s20, 0
      %p125 = por %p123, %p124
      %p126 = scmp.ne.s32.totalorder %s114, %s115
      %p127 = scmp.eq.s32.totalorder %s21, 1
      %p128 = por %p126, %p127
      %p130 = scmp.ne.s32.totalorder %s115, %s129
      %p131 = scmp.eq.s32.totalorder %s21, 0
      %p132 = por %p130, %p131
      %p133 = scmp.le.s32.totalorder 1, %s15
      %p134 = scmp.lt.s32.totalorder %s15, 3
      %p135 = pnand %p133, %p134
      %p136 = pneg %p135
      // Predicated region
      $region9: #{simple_model_forward.4} parent=5 // pred_check
        _
      $region10: #{simple_model_forward.4} parent=5 // pred_check_branch
        %138 = sbr.rel (%p135) target = $region12
      $region11: #{simple_model_forward.4} parent=5 // pred_region
        %s139 = ssub.s32 %s15, 1
        // Predicated region
        $region13: #{simple_model_forward.4} parent=11 // pred_check
          %p140 = pneg %p48
        $region14: #{simple_model_forward.4} parent=11 // pred_check_branch
          %142 = sbr.rel (%p140) target = $region16
        $region15: #{simple_model_forward.4} parent=11 // pred_region
          _
        $region16: #{simple_model_forward.4} parent=11 // pred_fallthru
          _
      $region12: #{simple_model_forward.4} parent=5 // pred_fallthru
        _
      %p143 = scmp.lt.s32.totalorder %s15, 2
      // Predicated region
      $region17: #{simple_model_forward.4} parent=5 // pred_check
        %p144 = pneg %p143
      $region18: #{simple_model_forward.4} parent=5 // pred_check_branch
        %146 = sbr.rel (%p144) target = $region20
      $region19: #{simple_model_forward.4} parent=5 // pred_region
        // Predicated region
        $region21: #{simple_model_forward.4} parent=19 // pred_check
          %p147 = pneg %p70
        $region22: #{simple_model_forward.4} parent=19 // pred_check_branch
          %149 = sbr.rel (%p147) target = $region24
        $region23: #{simple_model_forward.4} parent=19 // pred_region
          %s150 = sand.u32 %s60, 1
          %s151 = scalar_lea.sflag [#allocation5], %s150
          %s152 = sand.u32 %s60, 1
          %s153 = smul.addr %s152, 4096
          %s154 = scalar_lea.vmem [#allocation4], %s153
          %s155 = smul.u32 4, %s23
          %s157 = ssub.s32 65536, 65536
          %158 = vsyncadd %s151, %s157
          %s159 = smul.addr %s22, 1024
          %s160 = sadd.s32 %s155, %s159
          %s161 = smul.addr %s160, 128
          %s162 = scalar_lea.hbm %s1, %s161
          %s163 = sshll.u32 %s154, 4
          %s164 = int_to_ptr.vmem [resolvable:$true] %s163
          %169 = dma.hbm_to_vmem [thread:$0]  %s162, 65536, %s164, %s151, 1024, 512, 32
        $region24: #{simple_model_forward.4} parent=19 // pred_fallthru
          _
        // Predicated region
        $region25: #{simple_model_forward.4} parent=19 // pred_check
          %p170 = pneg %p98
        $region26: #{simple_model_forward.4} parent=19 // pred_check_branch
          %172 = sbr.rel (%p170) target = $region28
        $region27: #{simple_model_forward.4} parent=19 // pred_region
          %s173 = sand.u32 %s88, 1
          %s174 = scalar_lea.sflag [#allocation7], %s173
          %s175 = sand.u32 %s88, 1
          %s176 = smul.addr %s175, 4
          %s177 = scalar_lea.vmem [#allocation6], %s176
          %s178 = smul.u32 4, %s23
          %s180 = ssub.s32 64, 64
          %181 = vsyncadd %s174, %s180
          %s182 = smul.addr %s22, 8
          %s183 = sadd.s32 %s178, %s182
          %s184 = smul.addr %s183, 16
          %s185 = scalar_lea.hbm %s2, %s184
          %s187 = sshll.u32 %s177, 4
          %s188 = int_to_ptr.vmem [resolvable:$true] %s187
          %190 = dma.hbm_to_vmem [thread:$0]  %s185, 64, %s188, %s174
        $region28: #{simple_model_forward.4} parent=19 // pred_fallthru
          _
      $region20: #{simple_model_forward.4} parent=5 // pred_fallthru
        _
      %p191 = scmp.le.s32.totalorder 1, %s15
      %p192 = scmp.lt.s32.totalorder %s15, 3
      %p193 = pnand %p191, %p192
      %p194 = pneg %p193
      // Predicated region
      $region29: #{simple_model_forward.4} parent=5 // pred_check
        _
      $region30: #{simple_model_forward.4} parent=5 // pred_check_branch
        %196 = sbr.rel (%p193) target = $region32
      $region31: #{simple_model_forward.4} parent=5 // pred_region
        %s197 = ssub.s32 %s15, 1
        %s198 = sand.u32 %s63, 1
        %s199 = scalar_lea.sflag [#allocation5], %s198
        %s200 = sand.u32 %s63, 1
        %s201 = smul.addr %s200, 4096
        %s202 = scalar_lea.vmem [#allocation4], %s201
        // Predicated region
        $region33: #{simple_model_forward.4} parent=31 // pred_check
          %p203 = pneg %p76
        $region34: #{simple_model_forward.4} parent=31 // pred_check_branch
          %205 = sbr.rel (%p203) target = $region36
        $region35: #{simple_model_forward.4} parent=31 // pred_region
          %206 = dma.done %s199, 65536
        $region36: #{simple_model_forward.4} parent=31 // pred_fallthru
          _
        %s207 = sand.u32 %s91, 1
        %s208 = scalar_lea.sflag [#allocation7], %s207
        %s209 = sand.u32 %s91, 1
        %s210 = smul.addr %s209, 4
        %s211 = scalar_lea.vmem [#allocation6], %s210
        // Predicated region
        $region37: #{simple_model_forward.4} parent=31 // pred_check
          %p212 = pneg %p104
        $region38: #{simple_model_forward.4} parent=31 // pred_check_branch
          %214 = sbr.rel (%p212) target = $region40
        $region39: #{simple_model_forward.4} parent=31 // pred_region
          %215 = dma.done %s208, 64
        $region40: #{simple_model_forward.4} parent=31 // pred_fallthru
          _
        %p216 = pneg %p48
        %p217 = pneg %p45
        %s218 = sand.u32 %s63, 1
        %s219 = scalar_lea.sflag [#allocation5], %s218
        %s220 = sand.u32 %s63, 1
        %s221 = smul.addr %s220, 4096
        %s222 = scalar_lea.vmem [#allocation4], %s221
        %p223 = pneg %p76
        %p224 = pneg %p73
        %s225 = sand.u32 %s91, 1
        %s226 = scalar_lea.sflag [#allocation7], %s225
        %s227 = sand.u32 %s91, 1
        %s228 = smul.addr %s227, 4
        %s229 = scalar_lea.vmem [#allocation6], %s228
        %p230 = pneg %p104
        %p231 = pneg %p101
        %p232 = pneg %p125
        %p233 = pneg %p122
        %s234 = smul.u32 4, %s25
        %s235 = smul.u32 4, %s25
        %s236 = smul.u32 %s25, 512
        %p237 = scmp.eq.s32.totalorder %s24, 0
        %p238 = scmp.eq.s32.totalorder %s25, 0
        %p239 = pnand %p237, %p238
        %p240 = pneg %p239
        // Predicated region
        $region41: #{simple_model_forward.4} parent=31 // pred_check
          _
        $region42: #{simple_model_forward.4} parent=31 // pred_check_branch
          %242 = sbr.rel (%p239) target = $region44
        $region43: #{simple_model_forward.4} parent=31 // pred_region
          %v243 = vld [vmem:[%s0] sm:$0xff]
          %v244 = vld [vmem:[%s0 + $0x8] sm:$0xff]
          %v245 = vld [vmem:[%s0 + $0x10] sm:$0xff]
          %v246 = vld [vmem:[%s0 + $0x18] sm:$0xff]
          %v247 = vld [vmem:[%s0 + $0x20] sm:$0xff]
          %v248 = vld [vmem:[%s0 + $0x28] sm:$0xff]
          %v249 = vld [vmem:[%s0 + $0x30] sm:$0xff]
          %v250 = vld [vmem:[%s0 + $0x38] sm:$0xff]
          %251 = vst [vmem:[#allocation2] sm:$0xff] %v243
          %252 = vst [vmem:[#allocation2 + $0x8] sm:$0xff] %v244
          %253 = vst [vmem:[#allocation2 + $0x10] sm:$0xff] %v245
          %254 = vst [vmem:[#allocation2 + $0x18] sm:$0xff] %v246
          %255 = vst [vmem:[#allocation2 + $0x20] sm:$0xff] %v247
          %256 = vst [vmem:[#allocation2 + $0x28] sm:$0xff] %v248
          %257 = vst [vmem:[#allocation2 + $0x30] sm:$0xff] %v249
          %258 = vst [vmem:[#allocation2 + $0x38] sm:$0xff] %v250
        $region44: #{simple_model_forward.4} parent=31 // pred_fallthru
          _
        %p259 = scmp.lt.s32.totalorder %s24, 0
        %s260 = ssub.s32 0, %s24
        %s261 = scalar_select %p259, %s260, %s24
        %s262 = sand.u32 %s261, 1
        %s263 = ssub.s32 0, %s262
        %s264 = scalar_select %p259, %s263, %s262
        %p265 = scmp.ne.s32.totalorder %s264, 0
        %p266 = scmp.lt.s32.totalorder %s264, 0
        %p267 = pnand %p266, %p265
        %p268 = pneg %p267
        %s269 = sadd.s32 %s264, 2
        %s270 = scalar_select %p268, %s269, %s264
        %p271 = scmp.eq.s32.totalorder %s270, 0
        // Predicated region
        $region45: #{simple_model_forward.4} parent=31 // pred_check
          %p272 = pneg %p271
        $region46: #{simple_model_forward.4} parent=31 // pred_check_branch
          %274 = sbr.rel (%p272) target = $region48
        $region47: #{simple_model_forward.4} parent=31 // pred_region
          %v275 = vld [vmem:[#allocation2] sm:$0xff]
          %v276 = vld [vmem:[#allocation2 + $0x8] sm:$0xff]
          %v277 = vld [vmem:[#allocation2 + $0x10] sm:$0xff]
          %v278 = vld [vmem:[#allocation2 + $0x18] sm:$0xff]
          %v279 = vld [vmem:[#allocation2 + $0x20] sm:$0xff]
          %v280 = vld [vmem:[#allocation2 + $0x28] sm:$0xff]
          %v281 = vld [vmem:[#allocation2 + $0x30] sm:$0xff]
          %v282 = vld [vmem:[#allocation2 + $0x38] sm:$0xff]
          %v283 = vld [vmem:[%s202] sm:$0xff]
          %v284 = vld [vmem:[%s202 + $0x8] sm:$0xff]
          %v285 = vld [vmem:[%s202 + $0x10] sm:$0xff]
          %v286 = vld [vmem:[%s202 + $0x18] sm:$0xff]
          %v287 = vld [vmem:[%s202 + $0x20] sm:$0xff]
          %v288 = vld [vmem:[%s202 + $0x28] sm:$0xff]
          %v289 = vld [vmem:[%s202 + $0x30] sm:$0xff]
          %v290 = vld [vmem:[%s202 + $0x38] sm:$0xff]
          %v291 = vld [vmem:[%s202 + $0x40] sm:$0xff]
          %v292 = vld [vmem:[%s202 + $0x48] sm:$0xff]
          %v293 = vld [vmem:[%s202 + $0x50] sm:$0xff]
          %v294 = vld [vmem:[%s202 + $0x58] sm:$0xff]
          %v295 = vld [vmem:[%s202 + $0x60] sm:$0xff]
          %v296 = vld [vmem:[%s202 + $0x68] sm:$0xff]
          %v297 = vld [vmem:[%s202 + $0x70] sm:$0xff]
          %v298 = vld [vmem:[%s202 + $0x78] sm:$0xff]
          %v299 = vld [vmem:[%s202 + $0x80] sm:$0xff]
          %v300 = vld [vmem:[%s202 + $0x88] sm:$0xff]
          %v301 = vld [vmem:[%s202 + $0x90] sm:$0xff]
          %v302 = vld [vmem:[%s202 + $0x98] sm:$0xff]
          %v303 = vld [vmem:[%s202 + $0xa0] sm:$0xff]
          %v304 = vld [vmem:[%s202 + $0xa8] sm:$0xff]
          %v305 = vld [vmem:[%s202 + $0xb0] sm:$0xff]
          %v306 = vld [vmem:[%s202 + $0xb8] sm:$0xff]
          %v307 = vld [vmem:[%s202 + $0xc0] sm:$0xff]
          %v308 = vld [vmem:[%s202 + $0xc8] sm:$0xff]
          %v309 = vld [vmem:[%s202 + $0xd0] sm:$0xff]
          %v310 = vld [vmem:[%s202 + $0xd8] sm:$0xff]
          %v311 = vld [vmem:[%s202 + $0xe0] sm:$0xff]
          %v312 = vld [vmem:[%s202 + $0xe8] sm:$0xff]
          %v313 = vld [vmem:[%s202 + $0xf0] sm:$0xff]
          %v314 = vld [vmem:[%s202 + $0xf8] sm:$0xff]
          %v315 = vld [vmem:[%s202 + $0x100] sm:$0xff]
          %v316 = vld [vmem:[%s202 + $0x108] sm:$0xff]
          %v317 = vld [vmem:[%s202 + $0x110] sm:$0xff]
          %v318 = vld [vmem:[%s202 + $0x118] sm:$0xff]
          %v319 = vld [vmem:[%s202 + $0x120] sm:$0xff]
          %v320 = vld [vmem:[%s202 + $0x128] sm:$0xff]
          %v321 = vld [vmem:[%s202 + $0x130] sm:$0xff]
          %v322 = vld [vmem:[%s202 + $0x138] sm:$0xff]
          %v323 = vld [vmem:[%s202 + $0x140] sm:$0xff]
          %v324 = vld [vmem:[%s202 + $0x148] sm:$0xff]
          %v325 = vld [vmem:[%s202 + $0x150] sm:$0xff]
          %v326 = vld [vmem:[%s202 + $0x158] sm:$0xff]
          %v327 = vld [vmem:[%s202 + $0x160] sm:$0xff]
          %v328 = vld [vmem:[%s202 + $0x168] sm:$0xff]
          %v329 = vld [vmem:[%s202 + $0x170] sm:$0xff]
          %v330 = vld [vmem:[%s202 + $0x178] sm:$0xff]
          %v331 = vld [vmem:[%s202 + $0x180] sm:$0xff]
          %v332 = vld [vmem:[%s202 + $0x188] sm:$0xff]
          %v333 = vld [vmem:[%s202 + $0x190] sm:$0xff]
          %v334 = vld [vmem:[%s202 + $0x198] sm:$0xff]
          %v335 = vld [vmem:[%s202 + $0x1a0] sm:$0xff]
          %v336 = vld [vmem:[%s202 + $0x1a8] sm:$0xff]
          %v337 = vld [vmem:[%s202 + $0x1b0] sm:$0xff]
          %v338 = vld [vmem:[%s202 + $0x1b8] sm:$0xff]
          %v339 = vld [vmem:[%s202 + $0x1c0] sm:$0xff]
          %v340 = vld [vmem:[%s202 + $0x1c8] sm:$0xff]
          %v341 = vld [vmem:[%s202 + $0x1d0] sm:$0xff]
          %v342 = vld [vmem:[%s202 + $0x1d8] sm:$0xff]
          %v343 = vld [vmem:[%s202 + $0x1e0] sm:$0xff]
          %v344 = vld [vmem:[%s202 + $0x1e8] sm:$0xff]
          %v345 = vld [vmem:[%s202 + $0x1f0] sm:$0xff]
          %v346 = vld [vmem:[%s202 + $0x1f8] sm:$0xff]
          %v347 = vld [vmem:[%s202 + $0x200] sm:$0xff]
          %v348 = vld [vmem:[%s202 + $0x208] sm:$0xff]
          %v349 = vld [vmem:[%s202 + $0x210] sm:$0xff]
          %v350 = vld [vmem:[%s202 + $0x218] sm:$0xff]
          %v351 = vld [vmem:[%s202 + $0x220] sm:$0xff]
          %v352 = vld [vmem:[%s202 + $0x228] sm:$0xff]
          %v353 = vld [vmem:[%s202 + $0x230] sm:$0xff]
          %v354 = vld [vmem:[%s202 + $0x238] sm:$0xff]
          %v355 = vld [vmem:[%s202 + $0x240] sm:$0xff]
          %v356 = vld [vmem:[%s202 + $0x248] sm:$0xff]
          %v357 = vld [vmem:[%s202 + $0x250] sm:$0xff]
          %v358 = vld [vmem:[%s202 + $0x258] sm:$0xff]
          %v359 = vld [vmem:[%s202 + $0x260] sm:$0xff]
          %v360 = vld [vmem:[%s202 + $0x268] sm:$0xff]
          %v361 = vld [vmem:[%s202 + $0x270] sm:$0xff]
          %v362 = vld [vmem:[%s202 + $0x278] sm:$0xff]
          %v363 = vld [vmem:[%s202 + $0x280] sm:$0xff]
          %v364 = vld [vmem:[%s202 + $0x288] sm:$0xff]
          %v365 = vld [vmem:[%s202 + $0x290] sm:$0xff]
          %v366 = vld [vmem:[%s202 + $0x298] sm:$0xff]
          %v367 = vld [vmem:[%s202 + $0x2a0] sm:$0xff]
          %v368 = vld [vmem:[%s202 + $0x2a8] sm:$0xff]
          %v369 = vld [vmem:[%s202 + $0x2b0] sm:$0xff]
          %v370 = vld [vmem:[%s202 + $0x2b8] sm:$0xff]
          %v371 = vld [vmem:[%s202 + $0x2c0] sm:$0xff]
          %v372 = vld [vmem:[%s202 + $0x2c8] sm:$0xff]
          %v373 = vld [vmem:[%s202 + $0x2d0] sm:$0xff]
          %v374 = vld [vmem:[%s202 + $0x2d8] sm:$0xff]
          %v375 = vld [vmem:[%s202 + $0x2e0] sm:$0xff]
          %v376 = vld [vmem:[%s202 + $0x2e8] sm:$0xff]
          %v377 = vld [vmem:[%s202 + $0x2f0] sm:$0xff]
          %v378 = vld [vmem:[%s202 + $0x2f8] sm:$0xff]
          %v379 = vld [vmem:[%s202 + $0x300] sm:$0xff]
          %v380 = vld [vmem:[%s202 + $0x308] sm:$0xff]
          %v381 = vld [vmem:[%s202 + $0x310] sm:$0xff]
          %v382 = vld [vmem:[%s202 + $0x318] sm:$0xff]
          %v383 = vld [vmem:[%s202 + $0x320] sm:$0xff]
          %v384 = vld [vmem:[%s202 + $0x328] sm:$0xff]
          %v385 = vld [vmem:[%s202 + $0x330] sm:$0xff]
          %v386 = vld [vmem:[%s202 + $0x338] sm:$0xff]
          %v387 = vld [vmem:[%s202 + $0x340] sm:$0xff]
          %v388 = vld [vmem:[%s202 + $0x348] sm:$0xff]
          %v389 = vld [vmem:[%s202 + $0x350] sm:$0xff]
          %v390 = vld [vmem:[%s202 + $0x358] sm:$0xff]
          %v391 = vld [vmem:[%s202 + $0x360] sm:$0xff]
          %v392 = vld [vmem:[%s202 + $0x368] sm:$0xff]
          %v393 = vld [vmem:[%s202 + $0x370] sm:$0xff]
          %v394 = vld [vmem:[%s202 + $0x378] sm:$0xff]
          %v395 = vld [vmem:[%s202 + $0x380] sm:$0xff]
          %v396 = vld [vmem:[%s202 + $0x388] sm:$0xff]
          %v397 = vld [vmem:[%s202 + $0x390] sm:$0xff]
          %v398 = vld [vmem:[%s202 + $0x398] sm:$0xff]
          %v399 = vld [vmem:[%s202 + $0x3a0] sm:$0xff]
          %v400 = vld [vmem:[%s202 + $0x3a8] sm:$0xff]
          %v401 = vld [vmem:[%s202 + $0x3b0] sm:$0xff]
          %v402 = vld [vmem:[%s202 + $0x3b8] sm:$0xff]
          %v403 = vld [vmem:[%s202 + $0x3c0] sm:$0xff]
          %v404 = vld [vmem:[%s202 + $0x3c8] sm:$0xff]
          %v405 = vld [vmem:[%s202 + $0x3d0] sm:$0xff]
          %v406 = vld [vmem:[%s202 + $0x3d8] sm:$0xff]
          %v407 = vld [vmem:[%s202 + $0x3e0] sm:$0xff]
          %v408 = vld [vmem:[%s202 + $0x3e8] sm:$0xff]
          %v409 = vld [vmem:[%s202 + $0x3f0] sm:$0xff]
          %v410 = vld [vmem:[%s202 + $0x3f8] sm:$0xff]
          %v411 = vld [vmem:[%s202 + $0x400] sm:$0xff]
          %v412 = vld [vmem:[%s202 + $0x408] sm:$0xff]
          %v413 = vld [vmem:[%s202 + $0x410] sm:$0xff]
          %v414 = vld [vmem:[%s202 + $0x418] sm:$0xff]
          %v415 = vld [vmem:[%s202 + $0x420] sm:$0xff]
          %v416 = vld [vmem:[%s202 + $0x428] sm:$0xff]
          %v417 = vld [vmem:[%s202 + $0x430] sm:$0xff]
          %v418 = vld [vmem:[%s202 + $0x438] sm:$0xff]
          %v419 = vld [vmem:[%s202 + $0x440] sm:$0xff]
          %v420 = vld [vmem:[%s202 + $0x448] sm:$0xff]
          %v421 = vld [vmem:[%s202 + $0x450] sm:$0xff]
          %v422 = vld [vmem:[%s202 + $0x458] sm:$0xff]
          %v423 = vld [vmem:[%s202 + $0x460] sm:$0xff]
          %v424 = vld [vmem:[%s202 + $0x468] sm:$0xff]
          %v425 = vld [vmem:[%s202 + $0x470] sm:$0xff]
          %v426 = vld [vmem:[%s202 + $0x478] sm:$0xff]
          %v427 = vld [vmem:[%s202 + $0x480] sm:$0xff]
          %v428 = vld [vmem:[%s202 + $0x488] sm:$0xff]
          %v429 = vld [vmem:[%s202 + $0x490] sm:$0xff]
          %v430 = vld [vmem:[%s202 + $0x498] sm:$0xff]
          %v431 = vld [vmem:[%s202 + $0x4a0] sm:$0xff]
          %v432 = vld [vmem:[%s202 + $0x4a8] sm:$0xff]
          %v433 = vld [vmem:[%s202 + $0x4b0] sm:$0xff]
          %v434 = vld [vmem:[%s202 + $0x4b8] sm:$0xff]
          %v435 = vld [vmem:[%s202 + $0x4c0] sm:$0xff]
          %v436 = vld [vmem:[%s202 + $0x4c8] sm:$0xff]
          %v437 = vld [vmem:[%s202 + $0x4d0] sm:$0xff]
          %v438 = vld [vmem:[%s202 + $0x4d8] sm:$0xff]
          %v439 = vld [vmem:[%s202 + $0x4e0] sm:$0xff]
          %v440 = vld [vmem:[%s202 + $0x4e8] sm:$0xff]
          %v441 = vld [vmem:[%s202 + $0x4f0] sm:$0xff]
          %v442 = vld [vmem:[%s202 + $0x4f8] sm:$0xff]
          %v443 = vld [vmem:[%s202 + $0x500] sm:$0xff]
          %v444 = vld [vmem:[%s202 + $0x508] sm:$0xff]
          %v445 = vld [vmem:[%s202 + $0x510] sm:$0xff]
          %v446 = vld [vmem:[%s202 + $0x518] sm:$0xff]
          %v447 = vld [vmem:[%s202 + $0x520] sm:$0xff]
          %v448 = vld [vmem:[%s202 + $0x528] sm:$0xff]
          %v449 = vld [vmem:[%s202 + $0x530] sm:$0xff]
          %v450 = vld [vmem:[%s202 + $0x538] sm:$0xff]
          %v451 = vld [vmem:[%s202 + $0x540] sm:$0xff]
          %v452 = vld [vmem:[%s202 + $0x548] sm:$0xff]
          %v453 = vld [vmem:[%s202 + $0x550] sm:$0xff]
          %v454 = vld [vmem:[%s202 + $0x558] sm:$0xff]
          %v455 = vld [vmem:[%s202 + $0x560] sm:$0xff]
          %v456 = vld [vmem:[%s202 + $0x568] sm:$0xff]
          %v457 = vld [vmem:[%s202 + $0x570] sm:$0xff]
          %v458 = vld [vmem:[%s202 + $0x578] sm:$0xff]
          %v459 = vld [vmem:[%s202 + $0x580] sm:$0xff]
          %v460 = vld [vmem:[%s202 + $0x588] sm:$0xff]
          %v461 = vld [vmem:[%s202 + $0x590] sm:$0xff]
          %v462 = vld [vmem:[%s202 + $0x598] sm:$0xff]
          %v463 = vld [vmem:[%s202 + $0x5a0] sm:$0xff]
          %v464 = vld [vmem:[%s202 + $0x5a8] sm:$0xff]
          %v465 = vld [vmem:[%s202 + $0x5b0] sm:$0xff]
          %v466 = vld [vmem:[%s202 + $0x5b8] sm:$0xff]
          %v467 = vld [vmem:[%s202 + $0x5c0] sm:$0xff]
          %v468 = vld [vmem:[%s202 + $0x5c8] sm:$0xff]
          %v469 = vld [vmem:[%s202 + $0x5d0] sm:$0xff]
          %v470 = vld [vmem:[%s202 + $0x5d8] sm:$0xff]
          %v471 = vld [vmem:[%s202 + $0x5e0] sm:$0xff]
          %v472 = vld [vmem:[%s202 + $0x5e8] sm:$0xff]
          %v473 = vld [vmem:[%s202 + $0x5f0] sm:$0xff]
          %v474 = vld [vmem:[%s202 + $0x5f8] sm:$0xff]
          %v475 = vld [vmem:[%s202 + $0x600] sm:$0xff]
          %v476 = vld [vmem:[%s202 + $0x608] sm:$0xff]
          %v477 = vld [vmem:[%s202 + $0x610] sm:$0xff]
          %v478 = vld [vmem:[%s202 + $0x618] sm:$0xff]
          %v479 = vld [vmem:[%s202 + $0x620] sm:$0xff]
          %v480 = vld [vmem:[%s202 + $0x628] sm:$0xff]
          %v481 = vld [vmem:[%s202 + $0x630] sm:$0xff]
          %v482 = vld [vmem:[%s202 + $0x638] sm:$0xff]
          %v483 = vld [vmem:[%s202 + $0x640] sm:$0xff]
          %v484 = vld [vmem:[%s202 + $0x648] sm:$0xff]
          %v485 = vld [vmem:[%s202 + $0x650] sm:$0xff]
          %v486 = vld [vmem:[%s202 + $0x658] sm:$0xff]
          %v487 = vld [vmem:[%s202 + $0x660] sm:$0xff]
          %v488 = vld [vmem:[%s202 + $0x668] sm:$0xff]
          %v489 = vld [vmem:[%s202 + $0x670] sm:$0xff]
          %v490 = vld [vmem:[%s202 + $0x678] sm:$0xff]
          %v491 = vld [vmem:[%s202 + $0x680] sm:$0xff]
          %v492 = vld [vmem:[%s202 + $0x688] sm:$0xff]
          %v493 = vld [vmem:[%s202 + $0x690] sm:$0xff]
          %v494 = vld [vmem:[%s202 + $0x698] sm:$0xff]
          %v495 = vld [vmem:[%s202 + $0x6a0] sm:$0xff]
          %v496 = vld [vmem:[%s202 + $0x6a8] sm:$0xff]
          %v497 = vld [vmem:[%s202 + $0x6b0] sm:$0xff]
          %v498 = vld [vmem:[%s202 + $0x6b8] sm:$0xff]
          %v499 = vld [vmem:[%s202 + $0x6c0] sm:$0xff]
          %v500 = vld [vmem:[%s202 + $0x6c8] sm:$0xff]
          %v501 = vld [vmem:[%s202 + $0x6d0] sm:$0xff]
          %v502 = vld [vmem:[%s202 + $0x6d8] sm:$0xff]
          %v503 = vld [vmem:[%s202 + $0x6e0] sm:$0xff]
          %v504 = vld [vmem:[%s202 + $0x6e8] sm:$0xff]
          %v505 = vld [vmem:[%s202 + $0x6f0] sm:$0xff]
          %v506 = vld [vmem:[%s202 + $0x6f8] sm:$0xff]
          %v507 = vld [vmem:[%s202 + $0x700] sm:$0xff]
          %v508 = vld [vmem:[%s202 + $0x708] sm:$0xff]
          %v509 = vld [vmem:[%s202 + $0x710] sm:$0xff]
          %v510 = vld [vmem:[%s202 + $0x718] sm:$0xff]
          %v511 = vld [vmem:[%s202 + $0x720] sm:$0xff]
          %v512 = vld [vmem:[%s202 + $0x728] sm:$0xff]
          %v513 = vld [vmem:[%s202 + $0x730] sm:$0xff]
          %v514 = vld [vmem:[%s202 + $0x738] sm:$0xff]
          %v515 = vld [vmem:[%s202 + $0x740] sm:$0xff]
          %v516 = vld [vmem:[%s202 + $0x748] sm:$0xff]
          %v517 = vld [vmem:[%s202 + $0x750] sm:$0xff]
          %v518 = vld [vmem:[%s202 + $0x758] sm:$0xff]
          %v519 = vld [vmem:[%s202 + $0x760] sm:$0xff]
          %v520 = vld [vmem:[%s202 + $0x768] sm:$0xff]
          %v521 = vld [vmem:[%s202 + $0x770] sm:$0xff]
          %v522 = vld [vmem:[%s202 + $0x778] sm:$0xff]
          %v523 = vld [vmem:[%s202 + $0x780] sm:$0xff]
          %v524 = vld [vmem:[%s202 + $0x788] sm:$0xff]
          %v525 = vld [vmem:[%s202 + $0x790] sm:$0xff]
          %v526 = vld [vmem:[%s202 + $0x798] sm:$0xff]
          %v527 = vld [vmem:[%s202 + $0x7a0] sm:$0xff]
          %v528 = vld [vmem:[%s202 + $0x7a8] sm:$0xff]
          %v529 = vld [vmem:[%s202 + $0x7b0] sm:$0xff]
          %v530 = vld [vmem:[%s202 + $0x7b8] sm:$0xff]
          %v531 = vld [vmem:[%s202 + $0x7c0] sm:$0xff]
          %v532 = vld [vmem:[%s202 + $0x7c8] sm:$0xff]
          %v533 = vld [vmem:[%s202 + $0x7d0] sm:$0xff]
          %v534 = vld [vmem:[%s202 + $0x7d8] sm:$0xff]
          %v535 = vld [vmem:[%s202 + $0x7e0] sm:$0xff]
          %v536 = vld [vmem:[%s202 + $0x7e8] sm:$0xff]
          %v537 = vld [vmem:[%s202 + $0x7f0] sm:$0xff]
          %v538 = vld [vmem:[%s202 + $0x7f8] sm:$0xff]
          %v539 = vld [vmem:[%s202 + $0x800] sm:$0xff]
          %v540 = vld [vmem:[%s202 + $0x808] sm:$0xff]
          %v541 = vld [vmem:[%s202 + $0x810] sm:$0xff]
          %v542 = vld [vmem:[%s202 + $0x818] sm:$0xff]
          %v543 = vld [vmem:[%s202 + $0x820] sm:$0xff]
          %v544 = vld [vmem:[%s202 + $0x828] sm:$0xff]
          %v545 = vld [vmem:[%s202 + $0x830] sm:$0xff]
          %v546 = vld [vmem:[%s202 + $0x838] sm:$0xff]
          %v547 = vld [vmem:[%s202 + $0x840] sm:$0xff]
          %v548 = vld [vmem:[%s202 + $0x848] sm:$0xff]
          %v549 = vld [vmem:[%s202 + $0x850] sm:$0xff]
          %v550 = vld [vmem:[%s202 + $0x858] sm:$0xff]
          %v551 = vld [vmem:[%s202 + $0x860] sm:$0xff]
          %v552 = vld [vmem:[%s202 + $0x868] sm:$0xff]
          %v553 = vld [vmem:[%s202 + $0x870] sm:$0xff]
          %v554 = vld [vmem:[%s202 + $0x878] sm:$0xff]
          %v555 = vld [vmem:[%s202 + $0x880] sm:$0xff]
          %v556 = vld [vmem:[%s202 + $0x888] sm:$0xff]
          %v557 = vld [vmem:[%s202 + $0x890] sm:$0xff]
          %v558 = vld [vmem:[%s202 + $0x898] sm:$0xff]
          %v559 = vld [vmem:[%s202 + $0x8a0] sm:$0xff]
          %v560 = vld [vmem:[%s202 + $0x8a8] sm:$0xff]
          %v561 = vld [vmem:[%s202 + $0x8b0] sm:$0xff]
          %v562 = vld [vmem:[%s202 + $0x8b8] sm:$0xff]
          %v563 = vld [vmem:[%s202 + $0x8c0] sm:$0xff]
          %v564 = vld [vmem:[%s202 + $0x8c8] sm:$0xff]
          %v565 = vld [vmem:[%s202 + $0x8d0] sm:$0xff]
          %v566 = vld [vmem:[%s202 + $0x8d8] sm:$0xff]
          %v567 = vld [vmem:[%s202 + $0x8e0] sm:$0xff]
          %v568 = vld [vmem:[%s202 + $0x8e8] sm:$0xff]
          %v569 = vld [vmem:[%s202 + $0x8f0] sm:$0xff]
          %v570 = vld [vmem:[%s202 + $0x8f8] sm:$0xff]
          %v571 = vld [vmem:[%s202 + $0x900] sm:$0xff]
          %v572 = vld [vmem:[%s202 + $0x908] sm:$0xff]
          %v573 = vld [vmem:[%s202 + $0x910] sm:$0xff]
          %v574 = vld [vmem:[%s202 + $0x918] sm:$0xff]
          %v575 = vld [vmem:[%s202 + $0x920] sm:$0xff]
          %v576 = vld [vmem:[%s202 + $0x928] sm:$0xff]
          %v577 = vld [vmem:[%s202 + $0x930] sm:$0xff]
          %v578 = vld [vmem:[%s202 + $0x938] sm:$0xff]
          %v579 = vld [vmem:[%s202 + $0x940] sm:$0xff]
          %v580 = vld [vmem:[%s202 + $0x948] sm:$0xff]
          %v581 = vld [vmem:[%s202 + $0x950] sm:$0xff]
          %v582 = vld [vmem:[%s202 + $0x958] sm:$0xff]
          %v583 = vld [vmem:[%s202 + $0x960] sm:$0xff]
          %v584 = vld [vmem:[%s202 + $0x968] sm:$0xff]
          %v585 = vld [vmem:[%s202 + $0x970] sm:$0xff]
          %v586 = vld [vmem:[%s202 + $0x978] sm:$0xff]
          %v587 = vld [vmem:[%s202 + $0x980] sm:$0xff]
          %v588 = vld [vmem:[%s202 + $0x988] sm:$0xff]
          %v589 = vld [vmem:[%s202 + $0x990] sm:$0xff]
          %v590 = vld [vmem:[%s202 + $0x998] sm:$0xff]
          %v591 = vld [vmem:[%s202 + $0x9a0] sm:$0xff]
          %v592 = vld [vmem:[%s202 + $0x9a8] sm:$0xff]
          %v593 = vld [vmem:[%s202 + $0x9b0] sm:$0xff]
          %v594 = vld [vmem:[%s202 + $0x9b8] sm:$0xff]
          %v595 = vld [vmem:[%s202 + $0x9c0] sm:$0xff]
          %v596 = vld [vmem:[%s202 + $0x9c8] sm:$0xff]
          %v597 = vld [vmem:[%s202 + $0x9d0] sm:$0xff]
          %v598 = vld [vmem:[%s202 + $0x9d8] sm:$0xff]
          %v599 = vld [vmem:[%s202 + $0x9e0] sm:$0xff]
          %v600 = vld [vmem:[%s202 + $0x9e8] sm:$0xff]
          %v601 = vld [vmem:[%s202 + $0x9f0] sm:$0xff]
          %v602 = vld [vmem:[%s202 + $0x9f8] sm:$0xff]
          %v603 = vld [vmem:[%s202 + $0xa00] sm:$0xff]
          %v604 = vld [vmem:[%s202 + $0xa08] sm:$0xff]
          %v605 = vld [vmem:[%s202 + $0xa10] sm:$0xff]
          %v606 = vld [vmem:[%s202 + $0xa18] sm:$0xff]
          %v607 = vld [vmem:[%s202 + $0xa20] sm:$0xff]
          %v608 = vld [vmem:[%s202 + $0xa28] sm:$0xff]
          %v609 = vld [vmem:[%s202 + $0xa30] sm:$0xff]
          %v610 = vld [vmem:[%s202 + $0xa38] sm:$0xff]
          %v611 = vld [vmem:[%s202 + $0xa40] sm:$0xff]
          %v612 = vld [vmem:[%s202 + $0xa48] sm:$0xff]
          %v613 = vld [vmem:[%s202 + $0xa50] sm:$0xff]
          %v614 = vld [vmem:[%s202 + $0xa58] sm:$0xff]
          %v615 = vld [vmem:[%s202 + $0xa60] sm:$0xff]
          %v616 = vld [vmem:[%s202 + $0xa68] sm:$0xff]
          %v617 = vld [vmem:[%s202 + $0xa70] sm:$0xff]
          %v618 = vld [vmem:[%s202 + $0xa78] sm:$0xff]
          %v619 = vld [vmem:[%s202 + $0xa80] sm:$0xff]
          %v620 = vld [vmem:[%s202 + $0xa88] sm:$0xff]
          %v621 = vld [vmem:[%s202 + $0xa90] sm:$0xff]
          %v622 = vld [vmem:[%s202 + $0xa98] sm:$0xff]
          %v623 = vld [vmem:[%s202 + $0xaa0] sm:$0xff]
          %v624 = vld [vmem:[%s202 + $0xaa8] sm:$0xff]
          %v625 = vld [vmem:[%s202 + $0xab0] sm:$0xff]
          %v626 = vld [vmem:[%s202 + $0xab8] sm:$0xff]
          %v627 = vld [vmem:[%s202 + $0xac0] sm:$0xff]
          %v628 = vld [vmem:[%s202 + $0xac8] sm:$0xff]
          %v629 = vld [vmem:[%s202 + $0xad0] sm:$0xff]
          %v630 = vld [vmem:[%s202 + $0xad8] sm:$0xff]
          %v631 = vld [vmem:[%s202 + $0xae0] sm:$0xff]
          %v632 = vld [vmem:[%s202 + $0xae8] sm:$0xff]
          %v633 = vld [vmem:[%s202 + $0xaf0] sm:$0xff]
          %v634 = vld [vmem:[%s202 + $0xaf8] sm:$0xff]
          %v635 = vld [vmem:[%s202 + $0xb00] sm:$0xff]
          %v636 = vld [vmem:[%s202 + $0xb08] sm:$0xff]
          %v637 = vld [vmem:[%s202 + $0xb10] sm:$0xff]
          %v638 = vld [vmem:[%s202 + $0xb18] sm:$0xff]
          %v639 = vld [vmem:[%s202 + $0xb20] sm:$0xff]
          %v640 = vld [vmem:[%s202 + $0xb28] sm:$0xff]
          %v641 = vld [vmem:[%s202 + $0xb30] sm:$0xff]
          %v642 = vld [vmem:[%s202 + $0xb38] sm:$0xff]
          %v643 = vld [vmem:[%s202 + $0xb40] sm:$0xff]
          %v644 = vld [vmem:[%s202 + $0xb48] sm:$0xff]
          %v645 = vld [vmem:[%s202 + $0xb50] sm:$0xff]
          %v646 = vld [vmem:[%s202 + $0xb58] sm:$0xff]
          %v647 = vld [vmem:[%s202 + $0xb60] sm:$0xff]
          %v648 = vld [vmem:[%s202 + $0xb68] sm:$0xff]
          %v649 = vld [vmem:[%s202 + $0xb70] sm:$0xff]
          %v650 = vld [vmem:[%s202 + $0xb78] sm:$0xff]
          %v651 = vld [vmem:[%s202 + $0xb80] sm:$0xff]
          %v652 = vld [vmem:[%s202 + $0xb88] sm:$0xff]
          %v653 = vld [vmem:[%s202 + $0xb90] sm:$0xff]
          %v654 = vld [vmem:[%s202 + $0xb98] sm:$0xff]
          %v655 = vld [vmem:[%s202 + $0xba0] sm:$0xff]
          %v656 = vld [vmem:[%s202 + $0xba8] sm:$0xff]
          %v657 = vld [vmem:[%s202 + $0xbb0] sm:$0xff]
          %v658 = vld [vmem:[%s202 + $0xbb8] sm:$0xff]
          %v659 = vld [vmem:[%s202 + $0xbc0] sm:$0xff]
          %v660 = vld [vmem:[%s202 + $0xbc8] sm:$0xff]
          %v661 = vld [vmem:[%s202 + $0xbd0] sm:$0xff]
          %v662 = vld [vmem:[%s202 + $0xbd8] sm:$0xff]
          %v663 = vld [vmem:[%s202 + $0xbe0] sm:$0xff]
          %v664 = vld [vmem:[%s202 + $0xbe8] sm:$0xff]
          %v665 = vld [vmem:[%s202 + $0xbf0] sm:$0xff]
          %v666 = vld [vmem:[%s202 + $0xbf8] sm:$0xff]
          %v667 = vld [vmem:[%s202 + $0xc00] sm:$0xff]
          %v668 = vld [vmem:[%s202 + $0xc08] sm:$0xff]
          %v669 = vld [vmem:[%s202 + $0xc10] sm:$0xff]
          %v670 = vld [vmem:[%s202 + $0xc18] sm:$0xff]
          %v671 = vld [vmem:[%s202 + $0xc20] sm:$0xff]
          %v672 = vld [vmem:[%s202 + $0xc28] sm:$0xff]
          %v673 = vld [vmem:[%s202 + $0xc30] sm:$0xff]
          %v674 = vld [vmem:[%s202 + $0xc38] sm:$0xff]
          %v675 = vld [vmem:[%s202 + $0xc40] sm:$0xff]
          %v676 = vld [vmem:[%s202 + $0xc48] sm:$0xff]
          %v677 = vld [vmem:[%s202 + $0xc50] sm:$0xff]
          %v678 = vld [vmem:[%s202 + $0xc58] sm:$0xff]
          %v679 = vld [vmem:[%s202 + $0xc60] sm:$0xff]
          %v680 = vld [vmem:[%s202 + $0xc68] sm:$0xff]
          %v681 = vld [vmem:[%s202 + $0xc70] sm:$0xff]
          %v682 = vld [vmem:[%s202 + $0xc78] sm:$0xff]
          %v683 = vld [vmem:[%s202 + $0xc80] sm:$0xff]
          %v684 = vld [vmem:[%s202 + $0xc88] sm:$0xff]
          %v685 = vld [vmem:[%s202 + $0xc90] sm:$0xff]
          %v686 = vld [vmem:[%s202 + $0xc98] sm:$0xff]
          %v687 = vld [vmem:[%s202 + $0xca0] sm:$0xff]
          %v688 = vld [vmem:[%s202 + $0xca8] sm:$0xff]
          %v689 = vld [vmem:[%s202 + $0xcb0] sm:$0xff]
          %v690 = vld [vmem:[%s202 + $0xcb8] sm:$0xff]
          %v691 = vld [vmem:[%s202 + $0xcc0] sm:$0xff]
          %v692 = vld [vmem:[%s202 + $0xcc8] sm:$0xff]
          %v693 = vld [vmem:[%s202 + $0xcd0] sm:$0xff]
          %v694 = vld [vmem:[%s202 + $0xcd8] sm:$0xff]
          %v695 = vld [vmem:[%s202 + $0xce0] sm:$0xff]
          %v696 = vld [vmem:[%s202 + $0xce8] sm:$0xff]
          %v697 = vld [vmem:[%s202 + $0xcf0] sm:$0xff]
          %v698 = vld [vmem:[%s202 + $0xcf8] sm:$0xff]
          %v699 = vld [vmem:[%s202 + $0xd00] sm:$0xff]
          %v700 = vld [vmem:[%s202 + $0xd08] sm:$0xff]
          %v701 = vld [vmem:[%s202 + $0xd10] sm:$0xff]
          %v702 = vld [vmem:[%s202 + $0xd18] sm:$0xff]
          %v703 = vld [vmem:[%s202 + $0xd20] sm:$0xff]
          %v704 = vld [vmem:[%s202 + $0xd28] sm:$0xff]
          %v705 = vld [vmem:[%s202 + $0xd30] sm:$0xff]
          %v706 = vld [vmem:[%s202 + $0xd38] sm:$0xff]
          %v707 = vld [vmem:[%s202 + $0xd40] sm:$0xff]
          %v708 = vld [vmem:[%s202 + $0xd48] sm:$0xff]
          %v709 = vld [vmem:[%s202 + $0xd50] sm:$0xff]
          %v710 = vld [vmem:[%s202 + $0xd58] sm:$0xff]
          %v711 = vld [vmem:[%s202 + $0xd60] sm:$0xff]
          %v712 = vld [vmem:[%s202 + $0xd68] sm:$0xff]
          %v713 = vld [vmem:[%s202 + $0xd70] sm:$0xff]
          %v714 = vld [vmem:[%s202 + $0xd78] sm:$0xff]
          %v715 = vld [vmem:[%s202 + $0xd80] sm:$0xff]
          %v716 = vld [vmem:[%s202 + $0xd88] sm:$0xff]
          %v717 = vld [vmem:[%s202 + $0xd90] sm:$0xff]
          %v718 = vld [vmem:[%s202 + $0xd98] sm:$0xff]
          %v719 = vld [vmem:[%s202 + $0xda0] sm:$0xff]
          %v720 = vld [vmem:[%s202 + $0xda8] sm:$0xff]
          %v721 = vld [vmem:[%s202 + $0xdb0] sm:$0xff]
          %v722 = vld [vmem:[%s202 + $0xdb8] sm:$0xff]
          %v723 = vld [vmem:[%s202 + $0xdc0] sm:$0xff]
          %v724 = vld [vmem:[%s202 + $0xdc8] sm:$0xff]
          %v725 = vld [vmem:[%s202 + $0xdd0] sm:$0xff]
          %v726 = vld [vmem:[%s202 + $0xdd8] sm:$0xff]
          %v727 = vld [vmem:[%s202 + $0xde0] sm:$0xff]
          %v728 = vld [vmem:[%s202 + $0xde8] sm:$0xff]
          %v729 = vld [vmem:[%s202 + $0xdf0] sm:$0xff]
          %v730 = vld [vmem:[%s202 + $0xdf8] sm:$0xff]
          %v731 = vld [vmem:[%s202 + $0xe00] sm:$0xff]
          %v732 = vld [vmem:[%s202 + $0xe08] sm:$0xff]
          %v733 = vld [vmem:[%s202 + $0xe10] sm:$0xff]
          %v734 = vld [vmem:[%s202 + $0xe18] sm:$0xff]
          %v735 = vld [vmem:[%s202 + $0xe20] sm:$0xff]
          %v736 = vld [vmem:[%s202 + $0xe28] sm:$0xff]
          %v737 = vld [vmem:[%s202 + $0xe30] sm:$0xff]
          %v738 = vld [vmem:[%s202 + $0xe38] sm:$0xff]
          %v739 = vld [vmem:[%s202 + $0xe40] sm:$0xff]
          %v740 = vld [vmem:[%s202 + $0xe48] sm:$0xff]
          %v741 = vld [vmem:[%s202 + $0xe50] sm:$0xff]
          %v742 = vld [vmem:[%s202 + $0xe58] sm:$0xff]
          %v743 = vld [vmem:[%s202 + $0xe60] sm:$0xff]
          %v744 = vld [vmem:[%s202 + $0xe68] sm:$0xff]
          %v745 = vld [vmem:[%s202 + $0xe70] sm:$0xff]
          %v746 = vld [vmem:[%s202 + $0xe78] sm:$0xff]
          %v747 = vld [vmem:[%s202 + $0xe80] sm:$0xff]
          %v748 = vld [vmem:[%s202 + $0xe88] sm:$0xff]
          %v749 = vld [vmem:[%s202 + $0xe90] sm:$0xff]
          %v750 = vld [vmem:[%s202 + $0xe98] sm:$0xff]
          %v751 = vld [vmem:[%s202 + $0xea0] sm:$0xff]
          %v752 = vld [vmem:[%s202 + $0xea8] sm:$0xff]
          %v753 = vld [vmem:[%s202 + $0xeb0] sm:$0xff]
          %v754 = vld [vmem:[%s202 + $0xeb8] sm:$0xff]
          %v755 = vld [vmem:[%s202 + $0xec0] sm:$0xff]
          %v756 = vld [vmem:[%s202 + $0xec8] sm:$0xff]
          %v757 = vld [vmem:[%s202 + $0xed0] sm:$0xff]
          %v758 = vld [vmem:[%s202 + $0xed8] sm:$0xff]
          %v759 = vld [vmem:[%s202 + $0xee0] sm:$0xff]
          %v760 = vld [vmem:[%s202 + $0xee8] sm:$0xff]
          %v761 = vld [vmem:[%s202 + $0xef0] sm:$0xff]
          %v762 = vld [vmem:[%s202 + $0xef8] sm:$0xff]
          %v763 = vld [vmem:[%s202 + $0xf00] sm:$0xff]
          %v764 = vld [vmem:[%s202 + $0xf08] sm:$0xff]
          %v765 = vld [vmem:[%s202 + $0xf10] sm:$0xff]
          %v766 = vld [vmem:[%s202 + $0xf18] sm:$0xff]
          %v767 = vld [vmem:[%s202 + $0xf20] sm:$0xff]
          %v768 = vld [vmem:[%s202 + $0xf28] sm:$0xff]
          %v769 = vld [vmem:[%s202 + $0xf30] sm:$0xff]
          %v770 = vld [vmem:[%s202 + $0xf38] sm:$0xff]
          %v771 = vld [vmem:[%s202 + $0xf40] sm:$0xff]
          %v772 = vld [vmem:[%s202 + $0xf48] sm:$0xff]
          %v773 = vld [vmem:[%s202 + $0xf50] sm:$0xff]
          %v774 = vld [vmem:[%s202 + $0xf58] sm:$0xff]
          %v775 = vld [vmem:[%s202 + $0xf60] sm:$0xff]
          %v776 = vld [vmem:[%s202 + $0xf68] sm:$0xff]
          %v777 = vld [vmem:[%s202 + $0xf70] sm:$0xff]
          %v778 = vld [vmem:[%s202 + $0xf78] sm:$0xff]
          %v779 = vld [vmem:[%s202 + $0xf80] sm:$0xff]
          %v780 = vld [vmem:[%s202 + $0xf88] sm:$0xff]
          %v781 = vld [vmem:[%s202 + $0xf90] sm:$0xff]
          %v782 = vld [vmem:[%s202 + $0xf98] sm:$0xff]
          %v783 = vld [vmem:[%s202 + $0xfa0] sm:$0xff]
          %v784 = vld [vmem:[%s202 + $0xfa8] sm:$0xff]
          %v785 = vld [vmem:[%s202 + $0xfb0] sm:$0xff]
          %v786 = vld [vmem:[%s202 + $0xfb8] sm:$0xff]
          %v787 = vld [vmem:[%s202 + $0xfc0] sm:$0xff]
          %v788 = vld [vmem:[%s202 + $0xfc8] sm:$0xff]
          %v789 = vld [vmem:[%s202 + $0xfd0] sm:$0xff]
          %v790 = vld [vmem:[%s202 + $0xfd8] sm:$0xff]
          %v791 = vld [vmem:[%s202 + $0xfe0] sm:$0xff]
          %v792 = vld [vmem:[%s202 + $0xfe8] sm:$0xff]
          %v793 = vld [vmem:[%s202 + $0xff0] sm:$0xff]
          %v794 = vld [vmem:[%s202 + $0xff8] sm:$0xff]
          %v795 = vld [vmem:[%s211] sm:$0xf]
          %v797 = vlaneseq
          %v798 = vshrl.u32 %v797, 7
          %v799 = vsub.s32 0, %v798
          %v800 = vrot.slane %v795, %v799
          %v801 = vlaneseq
          %v802 = vshrl.u32 %v801, 7
          %v803 = vsub.s32 1, %v802
          %v804 = vrot.slane %v795, %v803
          %v805 = vlaneseq
          %v806 = vshrl.u32 %v805, 7
          %v807 = vsub.s32 2, %v806
          %v808 = vrot.slane %v795, %v807
          %v809 = vlaneseq
          %v810 = vshrl.u32 %v809, 7
          %v811 = vsub.s32 3, %v810
          %v812 = vrot.slane %v795, %v811
          %817 = vmatprep.subr.mxu0 %v284
          %818 = vmatpush1.msra.mxu0 %v283
          %819 = vmatprep.subr.mxu0 %v288
          %820 = vmatpush1.msra.mxu0 %v287
          %821 = vmatprep.subr.mxu0 %v292
          %822 = vmatpush1.msra.mxu0 %v291
          %823 = vmatprep.subr.mxu0 %v296
          %824 = vmatpush1.msra.mxu0 %v295
          %825 = vmatprep.subr.mxu0 %v300
          %826 = vmatpush1.msra.mxu0 %v299
          %827 = vmatprep.subr.mxu0 %v304
          %828 = vmatpush1.msra.mxu0 %v303
          %829 = vmatprep.subr.mxu0 %v308
          %830 = vmatpush1.msra.mxu0 %v307
          %831 = vmatprep.subr.mxu0 %v312
          %832 = vmatpush1.msra.mxu0 %v311
          %833 = vmatprep.subr.mxu0 %v316
          %834 = vmatpush1.msra.mxu0 %v315
          %835 = vmatprep.subr.mxu0 %v320
          %836 = vmatpush1.msra.mxu0 %v319
          %837 = vmatprep.subr.mxu0 %v324
          %838 = vmatpush1.msra.mxu0 %v323
          %839 = vmatprep.subr.mxu0 %v328
          %840 = vmatpush1.msra.mxu0 %v327
          %841 = vmatprep.subr.mxu0 %v332
          %842 = vmatpush1.msra.mxu0 %v331
          %843 = vmatprep.subr.mxu0 %v336
          %844 = vmatpush1.msra.mxu0 %v335
          %845 = vmatprep.subr.mxu0 %v340
          %846 = vmatpush1.msra.mxu0 %v339
          %847 = vmatprep.subr.mxu0 %v344
          %848 = vmatpush1.msra.mxu0 %v343
          %849 = vmatprep.subr.mxu0 %v348
          %850 = vmatpush1.msra.mxu0 %v347
          %851 = vmatprep.subr.mxu0 %v352
          %852 = vmatpush1.msra.mxu0 %v351
          %853 = vmatprep.subr.mxu0 %v356
          %854 = vmatpush1.msra.mxu0 %v355
          %855 = vmatprep.subr.mxu0 %v360
          %856 = vmatpush1.msra.mxu0 %v359
          %857 = vmatprep.subr.mxu0 %v364
          %858 = vmatpush1.msra.mxu0 %v363
          %859 = vmatprep.subr.mxu0 %v368
          %860 = vmatpush1.msra.mxu0 %v367
          %861 = vmatprep.subr.mxu0 %v372
          %862 = vmatpush1.msra.mxu0 %v371
          %863 = vmatprep.subr.mxu0 %v376
          %864 = vmatpush1.msra.mxu0 %v375
          %865 = vmatprep.subr.mxu0 %v380
          %866 = vmatpush1.msra.mxu0 %v379
          %867 = vmatprep.subr.mxu0 %v384
          %868 = vmatpush1.msra.mxu0 %v383
          %869 = vmatprep.subr.mxu0 %v388
          %870 = vmatpush1.msra.mxu0 %v387
          %871 = vmatprep.subr.mxu0 %v392
          %872 = vmatpush1.msra.mxu0 %v391
          %873 = vmatprep.subr.mxu0 %v396
          %874 = vmatpush1.msra.mxu0 %v395
          %875 = vmatprep.subr.mxu0 %v400
          %876 = vmatpush1.msra.mxu0 %v399
          %877 = vmatprep.subr.mxu0 %v404
          %878 = vmatpush1.msra.mxu0 %v403
          %879 = vmatprep.subr.mxu0 %v408
          %880 = vmatpush1.msra.mxu0 %v407
          %881 = vmatprep.mubr.f32.mxu0 %v276
          %882 = vmatmul.mubr.f32.gmra.mrb[0].mxu0 %v275
          %v883 = vpop.f32.mrb[0].mxu0
          %v884 = vadd.f32 %v800, %v883
          %v885 = vpop.f32.mrb[0].mxu0
          %v886 = vadd.f32 %v804, %v885
          %887 = vdwg.mxu0
          %888 = vmatprep.subr.mxu0 %v412
          %889 = vmatpush1.msra.mxu0 %v411
          %890 = vmatprep.subr.mxu0 %v416
          %891 = vmatpush1.msra.mxu0 %v415
          %892 = vmatprep.subr.mxu0 %v420
          %893 = vmatpush1.msra.mxu0 %v419
          %894 = vmatprep.subr.mxu0 %v424
          %895 = vmatpush1.msra.mxu0 %v423
          %896 = vmatprep.subr.mxu0 %v428
          %897 = vmatpush1.msra.mxu0 %v427
          %898 = vmatprep.subr.mxu0 %v432
          %899 = vmatpush1.msra.mxu0 %v431
          %900 = vmatprep.subr.mxu0 %v436
          %901 = vmatpush1.msra.mxu0 %v435
          %902 = vmatprep.subr.mxu0 %v440
          %903 = vmatpush1.msra.mxu0 %v439
          %904 = vmatprep.subr.mxu0 %v444
          %905 = vmatpush1.msra.mxu0 %v443
          %906 = vmatprep.subr.mxu0 %v448
          %907 = vmatpush1.msra.mxu0 %v447
          %908 = vmatprep.subr.mxu0 %v452
          %909 = vmatpush1.msra.mxu0 %v451
          %910 = vmatprep.subr.mxu0 %v456
          %911 = vmatpush1.msra.mxu0 %v455
          %912 = vmatprep.subr.mxu0 %v460
          %913 = vmatpush1.msra.mxu0 %v459
          %914 = vmatprep.subr.mxu0 %v464
          %915 = vmatpush1.msra.mxu0 %v463
          %916 = vmatprep.subr.mxu0 %v468
          %917 = vmatpush1.msra.mxu0 %v467
          %918 = vmatprep.subr.mxu0 %v472
          %919 = vmatpush1.msra.mxu0 %v471
          %920 = vmatprep.subr.mxu0 %v476
          %921 = vmatpush1.msra.mxu0 %v475
          %922 = vmatprep.subr.mxu0 %v480
          %923 = vmatpush1.msra.mxu0 %v479
          %924 = vmatprep.subr.mxu0 %v484
          %925 = vmatpush1.msra.mxu0 %v483
          %926 = vmatprep.subr.mxu0 %v488
          %927 = vmatpush1.msra.mxu0 %v487
          %928 = vmatprep.subr.mxu0 %v492
          %929 = vmatpush1.msra.mxu0 %v491
          %930 = vmatprep.subr.mxu0 %v496
          %931 = vmatpush1.msra.mxu0 %v495
          %932 = vmatprep.subr.mxu0 %v500
          %933 = vmatpush1.msra.mxu0 %v499
          %934 = vmatprep.subr.mxu0 %v504
          %935 = vmatpush1.msra.mxu0 %v503
          %936 = vmatprep.subr.mxu0 %v508
          %937 = vmatpush1.msra.mxu0 %v507
          %938 = vmatprep.subr.mxu0 %v512
          %939 = vmatpush1.msra.mxu0 %v511
          %940 = vmatprep.subr.mxu0 %v516
          %941 = vmatpush1.msra.mxu0 %v515
          %942 = vmatprep.subr.mxu0 %v520
          %943 = vmatpush1.msra.mxu0 %v519
          %944 = vmatprep.subr.mxu0 %v524
          %945 = vmatpush1.msra.mxu0 %v523
          %946 = vmatprep.subr.mxu0 %v528
          %947 = vmatpush1.msra.mxu0 %v527
          %948 = vmatprep.subr.mxu0 %v532
          %949 = vmatpush1.msra.mxu0 %v531
          %950 = vmatprep.subr.mxu0 %v536
          %951 = vmatpush1.msra.mxu0 %v535
          %952 = vmatprep.mubr.f32.mxu0 %v278
          %953 = vmatmul.mubr.f32.gmra.mrb[0].mxu0 %v277
          %v954 = vpop.f32.mrb[0].mxu0
          %v955 = vadd.f32 %v884, %v954
          %v956 = vpop.f32.mrb[0].mxu0
          %v957 = vadd.f32 %v886, %v956
          %958 = vdwg.mxu0
          %959 = vmatprep.subr.mxu0 %v540
          %960 = vmatpush1.msra.mxu0 %v539
          %961 = vmatprep.subr.mxu0 %v544
          %962 = vmatpush1.msra.mxu0 %v543
          %963 = vmatprep.subr.mxu0 %v548
          %964 = vmatpush1.msra.mxu0 %v547
          %965 = vmatprep.subr.mxu0 %v552
          %966 = vmatpush1.msra.mxu0 %v551
          %967 = vmatprep.subr.mxu0 %v556
          %968 = vmatpush1.msra.mxu0 %v555
          %969 = vmatprep.subr.mxu0 %v560
          %970 = vmatpush1.msra.mxu0 %v559
          %971 = vmatprep.subr.mxu0 %v564
          %972 = vmatpush1.msra.mxu0 %v563
          %973 = vmatprep.subr.mxu0 %v568
          %974 = vmatpush1.msra.mxu0 %v567
          %975 = vmatprep.subr.mxu0 %v572
          %976 = vmatpush1.msra.mxu0 %v571
          %977 = vmatprep.subr.mxu0 %v576
          %978 = vmatpush1.msra.mxu0 %v575
          %979 = vmatprep.subr.mxu0 %v580
          %980 = vmatpush1.msra.mxu0 %v579
          %981 = vmatprep.subr.mxu0 %v584
          %982 = vmatpush1.msra.mxu0 %v583
          %983 = vmatprep.subr.mxu0 %v588
          %984 = vmatpush1.msra.mxu0 %v587
          %985 = vmatprep.subr.mxu0 %v592
          %986 = vmatpush1.msra.mxu0 %v591
          %987 = vmatprep.subr.mxu0 %v596
          %988 = vmatpush1.msra.mxu0 %v595
          %989 = vmatprep.subr.mxu0 %v600
          %990 = vmatpush1.msra.mxu0 %v599
          %991 = vmatprep.subr.mxu0 %v604
          %992 = vmatpush1.msra.mxu0 %v603
          %993 = vmatprep.subr.mxu0 %v608
          %994 = vmatpush1.msra.mxu0 %v607
          %995 = vmatprep.subr.mxu0 %v612
          %996 = vmatpush1.msra.mxu0 %v611
          %997 = vmatprep.subr.mxu0 %v616
          %998 = vmatpush1.msra.mxu0 %v615
          %999 = vmatprep.subr.mxu0 %v620
          %1000 = vmatpush1.msra.mxu0 %v619
          %1001 = vmatprep.subr.mxu0 %v624
          %1002 = vmatpush1.msra.mxu0 %v623
          %1003 = vmatprep.subr.mxu0 %v628
          %1004 = vmatpush1.msra.mxu0 %v627
          %1005 = vmatprep.subr.mxu0 %v632
          %1006 = vmatpush1.msra.mxu0 %v631
          %1007 = vmatprep.subr.mxu0 %v636
          %1008 = vmatpush1.msra.mxu0 %v635
          %1009 = vmatprep.subr.mxu0 %v640
          %1010 = vmatpush1.msra.mxu0 %v639
          %1011 = vmatprep.subr.mxu0 %v644
          %1012 = vmatpush1.msra.mxu0 %v643
          %1013 = vmatprep.subr.mxu0 %v648
          %1014 = vmatpush1.msra.mxu0 %v647
          %1015 = vmatprep.subr.mxu0 %v652
          %1016 = vmatpush1.msra.mxu0 %v651
          %1017 = vmatprep.subr.mxu0 %v656
          %1018 = vmatpush1.msra.mxu0 %v655
          %1019 = vmatprep.subr.mxu0 %v660
          %1020 = vmatpush1.msra.mxu0 %v659
          %1021 = vmatprep.subr.mxu0 %v664
          %1022 = vmatpush1.msra.mxu0 %v663
          %1023 = vmatprep.mubr.f32.mxu0 %v280
          %1024 = vmatmul.mubr.f32.gmra.mrb[0].mxu0 %v279
          %v1025 = vpop.f32.mrb[0].mxu0
          %v1026 = vadd.f32 %v955, %v1025
          %v1027 = vpop.f32.mrb[0].mxu0
          %v1028 = vadd.f32 %v957, %v1027
          %1029 = vdwg.mxu0
          %1030 = vmatprep.subr.mxu0 %v668
          %1031 = vmatpush1.msra.mxu0 %v667
          %1032 = vmatprep.subr.mxu0 %v672
          %1033 = vmatpush1.msra.mxu0 %v671
          %1034 = vmatprep.subr.mxu0 %v676
          %1035 = vmatpush1.msra.mxu0 %v675
          %1036 = vmatprep.subr.mxu0 %v680
          %1037 = vmatpush1.msra.mxu0 %v679
          %1038 = vmatprep.subr.mxu0 %v684
          %1039 = vmatpush1.msra.mxu0 %v683
          %1040 = vmatprep.subr.mxu0 %v688
          %1041 = vmatpush1.msra.mxu0 %v687
          %1042 = vmatprep.subr.mxu0 %v692
          %1043 = vmatpush1.msra.mxu0 %v691
          %1044 = vmatprep.subr.mxu0 %v696
          %1045 = vmatpush1.msra.mxu0 %v695
          %1046 = vmatprep.subr.mxu0 %v700
          %1047 = vmatpush1.msra.mxu0 %v699
          %1048 = vmatprep.subr.mxu0 %v704
          %1049 = vmatpush1.msra.mxu0 %v703
          %1050 = vmatprep.subr.mxu0 %v708
          %1051 = vmatpush1.msra.mxu0 %v707
          %1052 = vmatprep.subr.mxu0 %v712
          %1053 = vmatpush1.msra.mxu0 %v711
          %1054 = vmatprep.subr.mxu0 %v716
          %1055 = vmatpush1.msra.mxu0 %v715
          %1056 = vmatprep.subr.mxu0 %v720
          %1057 = vmatpush1.msra.mxu0 %v719
          %1058 = vmatprep.subr.mxu0 %v724
          %1059 = vmatpush1.msra.mxu0 %v723
          %1060 = vmatprep.subr.mxu0 %v728
          %1061 = vmatpush1.msra.mxu0 %v727
          %1062 = vmatprep.subr.mxu0 %v732
          %1063 = vmatpush1.msra.mxu0 %v731
          %1064 = vmatprep.subr.mxu0 %v736
          %1065 = vmatpush1.msra.mxu0 %v735
          %1066 = vmatprep.subr.mxu0 %v740
          %1067 = vmatpush1.msra.mxu0 %v739
          %1068 = vmatprep.subr.mxu0 %v744
          %1069 = vmatpush1.msra.mxu0 %v743
          %1070 = vmatprep.subr.mxu0 %v748
          %1071 = vmatpush1.msra.mxu0 %v747
          %1072 = vmatprep.subr.mxu0 %v752
          %1073 = vmatpush1.msra.mxu0 %v751
          %1074 = vmatprep.subr.mxu0 %v756
          %1075 = vmatpush1.msra.mxu0 %v755
          %1076 = vmatprep.subr.mxu0 %v760
          %1077 = vmatpush1.msra.mxu0 %v759
          %1078 = vmatprep.subr.mxu0 %v764
          %1079 = vmatpush1.msra.mxu0 %v763
          %1080 = vmatprep.subr.mxu0 %v768
          %1081 = vmatpush1.msra.mxu0 %v767
          %1082 = vmatprep.subr.mxu0 %v772
          %1083 = vmatpush1.msra.mxu0 %v771
          %1084 = vmatprep.subr.mxu0 %v776
          %1085 = vmatpush1.msra.mxu0 %v775
          %1086 = vmatprep.subr.mxu0 %v780
          %1087 = vmatpush1.msra.mxu0 %v779
          %1088 = vmatprep.subr.mxu0 %v784
          %1089 = vmatpush1.msra.mxu0 %v783
          %1090 = vmatprep.subr.mxu0 %v788
          %1091 = vmatpush1.msra.mxu0 %v787
          %1092 = vmatprep.subr.mxu0 %v792
          %1093 = vmatpush1.msra.mxu0 %v791
          %1094 = vmatprep.mubr.f32.mxu0 %v282
          %1095 = vmatmul.mubr.f32.gmra.mrb[0].mxu0 %v281
          %v1096 = vpop.f32.mrb[0].mxu0
          %v1097 = vadd.f32 %v1026, %v1096
          %v1098 = vpop.f32.mrb[0].mxu0
          %v1099 = vadd.f32 %v1028, %v1098
          %1100 = vdwg.mxu0
          %1101 = vmatprep.subr.mxu0 %v286
          %1102 = vmatpush1.msra.mxu0 %v285
          %1103 = vmatprep.subr.mxu0 %v290
          %1104 = vmatpush1.msra.mxu0 %v289
          %1105 = vmatprep.subr.mxu0 %v294
          %1106 = vmatpush1.msra.mxu0 %v293
          %1107 = vmatprep.subr.mxu0 %v298
          %1108 = vmatpush1.msra.mxu0 %v297
          %1109 = vmatprep.subr.mxu0 %v302
          %1110 = vmatpush1.msra.mxu0 %v301
          %1111 = vmatprep.subr.mxu0 %v306
          %1112 = vmatpush1.msra.mxu0 %v305
          %1113 = vmatprep.subr.mxu0 %v310
          %1114 = vmatpush1.msra.mxu0 %v309
          %1115 = vmatprep.subr.mxu0 %v314
          %1116 = vmatpush1.msra.mxu0 %v313
          %1117 = vmatprep.subr.mxu0 %v318
          %1118 = vmatpush1.msra.mxu0 %v317
          %1119 = vmatprep.subr.mxu0 %v322
          %1120 = vmatpush1.msra.mxu0 %v321
          %1121 = vmatprep.subr.mxu0 %v326
          %1122 = vmatpush1.msra.mxu0 %v325
          %1123 = vmatprep.subr.mxu0 %v330
          %1124 = vmatpush1.msra.mxu0 %v329
          %1125 = vmatprep.subr.mxu0 %v334
          %1126 = vmatpush1.msra.mxu0 %v333
          %1127 = vmatprep.subr.mxu0 %v338
          %1128 = vmatpush1.msra.mxu0 %v337
          %1129 = vmatprep.subr.mxu0 %v342
          %1130 = vmatpush1.msra.mxu0 %v341
          %1131 = vmatprep.subr.mxu0 %v346
          %1132 = vmatpush1.msra.mxu0 %v345
          %1133 = vmatprep.subr.mxu0 %v350
          %1134 = vmatpush1.msra.mxu0 %v349
          %1135 = vmatprep.subr.mxu0 %v354
          %1136 = vmatpush1.msra.mxu0 %v353
          %1137 = vmatprep.subr.mxu0 %v358
          %1138 = vmatpush1.msra.mxu0 %v357
          %1139 = vmatprep.subr.mxu0 %v362
          %1140 = vmatpush1.msra.mxu0 %v361
          %1141 = vmatprep.subr.mxu0 %v366
          %1142 = vmatpush1.msra.mxu0 %v365
          %1143 = vmatprep.subr.mxu0 %v370
          %1144 = vmatpush1.msra.mxu0 %v369
          %1145 = vmatprep.subr.mxu0 %v374
          %1146 = vmatpush1.msra.mxu0 %v373
          %1147 = vmatprep.subr.mxu0 %v378
          %1148 = vmatpush1.msra.mxu0 %v377
          %1149 = vmatprep.subr.mxu0 %v382
          %1150 = vmatpush1.msra.mxu0 %v381
          %1151 = vmatprep.subr.mxu0 %v386
          %1152 = vmatpush1.msra.mxu0 %v385
          %1153 = vmatprep.subr.mxu0 %v390
          %1154 = vmatpush1.msra.mxu0 %v389
          %1155 = vmatprep.subr.mxu0 %v394
          %1156 = vmatpush1.msra.mxu0 %v393
          %1157 = vmatprep.subr.mxu0 %v398
          %1158 = vmatpush1.msra.mxu0 %v397
          %1159 = vmatprep.subr.mxu0 %v402
          %1160 = vmatpush1.msra.mxu0 %v401
          %1161 = vmatprep.subr.mxu0 %v406
          %1162 = vmatpush1.msra.mxu0 %v405
          %1163 = vmatprep.subr.mxu0 %v410
          %1164 = vmatpush1.msra.mxu0 %v409
          %1165 = vmatprep.mubr.f32.mxu0 %v276
          %1166 = vmatmul.mubr.f32.gmra.mrb[0].mxu0 %v275
          %v1167 = vpop.f32.mrb[0].mxu0
          %v1168 = vadd.f32 %v808, %v1167
          %v1169 = vpop.f32.mrb[0].mxu0
          %v1170 = vadd.f32 %v812, %v1169
          %1171 = vdwg.mxu0
          %1172 = vmatprep.subr.mxu0 %v414
          %1173 = vmatpush1.msra.mxu0 %v413
          %1174 = vmatprep.subr.mxu0 %v418
          %1175 = vmatpush1.msra.mxu0 %v417
          %1176 = vmatprep.subr.mxu0 %v422
          %1177 = vmatpush1.msra.mxu0 %v421
          %1178 = vmatprep.subr.mxu0 %v426
          %1179 = vmatpush1.msra.mxu0 %v425
          %1180 = vmatprep.subr.mxu0 %v430
          %1181 = vmatpush1.msra.mxu0 %v429
          %1182 = vmatprep.subr.mxu0 %v434
          %1183 = vmatpush1.msra.mxu0 %v433
          %1184 = vmatprep.subr.mxu0 %v438
          %1185 = vmatpush1.msra.mxu0 %v437
          %1186 = vmatprep.subr.mxu0 %v442
          %1187 = vmatpush1.msra.mxu0 %v441
          %1188 = vmatprep.subr.mxu0 %v446
          %1189 = vmatpush1.msra.mxu0 %v445
          %1190 = vmatprep.subr.mxu0 %v450
          %1191 = vmatpush1.msra.mxu0 %v449
          %1192 = vmatprep.subr.mxu0 %v454
          %1193 = vmatpush1.msra.mxu0 %v453
          %1194 = vmatprep.subr.mxu0 %v458
          %1195 = vmatpush1.msra.mxu0 %v457
          %1196 = vmatprep.subr.mxu0 %v462
          %1197 = vmatpush1.msra.mxu0 %v461
          %1198 = vmatprep.subr.mxu0 %v466
          %1199 = vmatpush1.msra.mxu0 %v465
          %1200 = vmatprep.subr.mxu0 %v470
          %1201 = vmatpush1.msra.mxu0 %v469
          %1202 = vmatprep.subr.mxu0 %v474
          %1203 = vmatpush1.msra.mxu0 %v473
          %1204 = vmatprep.subr.mxu0 %v478
          %1205 = vmatpush1.msra.mxu0 %v477
          %1206 = vmatprep.subr.mxu0 %v482
          %1207 = vmatpush1.msra.mxu0 %v481
          %1208 = vmatprep.subr.mxu0 %v486
          %1209 = vmatpush1.msra.mxu0 %v485
          %1210 = vmatprep.subr.mxu0 %v490
          %1211 = vmatpush1.msra.mxu0 %v489
          %1212 = vmatprep.subr.mxu0 %v494
          %1213 = vmatpush1.msra.mxu0 %v493
          %1214 = vmatprep.subr.mxu0 %v498
          %1215 = vmatpush1.msra.mxu0 %v497
          %1216 = vmatprep.subr.mxu0 %v502
          %1217 = vmatpush1.msra.mxu0 %v501
          %1218 = vmatprep.subr.mxu0 %v506
          %1219 = vmatpush1.msra.mxu0 %v505
          %1220 = vmatprep.subr.mxu0 %v510
          %1221 = vmatpush1.msra.mxu0 %v509
          %1222 = vmatprep.subr.mxu0 %v514
          %1223 = vmatpush1.msra.mxu0 %v513
          %1224 = vmatprep.subr.mxu0 %v518
          %1225 = vmatpush1.msra.mxu0 %v517
          %1226 = vmatprep.subr.mxu0 %v522
          %1227 = vmatpush1.msra.mxu0 %v521
          %1228 = vmatprep.subr.mxu0 %v526
          %1229 = vmatpush1.msra.mxu0 %v525
          %1230 = vmatprep.subr.mxu0 %v530
          %1231 = vmatpush1.msra.mxu0 %v529
          %1232 = vmatprep.subr.mxu0 %v534
          %1233 = vmatpush1.msra.mxu0 %v533
          %1234 = vmatprep.subr.mxu0 %v538
          %1235 = vmatpush1.msra.mxu0 %v537
          %1236 = vmatprep.mubr.f32.mxu0 %v278
          %1237 = vmatmul.mubr.f32.gmra.mrb[0].mxu0 %v277
          %v1238 = vpop.f32.mrb[0].mxu0
          %v1239 = vadd.f32 %v1168, %v1238
          %v1240 = vpop.f32.mrb[0].mxu0
          %v1241 = vadd.f32 %v1170, %v1240
          %1242 = vdwg.mxu0
          %1243 = vmatprep.subr.mxu0 %v542
          %1244 = vmatpush1.msra.mxu0 %v541
          %1245 = vmatprep.subr.mxu0 %v546
          %1246 = vmatpush1.msra.mxu0 %v545
          %1247 = vmatprep.subr.mxu0 %v550
          %1248 = vmatpush1.msra.mxu0 %v549
          %1249 = vmatprep.subr.mxu0 %v554
          %1250 = vmatpush1.msra.mxu0 %v553
          %1251 = vmatprep.subr.mxu0 %v558
          %1252 = vmatpush1.msra.mxu0 %v557
          %1253 = vmatprep.subr.mxu0 %v562
          %1254 = vmatpush1.msra.mxu0 %v561
          %1255 = vmatprep.subr.mxu0 %v566
          %1256 = vmatpush1.msra.mxu0 %v565
          %1257 = vmatprep.subr.mxu0 %v570
          %1258 = vmatpush1.msra.mxu0 %v569
          %1259 = vmatprep.subr.mxu0 %v574
          %1260 = vmatpush1.msra.mxu0 %v573
          %1261 = vmatprep.subr.mxu0 %v578
          %1262 = vmatpush1.msra.mxu0 %v577
          %1263 = vmatprep.subr.mxu0 %v582
          %1264 = vmatpush1.msra.mxu0 %v581
          %1265 = vmatprep.subr.mxu0 %v586
          %1266 = vmatpush1.msra.mxu0 %v585
          %1267 = vmatprep.subr.mxu0 %v590
          %1268 = vmatpush1.msra.mxu0 %v589
          %1269 = vmatprep.subr.mxu0 %v594
          %1270 = vmatpush1.msra.mxu0 %v593
          %1271 = vmatprep.subr.mxu0 %v598
          %1272 = vmatpush1.msra.mxu0 %v597
          %1273 = vmatprep.subr.mxu0 %v602
          %1274 = vmatpush1.msra.mxu0 %v601
          %1275 = vmatprep.subr.mxu0 %v606
          %1276 = vmatpush1.msra.mxu0 %v605
          %1277 = vmatprep.subr.mxu0 %v610
          %1278 = vmatpush1.msra.mxu0 %v609
          %1279 = vmatprep.subr.mxu0 %v614
          %1280 = vmatpush1.msra.mxu0 %v613
          %1281 = vmatprep.subr.mxu0 %v618
          %1282 = vmatpush1.msra.mxu0 %v617
          %1283 = vmatprep.subr.mxu0 %v622
          %1284 = vmatpush1.msra.mxu0 %v621
          %1285 = vmatprep.subr.mxu0 %v626
          %1286 = vmatpush1.msra.mxu0 %v625
          %1287 = vmatprep.subr.mxu0 %v630
          %1288 = vmatpush1.msra.mxu0 %v629
          %1289 = vmatprep.subr.mxu0 %v634
          %1290 = vmatpush1.msra.mxu0 %v633
          %1291 = vmatprep.subr.mxu0 %v638
          %1292 = vmatpush1.msra.mxu0 %v637
          %1293 = vmatprep.subr.mxu0 %v642
          %1294 = vmatpush1.msra.mxu0 %v641
          %1295 = vmatprep.subr.mxu0 %v646
          %1296 = vmatpush1.msra.mxu0 %v645
          %1297 = vmatprep.subr.mxu0 %v650
          %1298 = vmatpush1.msra.mxu0 %v649
          %1299 = vmatprep.subr.mxu0 %v654
          %1300 = vmatpush1.msra.mxu0 %v653
          %1301 = vmatprep.subr.mxu0 %v658
          %1302 = vmatpush1.msra.mxu0 %v657
          %1303 = vmatprep.subr.mxu0 %v662
          %1304 = vmatpush1.msra.mxu0 %v661
          %1305 = vmatprep.subr.mxu0 %v666
          %1306 = vmatpush1.msra.mxu0 %v665
          %1307 = vmatprep.mubr.f32.mxu0 %v280
          %1308 = vmatmul.mubr.f32.gmra.mrb[0].mxu0 %v279
          %v1309 = vpop.f32.mrb[0].mxu0
          %v1310 = vadd.f32 %v1239, %v1309
          %v1311 = vpop.f32.mrb[0].mxu0
          %v1312 = vadd.f32 %v1241, %v1311
          %1313 = vdwg.mxu0
          %1314 = vmatprep.subr.mxu0 %v670
          %1315 = vmatpush1.msra.mxu0 %v669
          %1316 = vmatprep.subr.mxu0 %v674
          %1317 = vmatpush1.msra.mxu0 %v673
          %1318 = vmatprep.subr.mxu0 %v678
          %1319 = vmatpush1.msra.mxu0 %v677
          %1320 = vmatprep.subr.mxu0 %v682
          %1321 = vmatpush1.msra.mxu0 %v681
          %1322 = vmatprep.subr.mxu0 %v686
          %1323 = vmatpush1.msra.mxu0 %v685
          %1324 = vmatprep.subr.mxu0 %v690
          %1325 = vmatpush1.msra.mxu0 %v689
          %1326 = vmatprep.subr.mxu0 %v694
          %1327 = vmatpush1.msra.mxu0 %v693
          %1328 = vmatprep.subr.mxu0 %v698
          %1329 = vmatpush1.msra.mxu0 %v697
          %1330 = vmatprep.subr.mxu0 %v702
          %1331 = vmatpush1.msra.mxu0 %v701
          %1332 = vmatprep.subr.mxu0 %v706
          %1333 = vmatpush1.msra.mxu0 %v705
          %1334 = vmatprep.subr.mxu0 %v710
          %1335 = vmatpush1.msra.mxu0 %v709
          %1336 = vmatprep.subr.mxu0 %v714
          %1337 = vmatpush1.msra.mxu0 %v713
          %1338 = vmatprep.subr.mxu0 %v718
          %1339 = vmatpush1.msra.mxu0 %v717
          %1340 = vmatprep.subr.mxu0 %v722
          %1341 = vmatpush1.msra.mxu0 %v721
          %1342 = vmatprep.subr.mxu0 %v726
          %1343 = vmatpush1.msra.mxu0 %v725
          %1344 = vmatprep.subr.mxu0 %v730
          %1345 = vmatpush1.msra.mxu0 %v729
          %1346 = vmatprep.subr.mxu0 %v734
          %1347 = vmatpush1.msra.mxu0 %v733
          %1348 = vmatprep.subr.mxu0 %v738
          %1349 = vmatpush1.msra.mxu0 %v737
          %1350 = vmatprep.subr.mxu0 %v742
          %1351 = vmatpush1.msra.mxu0 %v741
          %1352 = vmatprep.subr.mxu0 %v746
          %1353 = vmatpush1.msra.mxu0 %v745
          %1354 = vmatprep.subr.mxu0 %v750
          %1355 = vmatpush1.msra.mxu0 %v749
          %1356 = vmatprep.subr.mxu0 %v754
          %1357 = vmatpush1.msra.mxu0 %v753
          %1358 = vmatprep.subr.mxu0 %v758
          %1359 = vmatpush1.msra.mxu0 %v757
          %1360 = vmatprep.subr.mxu0 %v762
          %1361 = vmatpush1.msra.mxu0 %v761
          %1362 = vmatprep.subr.mxu0 %v766
          %1363 = vmatpush1.msra.mxu0 %v765
          %1364 = vmatprep.subr.mxu0 %v770
          %1365 = vmatpush1.msra.mxu0 %v769
          %1366 = vmatprep.subr.mxu0 %v774
          %1367 = vmatpush1.msra.mxu0 %v773
          %1368 = vmatprep.subr.mxu0 %v778
          %1369 = vmatpush1.msra.mxu0 %v777
          %1370 = vmatprep.subr.mxu0 %v782
          %1371 = vmatpush1.msra.mxu0 %v781
          %1372 = vmatprep.subr.mxu0 %v786
          %1373 = vmatpush1.msra.mxu0 %v785
          %1374 = vmatprep.subr.mxu0 %v790
          %1375 = vmatpush1.msra.mxu0 %v789
          %1376 = vmatprep.subr.mxu0 %v794
          %1377 = vmatpush1.msra.mxu0 %v793
          %1378 = vmatprep.mubr.f32.mxu0 %v282
          %1379 = vmatmul.mubr.f32.gmra.mrb[0].mxu0 %v281
          %v1380 = vpop.f32.mrb[0].mxu0
          %v1381 = vadd.f32 %v1310, %v1380
          %v1382 = vpop.f32.mrb[0].mxu0
          %v1383 = vadd.f32 %v1312, %v1382
          %1384 = vdwg.mxu0
          %v1385 = vmax.f32 %v1097, 0.0
          %v1386 = vmax.f32 %v1099, 0.0
          %v1387 = vmax.f32 %v1381, 0.0
          %v1388 = vmax.f32 %v1383, 0.0
          %s1389 = sshra.s32 %s236, 7
          %s1390 = sand.u32 %s236, 127
          %s1391 = smul.addr %s1389, 8
          %s1392 = scalar_lea.vmem [#allocation3], %s1391
          %1393 = vst [vmem:[%s1392] sm:$0xff] %v1385
          %1394 = vst [vmem:[%s1392 + $0x8] sm:$0xff] %v1386
          %1395 = vst [vmem:[%s1392 + $0x10] sm:$0xff] %v1387
          %1396 = vst [vmem:[%s1392 + $0x18] sm:$0xff] %v1388
          // Predicated region
          $region49: #{simple_model_forward.4} parent=47 // pred_check
            %p1397 = pneg %p237
          $region50: #{simple_model_forward.4} parent=47 // pred_check_branch
            %1399 = sbr.rel (%p1397) target = $region52
          $region51: #{simple_model_forward.4} parent=47 // pred_region
            %s1400 = smul.addr %s1389, 8
            %s1401 = scalar_lea.vmem %s3, %s1400
            %1402 = vst [vmem:[%s1401] sm:$0xff] %v1385
            %1403 = vst [vmem:[%s1401 + $0x8] sm:$0xff] %v1386
            %1404 = vst [vmem:[%s1401 + $0x10] sm:$0xff] %v1387
            %1405 = vst [vmem:[%s1401 + $0x18] sm:$0xff] %v1388
          $region52: #{simple_model_forward.4} parent=47 // pred_fallthru
            _
        $region48: #{simple_model_forward.4} parent=31 // pred_fallthru
          _
        %p1406 = scmp.ne.s32.totalorder %s270, 0
        // Predicated region
        $region53: #{simple_model_forward.4} parent=31 // pred_check
          %p1407 = pneg %p1406
        $region54: #{simple_model_forward.4} parent=31 // pred_check_branch
          %1409 = sbr.rel (%p1407) target = $region56
        $region55: #{simple_model_forward.4} parent=31 // pred_region
          %v1410 = vld [vmem:[#allocation3] sm:$0xff]
          %v1411 = vld [vmem:[#allocation3 + $0x8] sm:$0xff]
          %v1412 = vld [vmem:[#allocation3 + $0x10] sm:$0xff]
          %v1413 = vld [vmem:[#allocation3 + $0x18] sm:$0xff]
          %v1414 = vld [vmem:[#allocation3 + $0x20] sm:$0xff]
          %v1415 = vld [vmem:[#allocation3 + $0x28] sm:$0xff]
          %v1416 = vld [vmem:[#allocation3 + $0x30] sm:$0xff]
          %v1417 = vld [vmem:[#allocation3 + $0x38] sm:$0xff]
          %v1418 = vld [vmem:[%s202] sm:$0xff]
          %v1419 = vld [vmem:[%s202 + $0x8] sm:$0xff]
          %v1420 = vld [vmem:[%s202 + $0x10] sm:$0xff]
          %v1421 = vld [vmem:[%s202 + $0x18] sm:$0xff]
          %v1422 = vld [vmem:[%s202 + $0x20] sm:$0xff]
          %v1423 = vld [vmem:[%s202 + $0x28] sm:$0xff]
          %v1424 = vld [vmem:[%s202 + $0x30] sm:$0xff]
          %v1425 = vld [vmem:[%s202 + $0x38] sm:$0xff]
          %v1426 = vld [vmem:[%s202 + $0x40] sm:$0xff]
          %v1427 = vld [vmem:[%s202 + $0x48] sm:$0xff]
          %v1428 = vld [vmem:[%s202 + $0x50] sm:$0xff]
          %v1429 = vld [vmem:[%s202 + $0x58] sm:$0xff]
          %v1430 = vld [vmem:[%s202 + $0x60] sm:$0xff]
          %v1431 = vld [vmem:[%s202 + $0x68] sm:$0xff]
          %v1432 = vld [vmem:[%s202 + $0x70] sm:$0xff]
          %v1433 = vld [vmem:[%s202 + $0x78] sm:$0xff]
          %v1434 = vld [vmem:[%s202 + $0x80] sm:$0xff]
          %v1435 = vld [vmem:[%s202 + $0x88] sm:$0xff]
          %v1436 = vld [vmem:[%s202 + $0x90] sm:$0xff]
          %v1437 = vld [vmem:[%s202 + $0x98] sm:$0xff]
          %v1438 = vld [vmem:[%s202 + $0xa0] sm:$0xff]
          %v1439 = vld [vmem:[%s202 + $0xa8] sm:$0xff]
          %v1440 = vld [vmem:[%s202 + $0xb0] sm:$0xff]
          %v1441 = vld [vmem:[%s202 + $0xb8] sm:$0xff]
          %v1442 = vld [vmem:[%s202 + $0xc0] sm:$0xff]
          %v1443 = vld [vmem:[%s202 + $0xc8] sm:$0xff]
          %v1444 = vld [vmem:[%s202 + $0xd0] sm:$0xff]
          %v1445 = vld [vmem:[%s202 + $0xd8] sm:$0xff]
          %v1446 = vld [vmem:[%s202 + $0xe0] sm:$0xff]
          %v1447 = vld [vmem:[%s202 + $0xe8] sm:$0xff]
          %v1448 = vld [vmem:[%s202 + $0xf0] sm:$0xff]
          %v1449 = vld [vmem:[%s202 + $0xf8] sm:$0xff]
          %v1450 = vld [vmem:[%s202 + $0x100] sm:$0xff]
          %v1451 = vld [vmem:[%s202 + $0x108] sm:$0xff]
          %v1452 = vld [vmem:[%s202 + $0x110] sm:$0xff]
          %v1453 = vld [vmem:[%s202 + $0x118] sm:$0xff]
          %v1454 = vld [vmem:[%s202 + $0x120] sm:$0xff]
          %v1455 = vld [vmem:[%s202 + $0x128] sm:$0xff]
          %v1456 = vld [vmem:[%s202 + $0x130] sm:$0xff]
          %v1457 = vld [vmem:[%s202 + $0x138] sm:$0xff]
          %v1458 = vld [vmem:[%s202 + $0x140] sm:$0xff]
          %v1459 = vld [vmem:[%s202 + $0x148] sm:$0xff]
          %v1460 = vld [vmem:[%s202 + $0x150] sm:$0xff]
          %v1461 = vld [vmem:[%s202 + $0x158] sm:$0xff]
          %v1462 = vld [vmem:[%s202 + $0x160] sm:$0xff]
          %v1463 = vld [vmem:[%s202 + $0x168] sm:$0xff]
          %v1464 = vld [vmem:[%s202 + $0x170] sm:$0xff]
          %v1465 = vld [vmem:[%s202 + $0x178] sm:$0xff]
          %v1466 = vld [vmem:[%s202 + $0x180] sm:$0xff]
          %v1467 = vld [vmem:[%s202 + $0x188] sm:$0xff]
          %v1468 = vld [vmem:[%s202 + $0x190] sm:$0xff]
          %v1469 = vld [vmem:[%s202 + $0x198] sm:$0xff]
          %v1470 = vld [vmem:[%s202 + $0x1a0] sm:$0xff]
          %v1471 = vld [vmem:[%s202 + $0x1a8] sm:$0xff]
          %v1472 = vld [vmem:[%s202 + $0x1b0] sm:$0xff]
          %v1473 = vld [vmem:[%s202 + $0x1b8] sm:$0xff]
          %v1474 = vld [vmem:[%s202 + $0x1c0] sm:$0xff]
          %v1475 = vld [vmem:[%s202 + $0x1c8] sm:$0xff]
          %v1476 = vld [vmem:[%s202 + $0x1d0] sm:$0xff]
          %v1477 = vld [vmem:[%s202 + $0x1d8] sm:$0xff]
          %v1478 = vld [vmem:[%s202 + $0x1e0] sm:$0xff]
          %v1479 = vld [vmem:[%s202 + $0x1e8] sm:$0xff]
          %v1480 = vld [vmem:[%s202 + $0x1f0] sm:$0xff]
          %v1481 = vld [vmem:[%s202 + $0x1f8] sm:$0xff]
          %v1482 = vld [vmem:[%s202 + $0x200] sm:$0xff]
          %v1483 = vld [vmem:[%s202 + $0x208] sm:$0xff]
          %v1484 = vld [vmem:[%s202 + $0x210] sm:$0xff]
          %v1485 = vld [vmem:[%s202 + $0x218] sm:$0xff]
          %v1486 = vld [vmem:[%s202 + $0x220] sm:$0xff]
          %v1487 = vld [vmem:[%s202 + $0x228] sm:$0xff]
          %v1488 = vld [vmem:[%s202 + $0x230] sm:$0xff]
          %v1489 = vld [vmem:[%s202 + $0x238] sm:$0xff]
          %v1490 = vld [vmem:[%s202 + $0x240] sm:$0xff]
          %v1491 = vld [vmem:[%s202 + $0x248] sm:$0xff]
          %v1492 = vld [vmem:[%s202 + $0x250] sm:$0xff]
          %v1493 = vld [vmem:[%s202 + $0x258] sm:$0xff]
          %v1494 = vld [vmem:[%s202 + $0x260] sm:$0xff]
          %v1495 = vld [vmem:[%s202 + $0x268] sm:$0xff]
          %v1496 = vld [vmem:[%s202 + $0x270] sm:$0xff]
          %v1497 = vld [vmem:[%s202 + $0x278] sm:$0xff]
          %v1498 = vld [vmem:[%s202 + $0x280] sm:$0xff]
          %v1499 = vld [vmem:[%s202 + $0x288] sm:$0xff]
          %v1500 = vld [vmem:[%s202 + $0x290] sm:$0xff]
          %v1501 = vld [vmem:[%s202 + $0x298] sm:$0xff]
          %v1502 = vld [vmem:[%s202 + $0x2a0] sm:$0xff]
          %v1503 = vld [vmem:[%s202 + $0x2a8] sm:$0xff]
          %v1504 = vld [vmem:[%s202 + $0x2b0] sm:$0xff]
          %v1505 = vld [vmem:[%s202 + $0x2b8] sm:$0xff]
          %v1506 = vld [vmem:[%s202 + $0x2c0] sm:$0xff]
          %v1507 = vld [vmem:[%s202 + $0x2c8] sm:$0xff]
          %v1508 = vld [vmem:[%s202 + $0x2d0] sm:$0xff]
          %v1509 = vld [vmem:[%s202 + $0x2d8] sm:$0xff]
          %v1510 = vld [vmem:[%s202 + $0x2e0] sm:$0xff]
          %v1511 = vld [vmem:[%s202 + $0x2e8] sm:$0xff]
          %v1512 = vld [vmem:[%s202 + $0x2f0] sm:$0xff]
          %v1513 = vld [vmem:[%s202 + $0x2f8] sm:$0xff]
          %v1514 = vld [vmem:[%s202 + $0x300] sm:$0xff]
          %v1515 = vld [vmem:[%s202 + $0x308] sm:$0xff]
          %v1516 = vld [vmem:[%s202 + $0x310] sm:$0xff]
          %v1517 = vld [vmem:[%s202 + $0x318] sm:$0xff]
          %v1518 = vld [vmem:[%s202 + $0x320] sm:$0xff]
          %v1519 = vld [vmem:[%s202 + $0x328] sm:$0xff]
          %v1520 = vld [vmem:[%s202 + $0x330] sm:$0xff]
          %v1521 = vld [vmem:[%s202 + $0x338] sm:$0xff]
          %v1522 = vld [vmem:[%s202 + $0x340] sm:$0xff]
          %v1523 = vld [vmem:[%s202 + $0x348] sm:$0xff]
          %v1524 = vld [vmem:[%s202 + $0x350] sm:$0xff]
          %v1525 = vld [vmem:[%s202 + $0x358] sm:$0xff]
          %v1526 = vld [vmem:[%s202 + $0x360] sm:$0xff]
          %v1527 = vld [vmem:[%s202 + $0x368] sm:$0xff]
          %v1528 = vld [vmem:[%s202 + $0x370] sm:$0xff]
          %v1529 = vld [vmem:[%s202 + $0x378] sm:$0xff]
          %v1530 = vld [vmem:[%s202 + $0x380] sm:$0xff]
          %v1531 = vld [vmem:[%s202 + $0x388] sm:$0xff]
          %v1532 = vld [vmem:[%s202 + $0x390] sm:$0xff]
          %v1533 = vld [vmem:[%s202 + $0x398] sm:$0xff]
          %v1534 = vld [vmem:[%s202 + $0x3a0] sm:$0xff]
          %v1535 = vld [vmem:[%s202 + $0x3a8] sm:$0xff]
          %v1536 = vld [vmem:[%s202 + $0x3b0] sm:$0xff]
          %v1537 = vld [vmem:[%s202 + $0x3b8] sm:$0xff]
          %v1538 = vld [vmem:[%s202 + $0x3c0] sm:$0xff]
          %v1539 = vld [vmem:[%s202 + $0x3c8] sm:$0xff]
          %v1540 = vld [vmem:[%s202 + $0x3d0] sm:$0xff]
          %v1541 = vld [vmem:[%s202 + $0x3d8] sm:$0xff]
          %v1542 = vld [vmem:[%s202 + $0x3e0] sm:$0xff]
          %v1543 = vld [vmem:[%s202 + $0x3e8] sm:$0xff]
          %v1544 = vld [vmem:[%s202 + $0x3f0] sm:$0xff]
          %v1545 = vld [vmem:[%s202 + $0x3f8] sm:$0xff]
          %v1546 = vld [vmem:[%s202 + $0x400] sm:$0xff]
          %v1547 = vld [vmem:[%s202 + $0x408] sm:$0xff]
          %v1548 = vld [vmem:[%s202 + $0x410] sm:$0xff]
          %v1549 = vld [vmem:[%s202 + $0x418] sm:$0xff]
          %v1550 = vld [vmem:[%s202 + $0x420] sm:$0xff]
          %v1551 = vld [vmem:[%s202 + $0x428] sm:$0xff]
          %v1552 = vld [vmem:[%s202 + $0x430] sm:$0xff]
          %v1553 = vld [vmem:[%s202 + $0x438] sm:$0xff]
          %v1554 = vld [vmem:[%s202 + $0x440] sm:$0xff]
          %v1555 = vld [vmem:[%s202 + $0x448] sm:$0xff]
          %v1556 = vld [vmem:[%s202 + $0x450] sm:$0xff]
          %v1557 = vld [vmem:[%s202 + $0x458] sm:$0xff]
          %v1558 = vld [vmem:[%s202 + $0x460] sm:$0xff]
          %v1559 = vld [vmem:[%s202 + $0x468] sm:$0xff]
          %v1560 = vld [vmem:[%s202 + $0x470] sm:$0xff]
          %v1561 = vld [vmem:[%s202 + $0x478] sm:$0xff]
          %v1562 = vld [vmem:[%s202 + $0x480] sm:$0xff]
          %v1563 = vld [vmem:[%s202 + $0x488] sm:$0xff]
          %v1564 = vld [vmem:[%s202 + $0x490] sm:$0xff]
          %v1565 = vld [vmem:[%s202 + $0x498] sm:$0xff]
          %v1566 = vld [vmem:[%s202 + $0x4a0] sm:$0xff]
          %v1567 = vld [vmem:[%s202 + $0x4a8] sm:$0xff]
          %v1568 = vld [vmem:[%s202 + $0x4b0] sm:$0xff]
          %v1569 = vld [vmem:[%s202 + $0x4b8] sm:$0xff]
          %v1570 = vld [vmem:[%s202 + $0x4c0] sm:$0xff]
          %v1571 = vld [vmem:[%s202 + $0x4c8] sm:$0xff]
          %v1572 = vld [vmem:[%s202 + $0x4d0] sm:$0xff]
          %v1573 = vld [vmem:[%s202 + $0x4d8] sm:$0xff]
          %v1574 = vld [vmem:[%s202 + $0x4e0] sm:$0xff]
          %v1575 = vld [vmem:[%s202 + $0x4e8] sm:$0xff]
          %v1576 = vld [vmem:[%s202 + $0x4f0] sm:$0xff]
          %v1577 = vld [vmem:[%s202 + $0x4f8] sm:$0xff]
          %v1578 = vld [vmem:[%s202 + $0x500] sm:$0xff]
          %v1579 = vld [vmem:[%s202 + $0x508] sm:$0xff]
          %v1580 = vld [vmem:[%s202 + $0x510] sm:$0xff]
          %v1581 = vld [vmem:[%s202 + $0x518] sm:$0xff]
          %v1582 = vld [vmem:[%s202 + $0x520] sm:$0xff]
          %v1583 = vld [vmem:[%s202 + $0x528] sm:$0xff]
          %v1584 = vld [vmem:[%s202 + $0x530] sm:$0xff]
          %v1585 = vld [vmem:[%s202 + $0x538] sm:$0xff]
          %v1586 = vld [vmem:[%s202 + $0x540] sm:$0xff]
          %v1587 = vld [vmem:[%s202 + $0x548] sm:$0xff]
          %v1588 = vld [vmem:[%s202 + $0x550] sm:$0xff]
          %v1589 = vld [vmem:[%s202 + $0x558] sm:$0xff]
          %v1590 = vld [vmem:[%s202 + $0x560] sm:$0xff]
          %v1591 = vld [vmem:[%s202 + $0x568] sm:$0xff]
          %v1592 = vld [vmem:[%s202 + $0x570] sm:$0xff]
          %v1593 = vld [vmem:[%s202 + $0x578] sm:$0xff]
          %v1594 = vld [vmem:[%s202 + $0x580] sm:$0xff]
          %v1595 = vld [vmem:[%s202 + $0x588] sm:$0xff]
          %v1596 = vld [vmem:[%s202 + $0x590] sm:$0xff]
          %v1597 = vld [vmem:[%s202 + $0x598] sm:$0xff]
          %v1598 = vld [vmem:[%s202 + $0x5a0] sm:$0xff]
          %v1599 = vld [vmem:[%s202 + $0x5a8] sm:$0xff]
          %v1600 = vld [vmem:[%s202 + $0x5b0] sm:$0xff]
          %v1601 = vld [vmem:[%s202 + $0x5b8] sm:$0xff]
          %v1602 = vld [vmem:[%s202 + $0x5c0] sm:$0xff]
          %v1603 = vld [vmem:[%s202 + $0x5c8] sm:$0xff]
          %v1604 = vld [vmem:[%s202 + $0x5d0] sm:$0xff]
          %v1605 = vld [vmem:[%s202 + $0x5d8] sm:$0xff]
          %v1606 = vld [vmem:[%s202 + $0x5e0] sm:$0xff]
          %v1607 = vld [vmem:[%s202 + $0x5e8] sm:$0xff]
          %v1608 = vld [vmem:[%s202 + $0x5f0] sm:$0xff]
          %v1609 = vld [vmem:[%s202 + $0x5f8] sm:$0xff]
          %v1610 = vld [vmem:[%s202 + $0x600] sm:$0xff]
          %v1611 = vld [vmem:[%s202 + $0x608] sm:$0xff]
          %v1612 = vld [vmem:[%s202 + $0x610] sm:$0xff]
          %v1613 = vld [vmem:[%s202 + $0x618] sm:$0xff]
          %v1614 = vld [vmem:[%s202 + $0x620] sm:$0xff]
          %v1615 = vld [vmem:[%s202 + $0x628] sm:$0xff]
          %v1616 = vld [vmem:[%s202 + $0x630] sm:$0xff]
          %v1617 = vld [vmem:[%s202 + $0x638] sm:$0xff]
          %v1618 = vld [vmem:[%s202 + $0x640] sm:$0xff]
          %v1619 = vld [vmem:[%s202 + $0x648] sm:$0xff]
          %v1620 = vld [vmem:[%s202 + $0x650] sm:$0xff]
          %v1621 = vld [vmem:[%s202 + $0x658] sm:$0xff]
          %v1622 = vld [vmem:[%s202 + $0x660] sm:$0xff]
          %v1623 = vld [vmem:[%s202 + $0x668] sm:$0xff]
          %v1624 = vld [vmem:[%s202 + $0x670] sm:$0xff]
          %v1625 = vld [vmem:[%s202 + $0x678] sm:$0xff]
          %v1626 = vld [vmem:[%s202 + $0x680] sm:$0xff]
          %v1627 = vld [vmem:[%s202 + $0x688] sm:$0xff]
          %v1628 = vld [vmem:[%s202 + $0x690] sm:$0xff]
          %v1629 = vld [vmem:[%s202 + $0x698] sm:$0xff]
          %v1630 = vld [vmem:[%s202 + $0x6a0] sm:$0xff]
          %v1631 = vld [vmem:[%s202 + $0x6a8] sm:$0xff]
          %v1632 = vld [vmem:[%s202 + $0x6b0] sm:$0xff]
          %v1633 = vld [vmem:[%s202 + $0x6b8] sm:$0xff]
          %v1634 = vld [vmem:[%s202 + $0x6c0] sm:$0xff]
          %v1635 = vld [vmem:[%s202 + $0x6c8] sm:$0xff]
          %v1636 = vld [vmem:[%s202 + $0x6d0] sm:$0xff]
          %v1637 = vld [vmem:[%s202 + $0x6d8] sm:$0xff]
          %v1638 = vld [vmem:[%s202 + $0x6e0] sm:$0xff]
          %v1639 = vld [vmem:[%s202 + $0x6e8] sm:$0xff]
          %v1640 = vld [vmem:[%s202 + $0x6f0] sm:$0xff]
          %v1641 = vld [vmem:[%s202 + $0x6f8] sm:$0xff]
          %v1642 = vld [vmem:[%s202 + $0x700] sm:$0xff]
          %v1643 = vld [vmem:[%s202 + $0x708] sm:$0xff]
          %v1644 = vld [vmem:[%s202 + $0x710] sm:$0xff]
          %v1645 = vld [vmem:[%s202 + $0x718] sm:$0xff]
          %v1646 = vld [vmem:[%s202 + $0x720] sm:$0xff]
          %v1647 = vld [vmem:[%s202 + $0x728] sm:$0xff]
          %v1648 = vld [vmem:[%s202 + $0x730] sm:$0xff]
          %v1649 = vld [vmem:[%s202 + $0x738] sm:$0xff]
          %v1650 = vld [vmem:[%s202 + $0x740] sm:$0xff]
          %v1651 = vld [vmem:[%s202 + $0x748] sm:$0xff]
          %v1652 = vld [vmem:[%s202 + $0x750] sm:$0xff]
          %v1653 = vld [vmem:[%s202 + $0x758] sm:$0xff]
          %v1654 = vld [vmem:[%s202 + $0x760] sm:$0xff]
          %v1655 = vld [vmem:[%s202 + $0x768] sm:$0xff]
          %v1656 = vld [vmem:[%s202 + $0x770] sm:$0xff]
          %v1657 = vld [vmem:[%s202 + $0x778] sm:$0xff]
          %v1658 = vld [vmem:[%s202 + $0x780] sm:$0xff]
          %v1659 = vld [vmem:[%s202 + $0x788] sm:$0xff]
          %v1660 = vld [vmem:[%s202 + $0x790] sm:$0xff]
          %v1661 = vld [vmem:[%s202 + $0x798] sm:$0xff]
          %v1662 = vld [vmem:[%s202 + $0x7a0] sm:$0xff]
          %v1663 = vld [vmem:[%s202 + $0x7a8] sm:$0xff]
          %v1664 = vld [vmem:[%s202 + $0x7b0] sm:$0xff]
          %v1665 = vld [vmem:[%s202 + $0x7b8] sm:$0xff]
          %v1666 = vld [vmem:[%s202 + $0x7c0] sm:$0xff]
          %v1667 = vld [vmem:[%s202 + $0x7c8] sm:$0xff]
          %v1668 = vld [vmem:[%s202 + $0x7d0] sm:$0xff]
          %v1669 = vld [vmem:[%s202 + $0x7d8] sm:$0xff]
          %v1670 = vld [vmem:[%s202 + $0x7e0] sm:$0xff]
          %v1671 = vld [vmem:[%s202 + $0x7e8] sm:$0xff]
          %v1672 = vld [vmem:[%s202 + $0x7f0] sm:$0xff]
          %v1673 = vld [vmem:[%s202 + $0x7f8] sm:$0xff]
          %v1674 = vld [vmem:[%s202 + $0x800] sm:$0xff]
          %v1675 = vld [vmem:[%s202 + $0x808] sm:$0xff]
          %v1676 = vld [vmem:[%s202 + $0x810] sm:$0xff]
          %v1677 = vld [vmem:[%s202 + $0x818] sm:$0xff]
          %v1678 = vld [vmem:[%s202 + $0x820] sm:$0xff]
          %v1679 = vld [vmem:[%s202 + $0x828] sm:$0xff]
          %v1680 = vld [vmem:[%s202 + $0x830] sm:$0xff]
          %v1681 = vld [vmem:[%s202 + $0x838] sm:$0xff]
          %v1682 = vld [vmem:[%s202 + $0x840] sm:$0xff]
          %v1683 = vld [vmem:[%s202 + $0x848] sm:$0xff]
          %v1684 = vld [vmem:[%s202 + $0x850] sm:$0xff]
          %v1685 = vld [vmem:[%s202 + $0x858] sm:$0xff]
          %v1686 = vld [vmem:[%s202 + $0x860] sm:$0xff]
          %v1687 = vld [vmem:[%s202 + $0x868] sm:$0xff]
          %v1688 = vld [vmem:[%s202 + $0x870] sm:$0xff]
          %v1689 = vld [vmem:[%s202 + $0x878] sm:$0xff]
          %v1690 = vld [vmem:[%s202 + $0x880] sm:$0xff]
          %v1691 = vld [vmem:[%s202 + $0x888] sm:$0xff]
          %v1692 = vld [vmem:[%s202 + $0x890] sm:$0xff]
          %v1693 = vld [vmem:[%s202 + $0x898] sm:$0xff]
          %v1694 = vld [vmem:[%s202 + $0x8a0] sm:$0xff]
          %v1695 = vld [vmem:[%s202 + $0x8a8] sm:$0xff]
          %v1696 = vld [vmem:[%s202 + $0x8b0] sm:$0xff]
          %v1697 = vld [vmem:[%s202 + $0x8b8] sm:$0xff]
          %v1698 = vld [vmem:[%s202 + $0x8c0] sm:$0xff]
          %v1699 = vld [vmem:[%s202 + $0x8c8] sm:$0xff]
          %v1700 = vld [vmem:[%s202 + $0x8d0] sm:$0xff]
          %v1701 = vld [vmem:[%s202 + $0x8d8] sm:$0xff]
          %v1702 = vld [vmem:[%s202 + $0x8e0] sm:$0xff]
          %v1703 = vld [vmem:[%s202 + $0x8e8] sm:$0xff]
          %v1704 = vld [vmem:[%s202 + $0x8f0] sm:$0xff]
          %v1705 = vld [vmem:[%s202 + $0x8f8] sm:$0xff]
          %v1706 = vld [vmem:[%s202 + $0x900] sm:$0xff]
          %v1707 = vld [vmem:[%s202 + $0x908] sm:$0xff]
          %v1708 = vld [vmem:[%s202 + $0x910] sm:$0xff]
          %v1709 = vld [vmem:[%s202 + $0x918] sm:$0xff]
          %v1710 = vld [vmem:[%s202 + $0x920] sm:$0xff]
          %v1711 = vld [vmem:[%s202 + $0x928] sm:$0xff]
          %v1712 = vld [vmem:[%s202 + $0x930] sm:$0xff]
          %v1713 = vld [vmem:[%s202 + $0x938] sm:$0xff]
          %v1714 = vld [vmem:[%s202 + $0x940] sm:$0xff]
          %v1715 = vld [vmem:[%s202 + $0x948] sm:$0xff]
          %v1716 = vld [vmem:[%s202 + $0x950] sm:$0xff]
          %v1717 = vld [vmem:[%s202 + $0x958] sm:$0xff]
          %v1718 = vld [vmem:[%s202 + $0x960] sm:$0xff]
          %v1719 = vld [vmem:[%s202 + $0x968] sm:$0xff]
          %v1720 = vld [vmem:[%s202 + $0x970] sm:$0xff]
          %v1721 = vld [vmem:[%s202 + $0x978] sm:$0xff]
          %v1722 = vld [vmem:[%s202 + $0x980] sm:$0xff]
          %v1723 = vld [vmem:[%s202 + $0x988] sm:$0xff]
          %v1724 = vld [vmem:[%s202 + $0x990] sm:$0xff]
          %v1725 = vld [vmem:[%s202 + $0x998] sm:$0xff]
          %v1726 = vld [vmem:[%s202 + $0x9a0] sm:$0xff]
          %v1727 = vld [vmem:[%s202 + $0x9a8] sm:$0xff]
          %v1728 = vld [vmem:[%s202 + $0x9b0] sm:$0xff]
          %v1729 = vld [vmem:[%s202 + $0x9b8] sm:$0xff]
          %v1730 = vld [vmem:[%s202 + $0x9c0] sm:$0xff]
          %v1731 = vld [vmem:[%s202 + $0x9c8] sm:$0xff]
          %v1732 = vld [vmem:[%s202 + $0x9d0] sm:$0xff]
          %v1733 = vld [vmem:[%s202 + $0x9d8] sm:$0xff]
          %v1734 = vld [vmem:[%s202 + $0x9e0] sm:$0xff]
          %v1735 = vld [vmem:[%s202 + $0x9e8] sm:$0xff]
          %v1736 = vld [vmem:[%s202 + $0x9f0] sm:$0xff]
          %v1737 = vld [vmem:[%s202 + $0x9f8] sm:$0xff]
          %v1738 = vld [vmem:[%s202 + $0xa00] sm:$0xff]
          %v1739 = vld [vmem:[%s202 + $0xa08] sm:$0xff]
          %v1740 = vld [vmem:[%s202 + $0xa10] sm:$0xff]
          %v1741 = vld [vmem:[%s202 + $0xa18] sm:$0xff]
          %v1742 = vld [vmem:[%s202 + $0xa20] sm:$0xff]
          %v1743 = vld [vmem:[%s202 + $0xa28] sm:$0xff]
          %v1744 = vld [vmem:[%s202 + $0xa30] sm:$0xff]
          %v1745 = vld [vmem:[%s202 + $0xa38] sm:$0xff]
          %v1746 = vld [vmem:[%s202 + $0xa40] sm:$0xff]
          %v1747 = vld [vmem:[%s202 + $0xa48] sm:$0xff]
          %v1748 = vld [vmem:[%s202 + $0xa50] sm:$0xff]
          %v1749 = vld [vmem:[%s202 + $0xa58] sm:$0xff]
          %v1750 = vld [vmem:[%s202 + $0xa60] sm:$0xff]
          %v1751 = vld [vmem:[%s202 + $0xa68] sm:$0xff]
          %v1752 = vld [vmem:[%s202 + $0xa70] sm:$0xff]
          %v1753 = vld [vmem:[%s202 + $0xa78] sm:$0xff]
          %v1754 = vld [vmem:[%s202 + $0xa80] sm:$0xff]
          %v1755 = vld [vmem:[%s202 + $0xa88] sm:$0xff]
          %v1756 = vld [vmem:[%s202 + $0xa90] sm:$0xff]
          %v1757 = vld [vmem:[%s202 + $0xa98] sm:$0xff]
          %v1758 = vld [vmem:[%s202 + $0xaa0] sm:$0xff]
          %v1759 = vld [vmem:[%s202 + $0xaa8] sm:$0xff]
          %v1760 = vld [vmem:[%s202 + $0xab0] sm:$0xff]
          %v1761 = vld [vmem:[%s202 + $0xab8] sm:$0xff]
          %v1762 = vld [vmem:[%s202 + $0xac0] sm:$0xff]
          %v1763 = vld [vmem:[%s202 + $0xac8] sm:$0xff]
          %v1764 = vld [vmem:[%s202 + $0xad0] sm:$0xff]
          %v1765 = vld [vmem:[%s202 + $0xad8] sm:$0xff]
          %v1766 = vld [vmem:[%s202 + $0xae0] sm:$0xff]
          %v1767 = vld [vmem:[%s202 + $0xae8] sm:$0xff]
          %v1768 = vld [vmem:[%s202 + $0xaf0] sm:$0xff]
          %v1769 = vld [vmem:[%s202 + $0xaf8] sm:$0xff]
          %v1770 = vld [vmem:[%s202 + $0xb00] sm:$0xff]
          %v1771 = vld [vmem:[%s202 + $0xb08] sm:$0xff]
          %v1772 = vld [vmem:[%s202 + $0xb10] sm:$0xff]
          %v1773 = vld [vmem:[%s202 + $0xb18] sm:$0xff]
          %v1774 = vld [vmem:[%s202 + $0xb20] sm:$0xff]
          %v1775 = vld [vmem:[%s202 + $0xb28] sm:$0xff]
          %v1776 = vld [vmem:[%s202 + $0xb30] sm:$0xff]
          %v1777 = vld [vmem:[%s202 + $0xb38] sm:$0xff]
          %v1778 = vld [vmem:[%s202 + $0xb40] sm:$0xff]
          %v1779 = vld [vmem:[%s202 + $0xb48] sm:$0xff]
          %v1780 = vld [vmem:[%s202 + $0xb50] sm:$0xff]
          %v1781 = vld [vmem:[%s202 + $0xb58] sm:$0xff]
          %v1782 = vld [vmem:[%s202 + $0xb60] sm:$0xff]
          %v1783 = vld [vmem:[%s202 + $0xb68] sm:$0xff]
          %v1784 = vld [vmem:[%s202 + $0xb70] sm:$0xff]
          %v1785 = vld [vmem:[%s202 + $0xb78] sm:$0xff]
          %v1786 = vld [vmem:[%s202 + $0xb80] sm:$0xff]
          %v1787 = vld [vmem:[%s202 + $0xb88] sm:$0xff]
          %v1788 = vld [vmem:[%s202 + $0xb90] sm:$0xff]
          %v1789 = vld [vmem:[%s202 + $0xb98] sm:$0xff]
          %v1790 = vld [vmem:[%s202 + $0xba0] sm:$0xff]
          %v1791 = vld [vmem:[%s202 + $0xba8] sm:$0xff]
          %v1792 = vld [vmem:[%s202 + $0xbb0] sm:$0xff]
          %v1793 = vld [vmem:[%s202 + $0xbb8] sm:$0xff]
          %v1794 = vld [vmem:[%s202 + $0xbc0] sm:$0xff]
          %v1795 = vld [vmem:[%s202 + $0xbc8] sm:$0xff]
          %v1796 = vld [vmem:[%s202 + $0xbd0] sm:$0xff]
          %v1797 = vld [vmem:[%s202 + $0xbd8] sm:$0xff]
          %v1798 = vld [vmem:[%s202 + $0xbe0] sm:$0xff]
          %v1799 = vld [vmem:[%s202 + $0xbe8] sm:$0xff]
          %v1800 = vld [vmem:[%s202 + $0xbf0] sm:$0xff]
          %v1801 = vld [vmem:[%s202 + $0xbf8] sm:$0xff]
          %v1802 = vld [vmem:[%s202 + $0xc00] sm:$0xff]
          %v1803 = vld [vmem:[%s202 + $0xc08] sm:$0xff]
          %v1804 = vld [vmem:[%s202 + $0xc10] sm:$0xff]
          %v1805 = vld [vmem:[%s202 + $0xc18] sm:$0xff]
          %v1806 = vld [vmem:[%s202 + $0xc20] sm:$0xff]
          %v1807 = vld [vmem:[%s202 + $0xc28] sm:$0xff]
          %v1808 = vld [vmem:[%s202 + $0xc30] sm:$0xff]
          %v1809 = vld [vmem:[%s202 + $0xc38] sm:$0xff]
          %v1810 = vld [vmem:[%s202 + $0xc40] sm:$0xff]
          %v1811 = vld [vmem:[%s202 + $0xc48] sm:$0xff]
          %v1812 = vld [vmem:[%s202 + $0xc50] sm:$0xff]
          %v1813 = vld [vmem:[%s202 + $0xc58] sm:$0xff]
          %v1814 = vld [vmem:[%s202 + $0xc60] sm:$0xff]
          %v1815 = vld [vmem:[%s202 + $0xc68] sm:$0xff]
          %v1816 = vld [vmem:[%s202 + $0xc70] sm:$0xff]
          %v1817 = vld [vmem:[%s202 + $0xc78] sm:$0xff]
          %v1818 = vld [vmem:[%s202 + $0xc80] sm:$0xff]
          %v1819 = vld [vmem:[%s202 + $0xc88] sm:$0xff]
          %v1820 = vld [vmem:[%s202 + $0xc90] sm:$0xff]
          %v1821 = vld [vmem:[%s202 + $0xc98] sm:$0xff]
          %v1822 = vld [vmem:[%s202 + $0xca0] sm:$0xff]
          %v1823 = vld [vmem:[%s202 + $0xca8] sm:$0xff]
          %v1824 = vld [vmem:[%s202 + $0xcb0] sm:$0xff]
          %v1825 = vld [vmem:[%s202 + $0xcb8] sm:$0xff]
          %v1826 = vld [vmem:[%s202 + $0xcc0] sm:$0xff]
          %v1827 = vld [vmem:[%s202 + $0xcc8] sm:$0xff]
          %v1828 = vld [vmem:[%s202 + $0xcd0] sm:$0xff]
          %v1829 = vld [vmem:[%s202 + $0xcd8] sm:$0xff]
          %v1830 = vld [vmem:[%s202 + $0xce0] sm:$0xff]
          %v1831 = vld [vmem:[%s202 + $0xce8] sm:$0xff]
          %v1832 = vld [vmem:[%s202 + $0xcf0] sm:$0xff]
          %v1833 = vld [vmem:[%s202 + $0xcf8] sm:$0xff]
          %v1834 = vld [vmem:[%s202 + $0xd00] sm:$0xff]
          %v1835 = vld [vmem:[%s202 + $0xd08] sm:$0xff]
          %v1836 = vld [vmem:[%s202 + $0xd10] sm:$0xff]
          %v1837 = vld [vmem:[%s202 + $0xd18] sm:$0xff]
          %v1838 = vld [vmem:[%s202 + $0xd20] sm:$0xff]
          %v1839 = vld [vmem:[%s202 + $0xd28] sm:$0xff]
          %v1840 = vld [vmem:[%s202 + $0xd30] sm:$0xff]
          %v1841 = vld [vmem:[%s202 + $0xd38] sm:$0xff]
          %v1842 = vld [vmem:[%s202 + $0xd40] sm:$0xff]
          %v1843 = vld [vmem:[%s202 + $0xd48] sm:$0xff]
          %v1844 = vld [vmem:[%s202 + $0xd50] sm:$0xff]
          %v1845 = vld [vmem:[%s202 + $0xd58] sm:$0xff]
          %v1846 = vld [vmem:[%s202 + $0xd60] sm:$0xff]
          %v1847 = vld [vmem:[%s202 + $0xd68] sm:$0xff]
          %v1848 = vld [vmem:[%s202 + $0xd70] sm:$0xff]
          %v1849 = vld [vmem:[%s202 + $0xd78] sm:$0xff]
          %v1850 = vld [vmem:[%s202 + $0xd80] sm:$0xff]
          %v1851 = vld [vmem:[%s202 + $0xd88] sm:$0xff]
          %v1852 = vld [vmem:[%s202 + $0xd90] sm:$0xff]
          %v1853 = vld [vmem:[%s202 + $0xd98] sm:$0xff]
          %v1854 = vld [vmem:[%s202 + $0xda0] sm:$0xff]
          %v1855 = vld [vmem:[%s202 + $0xda8] sm:$0xff]
          %v1856 = vld [vmem:[%s202 + $0xdb0] sm:$0xff]
          %v1857 = vld [vmem:[%s202 + $0xdb8] sm:$0xff]
          %v1858 = vld [vmem:[%s202 + $0xdc0] sm:$0xff]
          %v1859 = vld [vmem:[%s202 + $0xdc8] sm:$0xff]
          %v1860 = vld [vmem:[%s202 + $0xdd0] sm:$0xff]
          %v1861 = vld [vmem:[%s202 + $0xdd8] sm:$0xff]
          %v1862 = vld [vmem:[%s202 + $0xde0] sm:$0xff]
          %v1863 = vld [vmem:[%s202 + $0xde8] sm:$0xff]
          %v1864 = vld [vmem:[%s202 + $0xdf0] sm:$0xff]
          %v1865 = vld [vmem:[%s202 + $0xdf8] sm:$0xff]
          %v1866 = vld [vmem:[%s202 + $0xe00] sm:$0xff]
          %v1867 = vld [vmem:[%s202 + $0xe08] sm:$0xff]
          %v1868 = vld [vmem:[%s202 + $0xe10] sm:$0xff]
          %v1869 = vld [vmem:[%s202 + $0xe18] sm:$0xff]
          %v1870 = vld [vmem:[%s202 + $0xe20] sm:$0xff]
          %v1871 = vld [vmem:[%s202 + $0xe28] sm:$0xff]
          %v1872 = vld [vmem:[%s202 + $0xe30] sm:$0xff]
          %v1873 = vld [vmem:[%s202 + $0xe38] sm:$0xff]
          %v1874 = vld [vmem:[%s202 + $0xe40] sm:$0xff]
          %v1875 = vld [vmem:[%s202 + $0xe48] sm:$0xff]
          %v1876 = vld [vmem:[%s202 + $0xe50] sm:$0xff]
          %v1877 = vld [vmem:[%s202 + $0xe58] sm:$0xff]
          %v1878 = vld [vmem:[%s202 + $0xe60] sm:$0xff]
          %v1879 = vld [vmem:[%s202 + $0xe68] sm:$0xff]
          %v1880 = vld [vmem:[%s202 + $0xe70] sm:$0xff]
          %v1881 = vld [vmem:[%s202 + $0xe78] sm:$0xff]
          %v1882 = vld [vmem:[%s202 + $0xe80] sm:$0xff]
          %v1883 = vld [vmem:[%s202 + $0xe88] sm:$0xff]
          %v1884 = vld [vmem:[%s202 + $0xe90] sm:$0xff]
          %v1885 = vld [vmem:[%s202 + $0xe98] sm:$0xff]
          %v1886 = vld [vmem:[%s202 + $0xea0] sm:$0xff]
          %v1887 = vld [vmem:[%s202 + $0xea8] sm:$0xff]
          %v1888 = vld [vmem:[%s202 + $0xeb0] sm:$0xff]
          %v1889 = vld [vmem:[%s202 + $0xeb8] sm:$0xff]
          %v1890 = vld [vmem:[%s202 + $0xec0] sm:$0xff]
          %v1891 = vld [vmem:[%s202 + $0xec8] sm:$0xff]
          %v1892 = vld [vmem:[%s202 + $0xed0] sm:$0xff]
          %v1893 = vld [vmem:[%s202 + $0xed8] sm:$0xff]
          %v1894 = vld [vmem:[%s202 + $0xee0] sm:$0xff]
          %v1895 = vld [vmem:[%s202 + $0xee8] sm:$0xff]
          %v1896 = vld [vmem:[%s202 + $0xef0] sm:$0xff]
          %v1897 = vld [vmem:[%s202 + $0xef8] sm:$0xff]
          %v1898 = vld [vmem:[%s202 + $0xf00] sm:$0xff]
          %v1899 = vld [vmem:[%s202 + $0xf08] sm:$0xff]
          %v1900 = vld [vmem:[%s202 + $0xf10] sm:$0xff]
          %v1901 = vld [vmem:[%s202 + $0xf18] sm:$0xff]
          %v1902 = vld [vmem:[%s202 + $0xf20] sm:$0xff]
          %v1903 = vld [vmem:[%s202 + $0xf28] sm:$0xff]
          %v1904 = vld [vmem:[%s202 + $0xf30] sm:$0xff]
          %v1905 = vld [vmem:[%s202 + $0xf38] sm:$0xff]
          %v1906 = vld [vmem:[%s202 + $0xf40] sm:$0xff]
          %v1907 = vld [vmem:[%s202 + $0xf48] sm:$0xff]
          %v1908 = vld [vmem:[%s202 + $0xf50] sm:$0xff]
          %v1909 = vld [vmem:[%s202 + $0xf58] sm:$0xff]
          %v1910 = vld [vmem:[%s202 + $0xf60] sm:$0xff]
          %v1911 = vld [vmem:[%s202 + $0xf68] sm:$0xff]
          %v1912 = vld [vmem:[%s202 + $0xf70] sm:$0xff]
          %v1913 = vld [vmem:[%s202 + $0xf78] sm:$0xff]
          %v1914 = vld [vmem:[%s202 + $0xf80] sm:$0xff]
          %v1915 = vld [vmem:[%s202 + $0xf88] sm:$0xff]
          %v1916 = vld [vmem:[%s202 + $0xf90] sm:$0xff]
          %v1917 = vld [vmem:[%s202 + $0xf98] sm:$0xff]
          %v1918 = vld [vmem:[%s202 + $0xfa0] sm:$0xff]
          %v1919 = vld [vmem:[%s202 + $0xfa8] sm:$0xff]
          %v1920 = vld [vmem:[%s202 + $0xfb0] sm:$0xff]
          %v1921 = vld [vmem:[%s202 + $0xfb8] sm:$0xff]
          %v1922 = vld [vmem:[%s202 + $0xfc0] sm:$0xff]
          %v1923 = vld [vmem:[%s202 + $0xfc8] sm:$0xff]
          %v1924 = vld [vmem:[%s202 + $0xfd0] sm:$0xff]
          %v1925 = vld [vmem:[%s202 + $0xfd8] sm:$0xff]
          %v1926 = vld [vmem:[%s202 + $0xfe0] sm:$0xff]
          %v1927 = vld [vmem:[%s202 + $0xfe8] sm:$0xff]
          %v1928 = vld [vmem:[%s202 + $0xff0] sm:$0xff]
          %v1929 = vld [vmem:[%s202 + $0xff8] sm:$0xff]
          %v1930 = vld [vmem:[%s211] sm:$0xf]
          %v1932 = vlaneseq
          %v1933 = vshrl.u32 %v1932, 7
          %v1934 = vsub.s32 0, %v1933
          %v1935 = vrot.slane %v1930, %v1934
          %v1936 = vlaneseq
          %v1937 = vshrl.u32 %v1936, 7
          %v1938 = vsub.s32 1, %v1937
          %v1939 = vrot.slane %v1930, %v1938
          %v1940 = vlaneseq
          %v1941 = vshrl.u32 %v1940, 7
          %v1942 = vsub.s32 2, %v1941
          %v1943 = vrot.slane %v1930, %v1942
          %v1944 = vlaneseq
          %v1945 = vshrl.u32 %v1944, 7
          %v1946 = vsub.s32 3, %v1945
          %v1947 = vrot.slane %v1930, %v1946
          %1952 = vmatprep.subr.mxu0 %v1419
          %1953 = vmatpush1.msra.mxu0 %v1418
          %1954 = vmatprep.subr.mxu0 %v1423
          %1955 = vmatpush1.msra.mxu0 %v1422
          %1956 = vmatprep.subr.mxu0 %v1427
          %1957 = vmatpush1.msra.mxu0 %v1426
          %1958 = vmatprep.subr.mxu0 %v1431
          %1959 = vmatpush1.msra.mxu0 %v1430
          %1960 = vmatprep.subr.mxu0 %v1435
          %1961 = vmatpush1.msra.mxu0 %v1434
          %1962 = vmatprep.subr.mxu0 %v1439
          %1963 = vmatpush1.msra.mxu0 %v1438
          %1964 = vmatprep.subr.mxu0 %v1443
          %1965 = vmatpush1.msra.mxu0 %v1442
          %1966 = vmatprep.subr.mxu0 %v1447
          %1967 = vmatpush1.msra.mxu0 %v1446
          %1968 = vmatprep.subr.mxu0 %v1451
          %1969 = vmatpush1.msra.mxu0 %v1450
          %1970 = vmatprep.subr.mxu0 %v1455
          %1971 = vmatpush1.msra.mxu0 %v1454
          %1972 = vmatprep.subr.mxu0 %v1459
          %1973 = vmatpush1.msra.mxu0 %v1458
          %1974 = vmatprep.subr.mxu0 %v1463
          %1975 = vmatpush1.msra.mxu0 %v1462
          %1976 = vmatprep.subr.mxu0 %v1467
          %1977 = vmatpush1.msra.mxu0 %v1466
          %1978 = vmatprep.subr.mxu0 %v1471
          %1979 = vmatpush1.msra.mxu0 %v1470
          %1980 = vmatprep.subr.mxu0 %v1475
          %1981 = vmatpush1.msra.mxu0 %v1474
          %1982 = vmatprep.subr.mxu0 %v1479
          %1983 = vmatpush1.msra.mxu0 %v1478
          %1984 = vmatprep.subr.mxu0 %v1483
          %1985 = vmatpush1.msra.mxu0 %v1482
          %1986 = vmatprep.subr.mxu0 %v1487
          %1987 = vmatpush1.msra.mxu0 %v1486
          %1988 = vmatprep.subr.mxu0 %v1491
          %1989 = vmatpush1.msra.mxu0 %v1490
          %1990 = vmatprep.subr.mxu0 %v1495
          %1991 = vmatpush1.msra.mxu0 %v1494
          %1992 = vmatprep.subr.mxu0 %v1499
          %1993 = vmatpush1.msra.mxu0 %v1498
          %1994 = vmatprep.subr.mxu0 %v1503
          %1995 = vmatpush1.msra.mxu0 %v1502
          %1996 = vmatprep.subr.mxu0 %v1507
          %1997 = vmatpush1.msra.mxu0 %v1506
          %1998 = vmatprep.subr.mxu0 %v1511
          %1999 = vmatpush1.msra.mxu0 %v1510
          %2000 = vmatprep.subr.mxu0 %v1515
          %2001 = vmatpush1.msra.mxu0 %v1514
          %2002 = vmatprep.subr.mxu0 %v1519
          %2003 = vmatpush1.msra.mxu0 %v1518
          %2004 = vmatprep.subr.mxu0 %v1523
          %2005 = vmatpush1.msra.mxu0 %v1522
          %2006 = vmatprep.subr.mxu0 %v1527
          %2007 = vmatpush1.msra.mxu0 %v1526
          %2008 = vmatprep.subr.mxu0 %v1531
          %2009 = vmatpush1.msra.mxu0 %v1530
          %2010 = vmatprep.subr.mxu0 %v1535
          %2011 = vmatpush1.msra.mxu0 %v1534
          %2012 = vmatprep.subr.mxu0 %v1539
          %2013 = vmatpush1.msra.mxu0 %v1538
          %2014 = vmatprep.subr.mxu0 %v1543
          %2015 = vmatpush1.msra.mxu0 %v1542
          %2016 = vmatprep.mubr.f32.mxu0 %v1411
          %2017 = vmatmul.mubr.f32.gmra.mrb[0].mxu0 %v1410
          %v2018 = vpop.f32.mrb[0].mxu0
          %v2019 = vadd.f32 %v1935, %v2018
          %v2020 = vpop.f32.mrb[0].mxu0
          %v2021 = vadd.f32 %v1939, %v2020
          %2022 = vdwg.mxu0
          %2023 = vmatprep.subr.mxu0 %v1547
          %2024 = vmatpush1.msra.mxu0 %v1546
          %2025 = vmatprep.subr.mxu0 %v1551
          %2026 = vmatpush1.msra.mxu0 %v1550
          %2027 = vmatprep.subr.mxu0 %v1555
          %2028 = vmatpush1.msra.mxu0 %v1554
          %2029 = vmatprep.subr.mxu0 %v1559
          %2030 = vmatpush1.msra.mxu0 %v1558
          %2031 = vmatprep.subr.mxu0 %v1563
          %2032 = vmatpush1.msra.mxu0 %v1562
          %2033 = vmatprep.subr.mxu0 %v1567
          %2034 = vmatpush1.msra.mxu0 %v1566
          %2035 = vmatprep.subr.mxu0 %v1571
          %2036 = vmatpush1.msra.mxu0 %v1570
          %2037 = vmatprep.subr.mxu0 %v1575
          %2038 = vmatpush1.msra.mxu0 %v1574
          %2039 = vmatprep.subr.mxu0 %v1579
          %2040 = vmatpush1.msra.mxu0 %v1578
          %2041 = vmatprep.subr.mxu0 %v1583
          %2042 = vmatpush1.msra.mxu0 %v1582
          %2043 = vmatprep.subr.mxu0 %v1587
          %2044 = vmatpush1.msra.mxu0 %v1586
          %2045 = vmatprep.subr.mxu0 %v1591
          %2046 = vmatpush1.msra.mxu0 %v1590
          %2047 = vmatprep.subr.mxu0 %v1595
          %2048 = vmatpush1.msra.mxu0 %v1594
          %2049 = vmatprep.subr.mxu0 %v1599
          %2050 = vmatpush1.msra.mxu0 %v1598
          %2051 = vmatprep.subr.mxu0 %v1603
          %2052 = vmatpush1.msra.mxu0 %v1602
          %2053 = vmatprep.subr.mxu0 %v1607
          %2054 = vmatpush1.msra.mxu0 %v1606
          %2055 = vmatprep.subr.mxu0 %v1611
          %2056 = vmatpush1.msra.mxu0 %v1610
          %2057 = vmatprep.subr.mxu0 %v1615
          %2058 = vmatpush1.msra.mxu0 %v1614
          %2059 = vmatprep.subr.mxu0 %v1619
          %2060 = vmatpush1.msra.mxu0 %v1618
          %2061 = vmatprep.subr.mxu0 %v1623
          %2062 = vmatpush1.msra.mxu0 %v1622
          %2063 = vmatprep.subr.mxu0 %v1627
          %2064 = vmatpush1.msra.mxu0 %v1626
          %2065 = vmatprep.subr.mxu0 %v1631
          %2066 = vmatpush1.msra.mxu0 %v1630
          %2067 = vmatprep.subr.mxu0 %v1635
          %2068 = vmatpush1.msra.mxu0 %v1634
          %2069 = vmatprep.subr.mxu0 %v1639
          %2070 = vmatpush1.msra.mxu0 %v1638
          %2071 = vmatprep.subr.mxu0 %v1643
          %2072 = vmatpush1.msra.mxu0 %v1642
          %2073 = vmatprep.subr.mxu0 %v1647
          %2074 = vmatpush1.msra.mxu0 %v1646
          %2075 = vmatprep.subr.mxu0 %v1651
          %2076 = vmatpush1.msra.mxu0 %v1650
          %2077 = vmatprep.subr.mxu0 %v1655
          %2078 = vmatpush1.msra.mxu0 %v1654
          %2079 = vmatprep.subr.mxu0 %v1659
          %2080 = vmatpush1.msra.mxu0 %v1658
          %2081 = vmatprep.subr.mxu0 %v1663
          %2082 = vmatpush1.msra.mxu0 %v1662
          %2083 = vmatprep.subr.mxu0 %v1667
          %2084 = vmatpush1.msra.mxu0 %v1666
          %2085 = vmatprep.subr.mxu0 %v1671
          %2086 = vmatpush1.msra.mxu0 %v1670
          %2087 = vmatprep.mubr.f32.mxu0 %v1413
          %2088 = vmatmul.mubr.f32.gmra.mrb[0].mxu0 %v1412
          %v2089 = vpop.f32.mrb[0].mxu0
          %v2090 = vadd.f32 %v2019, %v2089
          %v2091 = vpop.f32.mrb[0].mxu0
          %v2092 = vadd.f32 %v2021, %v2091
          %2093 = vdwg.mxu0
          %2094 = vmatprep.subr.mxu0 %v1675
          %2095 = vmatpush1.msra.mxu0 %v1674
          %2096 = vmatprep.subr.mxu0 %v1679
          %2097 = vmatpush1.msra.mxu0 %v1678
          %2098 = vmatprep.subr.mxu0 %v1683
          %2099 = vmatpush1.msra.mxu0 %v1682
          %2100 = vmatprep.subr.mxu0 %v1687
          %2101 = vmatpush1.msra.mxu0 %v1686
          %2102 = vmatprep.subr.mxu0 %v1691
          %2103 = vmatpush1.msra.mxu0 %v1690
          %2104 = vmatprep.subr.mxu0 %v1695
          %2105 = vmatpush1.msra.mxu0 %v1694
          %2106 = vmatprep.subr.mxu0 %v1699
          %2107 = vmatpush1.msra.mxu0 %v1698
          %2108 = vmatprep.subr.mxu0 %v1703
          %2109 = vmatpush1.msra.mxu0 %v1702
          %2110 = vmatprep.subr.mxu0 %v1707
          %2111 = vmatpush1.msra.mxu0 %v1706
          %2112 = vmatprep.subr.mxu0 %v1711
          %2113 = vmatpush1.msra.mxu0 %v1710
          %2114 = vmatprep.subr.mxu0 %v1715
          %2115 = vmatpush1.msra.mxu0 %v1714
          %2116 = vmatprep.subr.mxu0 %v1719
          %2117 = vmatpush1.msra.mxu0 %v1718
          %2118 = vmatprep.subr.mxu0 %v1723
          %2119 = vmatpush1.msra.mxu0 %v1722
          %2120 = vmatprep.subr.mxu0 %v1727
          %2121 = vmatpush1.msra.mxu0 %v1726
          %2122 = vmatprep.subr.mxu0 %v1731
          %2123 = vmatpush1.msra.mxu0 %v1730
          %2124 = vmatprep.subr.mxu0 %v1735
          %2125 = vmatpush1.msra.mxu0 %v1734
          %2126 = vmatprep.subr.mxu0 %v1739
          %2127 = vmatpush1.msra.mxu0 %v1738
          %2128 = vmatprep.subr.mxu0 %v1743
          %2129 = vmatpush1.msra.mxu0 %v1742
          %2130 = vmatprep.subr.mxu0 %v1747
          %2131 = vmatpush1.msra.mxu0 %v1746
          %2132 = vmatprep.subr.mxu0 %v1751
          %2133 = vmatpush1.msra.mxu0 %v1750
          %2134 = vmatprep.subr.mxu0 %v1755
          %2135 = vmatpush1.msra.mxu0 %v1754
          %2136 = vmatprep.subr.mxu0 %v1759
          %2137 = vmatpush1.msra.mxu0 %v1758
          %2138 = vmatprep.subr.mxu0 %v1763
          %2139 = vmatpush1.msra.mxu0 %v1762
          %2140 = vmatprep.subr.mxu0 %v1767
          %2141 = vmatpush1.msra.mxu0 %v1766
          %2142 = vmatprep.subr.mxu0 %v1771
          %2143 = vmatpush1.msra.mxu0 %v1770
          %2144 = vmatprep.subr.mxu0 %v1775
          %2145 = vmatpush1.msra.mxu0 %v1774
          %2146 = vmatprep.subr.mxu0 %v1779
          %2147 = vmatpush1.msra.mxu0 %v1778
          %2148 = vmatprep.subr.mxu0 %v1783
          %2149 = vmatpush1.msra.mxu0 %v1782
          %2150 = vmatprep.subr.mxu0 %v1787
          %2151 = vmatpush1.msra.mxu0 %v1786
          %2152 = vmatprep.subr.mxu0 %v1791
          %2153 = vmatpush1.msra.mxu0 %v1790
          %2154 = vmatprep.subr.mxu0 %v1795
          %2155 = vmatpush1.msra.mxu0 %v1794
          %2156 = vmatprep.subr.mxu0 %v1799
          %2157 = vmatpush1.msra.mxu0 %v1798
          %2158 = vmatprep.mubr.f32.mxu0 %v1415
          %2159 = vmatmul.mubr.f32.gmra.mrb[0].mxu0 %v1414
          %v2160 = vpop.f32.mrb[0].mxu0
          %v2161 = vadd.f32 %v2090, %v2160
          %v2162 = vpop.f32.mrb[0].mxu0
          %v2163 = vadd.f32 %v2092, %v2162
          %2164 = vdwg.mxu0
          %2165 = vmatprep.subr.mxu0 %v1803
          %2166 = vmatpush1.msra.mxu0 %v1802
          %2167 = vmatprep.subr.mxu0 %v1807
          %2168 = vmatpush1.msra.mxu0 %v1806
          %2169 = vmatprep.subr.mxu0 %v1811
          %2170 = vmatpush1.msra.mxu0 %v1810
          %2171 = vmatprep.subr.mxu0 %v1815
          %2172 = vmatpush1.msra.mxu0 %v1814
          %2173 = vmatprep.subr.mxu0 %v1819
          %2174 = vmatpush1.msra.mxu0 %v1818
          %2175 = vmatprep.subr.mxu0 %v1823
          %2176 = vmatpush1.msra.mxu0 %v1822
          %2177 = vmatprep.subr.mxu0 %v1827
          %2178 = vmatpush1.msra.mxu0 %v1826
          %2179 = vmatprep.subr.mxu0 %v1831
          %2180 = vmatpush1.msra.mxu0 %v1830
          %2181 = vmatprep.subr.mxu0 %v1835
          %2182 = vmatpush1.msra.mxu0 %v1834
          %2183 = vmatprep.subr.mxu0 %v1839
          %2184 = vmatpush1.msra.mxu0 %v1838
          %2185 = vmatprep.subr.mxu0 %v1843
          %2186 = vmatpush1.msra.mxu0 %v1842
          %2187 = vmatprep.subr.mxu0 %v1847
          %2188 = vmatpush1.msra.mxu0 %v1846
          %2189 = vmatprep.subr.mxu0 %v1851
          %2190 = vmatpush1.msra.mxu0 %v1850
          %2191 = vmatprep.subr.mxu0 %v1855
          %2192 = vmatpush1.msra.mxu0 %v1854
          %2193 = vmatprep.subr.mxu0 %v1859
          %2194 = vmatpush1.msra.mxu0 %v1858
          %2195 = vmatprep.subr.mxu0 %v1863
          %2196 = vmatpush1.msra.mxu0 %v1862
          %2197 = vmatprep.subr.mxu0 %v1867
          %2198 = vmatpush1.msra.mxu0 %v1866
          %2199 = vmatprep.subr.mxu0 %v1871
          %2200 = vmatpush1.msra.mxu0 %v1870
          %2201 = vmatprep.subr.mxu0 %v1875
          %2202 = vmatpush1.msra.mxu0 %v1874
          %2203 = vmatprep.subr.mxu0 %v1879
          %2204 = vmatpush1.msra.mxu0 %v1878
          %2205 = vmatprep.subr.mxu0 %v1883
          %2206 = vmatpush1.msra.mxu0 %v1882
          %2207 = vmatprep.subr.mxu0 %v1887
          %2208 = vmatpush1.msra.mxu0 %v1886
          %2209 = vmatprep.subr.mxu0 %v1891
          %2210 = vmatpush1.msra.mxu0 %v1890
          %2211 = vmatprep.subr.mxu0 %v1895
          %2212 = vmatpush1.msra.mxu0 %v1894
          %2213 = vmatprep.subr.mxu0 %v1899
          %2214 = vmatpush1.msra.mxu0 %v1898
          %2215 = vmatprep.subr.mxu0 %v1903
          %2216 = vmatpush1.msra.mxu0 %v1902
          %2217 = vmatprep.subr.mxu0 %v1907
          %2218 = vmatpush1.msra.mxu0 %v1906
          %2219 = vmatprep.subr.mxu0 %v1911
          %2220 = vmatpush1.msra.mxu0 %v1910
          %2221 = vmatprep.subr.mxu0 %v1915
          %2222 = vmatpush1.msra.mxu0 %v1914
          %2223 = vmatprep.subr.mxu0 %v1919
          %2224 = vmatpush1.msra.mxu0 %v1918
          %2225 = vmatprep.subr.mxu0 %v1923
          %2226 = vmatpush1.msra.mxu0 %v1922
          %2227 = vmatprep.subr.mxu0 %v1927
          %2228 = vmatpush1.msra.mxu0 %v1926
          %2229 = vmatprep.mubr.f32.mxu0 %v1417
          %2230 = vmatmul.mubr.f32.gmra.mrb[0].mxu0 %v1416
          %v2231 = vpop.f32.mrb[0].mxu0
          %v2232 = vadd.f32 %v2161, %v2231
          %v2233 = vpop.f32.mrb[0].mxu0
          %v2234 = vadd.f32 %v2163, %v2233
          %2235 = vdwg.mxu0
          %2236 = vmatprep.subr.mxu0 %v1421
          %2237 = vmatpush1.msra.mxu0 %v1420
          %2238 = vmatprep.subr.mxu0 %v1425
          %2239 = vmatpush1.msra.mxu0 %v1424
          %2240 = vmatprep.subr.mxu0 %v1429
          %2241 = vmatpush1.msra.mxu0 %v1428
          %2242 = vmatprep.subr.mxu0 %v1433
          %2243 = vmatpush1.msra.mxu0 %v1432
          %2244 = vmatprep.subr.mxu0 %v1437
          %2245 = vmatpush1.msra.mxu0 %v1436
          %2246 = vmatprep.subr.mxu0 %v1441
          %2247 = vmatpush1.msra.mxu0 %v1440
          %2248 = vmatprep.subr.mxu0 %v1445
          %2249 = vmatpush1.msra.mxu0 %v1444
          %2250 = vmatprep.subr.mxu0 %v1449
          %2251 = vmatpush1.msra.mxu0 %v1448
          %2252 = vmatprep.subr.mxu0 %v1453
          %2253 = vmatpush1.msra.mxu0 %v1452
          %2254 = vmatprep.subr.mxu0 %v1457
          %2255 = vmatpush1.msra.mxu0 %v1456
          %2256 = vmatprep.subr.mxu0 %v1461
          %2257 = vmatpush1.msra.mxu0 %v1460
          %2258 = vmatprep.subr.mxu0 %v1465
          %2259 = vmatpush1.msra.mxu0 %v1464
          %2260 = vmatprep.subr.mxu0 %v1469
          %2261 = vmatpush1.msra.mxu0 %v1468
          %2262 = vmatprep.subr.mxu0 %v1473
          %2263 = vmatpush1.msra.mxu0 %v1472
          %2264 = vmatprep.subr.mxu0 %v1477
          %2265 = vmatpush1.msra.mxu0 %v1476
          %2266 = vmatprep.subr.mxu0 %v1481
          %2267 = vmatpush1.msra.mxu0 %v1480
          %2268 = vmatprep.subr.mxu0 %v1485
          %2269 = vmatpush1.msra.mxu0 %v1484
          %2270 = vmatprep.subr.mxu0 %v1489
          %2271 = vmatpush1.msra.mxu0 %v1488
          %2272 = vmatprep.subr.mxu0 %v1493
          %2273 = vmatpush1.msra.mxu0 %v1492
          %2274 = vmatprep.subr.mxu0 %v1497
          %2275 = vmatpush1.msra.mxu0 %v1496
          %2276 = vmatprep.subr.mxu0 %v1501
          %2277 = vmatpush1.msra.mxu0 %v1500
          %2278 = vmatprep.subr.mxu0 %v1505
          %2279 = vmatpush1.msra.mxu0 %v1504
          %2280 = vmatprep.subr.mxu0 %v1509
          %2281 = vmatpush1.msra.mxu0 %v1508
          %2282 = vmatprep.subr.mxu0 %v1513
          %2283 = vmatpush1.msra.mxu0 %v1512
          %2284 = vmatprep.subr.mxu0 %v1517
          %2285 = vmatpush1.msra.mxu0 %v1516
          %2286 = vmatprep.subr.mxu0 %v1521
          %2287 = vmatpush1.msra.mxu0 %v1520
          %2288 = vmatprep.subr.mxu0 %v1525
          %2289 = vmatpush1.msra.mxu0 %v1524
          %2290 = vmatprep.subr.mxu0 %v1529
          %2291 = vmatpush1.msra.mxu0 %v1528
          %2292 = vmatprep.subr.mxu0 %v1533
          %2293 = vmatpush1.msra.mxu0 %v1532
          %2294 = vmatprep.subr.mxu0 %v1537
          %2295 = vmatpush1.msra.mxu0 %v1536
          %2296 = vmatprep.subr.mxu0 %v1541
          %2297 = vmatpush1.msra.mxu0 %v1540
          %2298 = vmatprep.subr.mxu0 %v1545
          %2299 = vmatpush1.msra.mxu0 %v1544
          %2300 = vmatprep.mubr.f32.mxu0 %v1411
          %2301 = vmatmul.mubr.f32.gmra.mrb[0].mxu0 %v1410
          %v2302 = vpop.f32.mrb[0].mxu0
          %v2303 = vadd.f32 %v1943, %v2302
          %v2304 = vpop.f32.mrb[0].mxu0
          %v2305 = vadd.f32 %v1947, %v2304
          %2306 = vdwg.mxu0
          %2307 = vmatprep.subr.mxu0 %v1549
          %2308 = vmatpush1.msra.mxu0 %v1548
          %2309 = vmatprep.subr.mxu0 %v1553
          %2310 = vmatpush1.msra.mxu0 %v1552
          %2311 = vmatprep.subr.mxu0 %v1557
          %2312 = vmatpush1.msra.mxu0 %v1556
          %2313 = vmatprep.subr.mxu0 %v1561
          %2314 = vmatpush1.msra.mxu0 %v1560
          %2315 = vmatprep.subr.mxu0 %v1565
          %2316 = vmatpush1.msra.mxu0 %v1564
          %2317 = vmatprep.subr.mxu0 %v1569
          %2318 = vmatpush1.msra.mxu0 %v1568
          %2319 = vmatprep.subr.mxu0 %v1573
          %2320 = vmatpush1.msra.mxu0 %v1572
          %2321 = vmatprep.subr.mxu0 %v1577
          %2322 = vmatpush1.msra.mxu0 %v1576
          %2323 = vmatprep.subr.mxu0 %v1581
          %2324 = vmatpush1.msra.mxu0 %v1580
          %2325 = vmatprep.subr.mxu0 %v1585
          %2326 = vmatpush1.msra.mxu0 %v1584
          %2327 = vmatprep.subr.mxu0 %v1589
          %2328 = vmatpush1.msra.mxu0 %v1588
          %2329 = vmatprep.subr.mxu0 %v1593
          %2330 = vmatpush1.msra.mxu0 %v1592
          %2331 = vmatprep.subr.mxu0 %v1597
          %2332 = vmatpush1.msra.mxu0 %v1596
          %2333 = vmatprep.subr.mxu0 %v1601
          %2334 = vmatpush1.msra.mxu0 %v1600
          %2335 = vmatprep.subr.mxu0 %v1605
          %2336 = vmatpush1.msra.mxu0 %v1604
          %2337 = vmatprep.subr.mxu0 %v1609
          %2338 = vmatpush1.msra.mxu0 %v1608
          %2339 = vmatprep.subr.mxu0 %v1613
          %2340 = vmatpush1.msra.mxu0 %v1612
          %2341 = vmatprep.subr.mxu0 %v1617
          %2342 = vmatpush1.msra.mxu0 %v1616
          %2343 = vmatprep.subr.mxu0 %v1621
          %2344 = vmatpush1.msra.mxu0 %v1620
          %2345 = vmatprep.subr.mxu0 %v1625
          %2346 = vmatpush1.msra.mxu0 %v1624
          %2347 = vmatprep.subr.mxu0 %v1629
          %2348 = vmatpush1.msra.mxu0 %v1628
          %2349 = vmatprep.subr.mxu0 %v1633
          %2350 = vmatpush1.msra.mxu0 %v1632
          %2351 = vmatprep.subr.mxu0 %v1637
          %2352 = vmatpush1.msra.mxu0 %v1636
          %2353 = vmatprep.subr.mxu0 %v1641
          %2354 = vmatpush1.msra.mxu0 %v1640
          %2355 = vmatprep.subr.mxu0 %v1645
          %2356 = vmatpush1.msra.mxu0 %v1644
          %2357 = vmatprep.subr.mxu0 %v1649
          %2358 = vmatpush1.msra.mxu0 %v1648
          %2359 = vmatprep.subr.mxu0 %v1653
          %2360 = vmatpush1.msra.mxu0 %v1652
          %2361 = vmatprep.subr.mxu0 %v1657
          %2362 = vmatpush1.msra.mxu0 %v1656
          %2363 = vmatprep.subr.mxu0 %v1661
          %2364 = vmatpush1.msra.mxu0 %v1660
          %2365 = vmatprep.subr.mxu0 %v1665
          %2366 = vmatpush1.msra.mxu0 %v1664
          %2367 = vmatprep.subr.mxu0 %v1669
          %2368 = vmatpush1.msra.mxu0 %v1668
          %2369 = vmatprep.subr.mxu0 %v1673
          %2370 = vmatpush1.msra.mxu0 %v1672
          %2371 = vmatprep.mubr.f32.mxu0 %v1413
          %2372 = vmatmul.mubr.f32.gmra.mrb[0].mxu0 %v1412
          %v2373 = vpop.f32.mrb[0].mxu0
          %v2374 = vadd.f32 %v2303, %v2373
          %v2375 = vpop.f32.mrb[0].mxu0
          %v2376 = vadd.f32 %v2305, %v2375
          %2377 = vdwg.mxu0
          %2378 = vmatprep.subr.mxu0 %v1677
          %2379 = vmatpush1.msra.mxu0 %v1676
          %2380 = vmatprep.subr.mxu0 %v1681
          %2381 = vmatpush1.msra.mxu0 %v1680
          %2382 = vmatprep.subr.mxu0 %v1685
          %2383 = vmatpush1.msra.mxu0 %v1684
          %2384 = vmatprep.subr.mxu0 %v1689
          %2385 = vmatpush1.msra.mxu0 %v1688
          %2386 = vmatprep.subr.mxu0 %v1693
          %2387 = vmatpush1.msra.mxu0 %v1692
          %2388 = vmatprep.subr.mxu0 %v1697
          %2389 = vmatpush1.msra.mxu0 %v1696
          %2390 = vmatprep.subr.mxu0 %v1701
          %2391 = vmatpush1.msra.mxu0 %v1700
          %2392 = vmatprep.subr.mxu0 %v1705
          %2393 = vmatpush1.msra.mxu0 %v1704
          %2394 = vmatprep.subr.mxu0 %v1709
          %2395 = vmatpush1.msra.mxu0 %v1708
          %2396 = vmatprep.subr.mxu0 %v1713
          %2397 = vmatpush1.msra.mxu0 %v1712
          %2398 = vmatprep.subr.mxu0 %v1717
          %2399 = vmatpush1.msra.mxu0 %v1716
          %2400 = vmatprep.subr.mxu0 %v1721
          %2401 = vmatpush1.msra.mxu0 %v1720
          %2402 = vmatprep.subr.mxu0 %v1725
          %2403 = vmatpush1.msra.mxu0 %v1724
          %2404 = vmatprep.subr.mxu0 %v1729
          %2405 = vmatpush1.msra.mxu0 %v1728
          %2406 = vmatprep.subr.mxu0 %v1733
          %2407 = vmatpush1.msra.mxu0 %v1732
          %2408 = vmatprep.subr.mxu0 %v1737
          %2409 = vmatpush1.msra.mxu0 %v1736
          %2410 = vmatprep.subr.mxu0 %v1741
          %2411 = vmatpush1.msra.mxu0 %v1740
          %2412 = vmatprep.subr.mxu0 %v1745
          %2413 = vmatpush1.msra.mxu0 %v1744
          %2414 = vmatprep.subr.mxu0 %v1749
          %2415 = vmatpush1.msra.mxu0 %v1748
          %2416 = vmatprep.subr.mxu0 %v1753
          %2417 = vmatpush1.msra.mxu0 %v1752
          %2418 = vmatprep.subr.mxu0 %v1757
          %2419 = vmatpush1.msra.mxu0 %v1756
          %2420 = vmatprep.subr.mxu0 %v1761
          %2421 = vmatpush1.msra.mxu0 %v1760
          %2422 = vmatprep.subr.mxu0 %v1765
          %2423 = vmatpush1.msra.mxu0 %v1764
          %2424 = vmatprep.subr.mxu0 %v1769
          %2425 = vmatpush1.msra.mxu0 %v1768
          %2426 = vmatprep.subr.mxu0 %v1773
          %2427 = vmatpush1.msra.mxu0 %v1772
          %2428 = vmatprep.subr.mxu0 %v1777
          %2429 = vmatpush1.msra.mxu0 %v1776
          %2430 = vmatprep.subr.mxu0 %v1781
          %2431 = vmatpush1.msra.mxu0 %v1780
          %2432 = vmatprep.subr.mxu0 %v1785
          %2433 = vmatpush1.msra.mxu0 %v1784
          %2434 = vmatprep.subr.mxu0 %v1789
          %2435 = vmatpush1.msra.mxu0 %v1788
          %2436 = vmatprep.subr.mxu0 %v1793
          %2437 = vmatpush1.msra.mxu0 %v1792
          %2438 = vmatprep.subr.mxu0 %v1797
          %2439 = vmatpush1.msra.mxu0 %v1796
          %2440 = vmatprep.subr.mxu0 %v1801
          %2441 = vmatpush1.msra.mxu0 %v1800
          %2442 = vmatprep.mubr.f32.mxu0 %v1415
          %2443 = vmatmul.mubr.f32.gmra.mrb[0].mxu0 %v1414
          %v2444 = vpop.f32.mrb[0].mxu0
          %v2445 = vadd.f32 %v2374, %v2444
          %v2446 = vpop.f32.mrb[0].mxu0
          %v2447 = vadd.f32 %v2376, %v2446
          %2448 = vdwg.mxu0
          %2449 = vmatprep.subr.mxu0 %v1805
          %2450 = vmatpush1.msra.mxu0 %v1804
          %2451 = vmatprep.subr.mxu0 %v1809
          %2452 = vmatpush1.msra.mxu0 %v1808
          %2453 = vmatprep.subr.mxu0 %v1813
          %2454 = vmatpush1.msra.mxu0 %v1812
          %2455 = vmatprep.subr.mxu0 %v1817
          %2456 = vmatpush1.msra.mxu0 %v1816
          %2457 = vmatprep.subr.mxu0 %v1821
          %2458 = vmatpush1.msra.mxu0 %v1820
          %2459 = vmatprep.subr.mxu0 %v1825
          %2460 = vmatpush1.msra.mxu0 %v1824
          %2461 = vmatprep.subr.mxu0 %v1829
          %2462 = vmatpush1.msra.mxu0 %v1828
          %2463 = vmatprep.subr.mxu0 %v1833
          %2464 = vmatpush1.msra.mxu0 %v1832
          %2465 = vmatprep.subr.mxu0 %v1837
          %2466 = vmatpush1.msra.mxu0 %v1836
          %2467 = vmatprep.subr.mxu0 %v1841
          %2468 = vmatpush1.msra.mxu0 %v1840
          %2469 = vmatprep.subr.mxu0 %v1845
          %2470 = vmatpush1.msra.mxu0 %v1844
          %2471 = vmatprep.subr.mxu0 %v1849
          %2472 = vmatpush1.msra.mxu0 %v1848
          %2473 = vmatprep.subr.mxu0 %v1853
          %2474 = vmatpush1.msra.mxu0 %v1852
          %2475 = vmatprep.subr.mxu0 %v1857
          %2476 = vmatpush1.msra.mxu0 %v1856
          %2477 = vmatprep.subr.mxu0 %v1861
          %2478 = vmatpush1.msra.mxu0 %v1860
          %2479 = vmatprep.subr.mxu0 %v1865
          %2480 = vmatpush1.msra.mxu0 %v1864
          %2481 = vmatprep.subr.mxu0 %v1869
          %2482 = vmatpush1.msra.mxu0 %v1868
          %2483 = vmatprep.subr.mxu0 %v1873
          %2484 = vmatpush1.msra.mxu0 %v1872
          %2485 = vmatprep.subr.mxu0 %v1877
          %2486 = vmatpush1.msra.mxu0 %v1876
          %2487 = vmatprep.subr.mxu0 %v1881
          %2488 = vmatpush1.msra.mxu0 %v1880
          %2489 = vmatprep.subr.mxu0 %v1885
          %2490 = vmatpush1.msra.mxu0 %v1884
          %2491 = vmatprep.subr.mxu0 %v1889
          %2492 = vmatpush1.msra.mxu0 %v1888
          %2493 = vmatprep.subr.mxu0 %v1893
          %2494 = vmatpush1.msra.mxu0 %v1892
          %2495 = vmatprep.subr.mxu0 %v1897
          %2496 = vmatpush1.msra.mxu0 %v1896
          %2497 = vmatprep.subr.mxu0 %v1901
          %2498 = vmatpush1.msra.mxu0 %v1900
          %2499 = vmatprep.subr.mxu0 %v1905
          %2500 = vmatpush1.msra.mxu0 %v1904
          %2501 = vmatprep.subr.mxu0 %v1909
          %2502 = vmatpush1.msra.mxu0 %v1908
          %2503 = vmatprep.subr.mxu0 %v1913
          %2504 = vmatpush1.msra.mxu0 %v1912
          %2505 = vmatprep.subr.mxu0 %v1917
          %2506 = vmatpush1.msra.mxu0 %v1916
          %2507 = vmatprep.subr.mxu0 %v1921
          %2508 = vmatpush1.msra.mxu0 %v1920
          %2509 = vmatprep.subr.mxu0 %v1925
          %2510 = vmatpush1.msra.mxu0 %v1924
          %2511 = vmatprep.subr.mxu0 %v1929
          %2512 = vmatpush1.msra.mxu0 %v1928
          %2513 = vmatprep.mubr.f32.mxu0 %v1417
          %2514 = vmatmul.mubr.f32.gmra.mrb[0].mxu0 %v1416
          %v2515 = vpop.f32.mrb[0].mxu0
          %v2516 = vadd.f32 %v2445, %v2515
          %v2517 = vpop.f32.mrb[0].mxu0
          %v2518 = vadd.f32 %v2447, %v2517
          %2519 = vdwg.mxu0
          %v2520 = vmax.f32 %v2232, 0.0
          %v2521 = vmax.f32 %v2234, 0.0
          %v2522 = vmax.f32 %v2516, 0.0
          %v2523 = vmax.f32 %v2518, 0.0
          %s2524 = sshra.s32 %s236, 7
          %s2525 = sand.u32 %s236, 127
          %s2526 = smul.addr %s2524, 8
          %s2527 = scalar_lea.vmem [#allocation2], %s2526
          %2528 = vst [vmem:[%s2527] sm:$0xff] %v2520
          %2529 = vst [vmem:[%s2527 + $0x8] sm:$0xff] %v2521
          %2530 = vst [vmem:[%s2527 + $0x10] sm:$0xff] %v2522
          %2531 = vst [vmem:[%s2527 + $0x18] sm:$0xff] %v2523
          // Predicated region
          $region57: #{simple_model_forward.4} parent=55 // pred_check
            %p2532 = pneg %p237
          $region58: #{simple_model_forward.4} parent=55 // pred_check_branch
            %2534 = sbr.rel (%p2532) target = $region60
          $region59: #{simple_model_forward.4} parent=55 // pred_region
            %s2535 = smul.addr %s2524, 8
            %s2536 = scalar_lea.vmem %s3, %s2535
            %2537 = vst [vmem:[%s2536] sm:$0xff] %v2520
            %2538 = vst [vmem:[%s2536 + $0x8] sm:$0xff] %v2521
            %2539 = vst [vmem:[%s2536 + $0x10] sm:$0xff] %v2522
            %2540 = vst [vmem:[%s2536 + $0x18] sm:$0xff] %v2523
          $region60: #{simple_model_forward.4} parent=55 // pred_fallthru
            _
        $region56: #{simple_model_forward.4} parent=31 // pred_fallthru
          _
        // Predicated region
        $region61: #{simple_model_forward.4} parent=31 // pred_check
          %p2541 = pneg %p122
        $region62: #{simple_model_forward.4} parent=31 // pred_check_branch
          %2543 = sbr.rel (%p2541) target = $region64
        $region63: #{simple_model_forward.4} parent=31 // pred_region
          _
        $region64: #{simple_model_forward.4} parent=31 // pred_fallthru
          _
        // Predicated region
        $region65: #{simple_model_forward.4} parent=31 // pred_check
          %p2544 = pneg %p122
        $region66: #{simple_model_forward.4} parent=31 // pred_check_branch
          %2546 = sbr.rel (%p2544) target = $region68
        $region67: #{simple_model_forward.4} parent=31 // pred_region
          _
        $region68: #{simple_model_forward.4} parent=31 // pred_fallthru
          _
      $region32: #{simple_model_forward.4} parent=5 // pred_fallthru
        _
      %p2547 = scmp.le.s32.totalorder 2, %s15
      // Predicated region
      $region69: #{simple_model_forward.4} parent=5 // pred_check
        %p2548 = pneg %p2547
      $region70: #{simple_model_forward.4} parent=5 // pred_check_branch
        %2550 = sbr.rel (%p2548) target = $region72
      $region71: #{simple_model_forward.4} parent=5 // pred_region
        %s2551 = ssub.s32 %s15, 2
      $region72: #{simple_model_forward.4} parent=5 // pred_fallthru
        _
    $region6: #{simple_model_forward.4} parent=1 // loop_footer
      %s19 = sadd.s32 1, %s15
    $region7: #{simple_model_forward.4} parent=1 // loop_footer_branch
      %14 = sbr.rel target = $region3
    $region8: #{simple_model_forward.4} parent=1 // loop_exit
      _
    %2552 = vsyncpa [#allocation5], 1
    %s2553 = scalar_lea.sflag [#allocation5], 1
    %2554 = vsyncpa %s2553, 1
    %2555 = vsyncpa [#allocation7], 1
    %s2556 = scalar_lea.sflag [#allocation7], 1
    %2557 = vsyncpa %s2556, 1

</llo_original>
